<compile_context>
chip_gen: v5e
topology: v5e:2x2
jax: 0.10.0
libtpu: 0.0.40
codegen_flags: <defaults>
</compile_context>

<pallas_src>
import math
from functools import partial

import jax
import jax.numpy as jnp
from jax.experimental import pallas as pl
from jax.experimental.pallas import tpu as pltpu


# ----------------------------------------------------------------------------
# In-kernel helpers (value-level, f32)
# ----------------------------------------------------------------------------

def _layer_norm(x, g, b, eps=1e-5):
    mu = jnp.mean(x, axis=-1, keepdims=True)
    xc = x - mu
    var = jnp.mean(xc * xc, axis=-1, keepdims=True)
    return xc * jax.lax.rsqrt(var + eps) * g + b


def _erf(x):
    # TODO(synk): exact lax.erf lowering is not guaranteed in Mosaic; use
    # Abramowitz & Stegun 7.1.26 (max abs err ~1.5e-7, f32-epsilon level).
    p = 0.3275911
    a1, a2, a3, a4, a5 = (0.254829592, -0.284496736, 1.421413741,
                          -1.453152027, 1.061405429)
    z = jnp.abs(x)
    t = 1.0 / (1.0 + p * z)
    poly = t * (a1 + t * (a2 + t * (a3 + t * (a4 + t * a5))))
    y = 1.0 - poly * jnp.exp(-z * z)
    return jnp.where(x >= 0, y, -y)


def _gelu_exact(x):
    return 0.5 * x * (1.0 + _erf(x * (1.0 / math.sqrt(2.0))))


# ----------------------------------------------------------------------------
# Fused forward kernel: BBLK batch elements per grid step
# ----------------------------------------------------------------------------

def _fused_forward_kernel(
    # per-batch-block inputs
    comb_ref, stg_ref,
    # shared parameters
    slab_ref, wfused_ref, wqkv_ref, wo_ref, w1_ref, w2_ref, wh_ref,
    # output
    o_ref,
    *, BBLK, S, G, D, H, Dh, FF, L):

    f32 = jnp.float32
    # slab row layout (static Python ints)
    R_ING, R_INB = S, S + 1
    R_OUTG, R_OUTB = S + 2, S + 3
    R_BH, R_L0 = S + 4, S + 5

    # Shared small vectors, hoisted out of the batch-block loop.
    pos_proj = slab_ref[0:S, :D]                       # (S, D)  (pos+bias)@Ws1
    in_g = slab_ref[R_ING:R_ING + 1, :D]
    in_b = slab_ref[R_INB:R_INB + 1, :D]
    out_g = slab_ref[R_OUTG:R_OUTG + 1, :D]
    out_b = slab_ref[R_OUTB:R_OUTB + 1, :D]
    bh = slab_ref[R_BH:R_BH + 1, :]                    # (1, 128)
    wfused = wfused_ref[...]                           # (Cin, D)
    wh = wh_ref[...]                                   # (D, 128)

    for bb in range(BBLK):
        # ---- fused input section: ONE matmul replaces cond/melody/harmony
        # projections, sequence assembly, pos add and stage_proj -------------
        x = (jnp.dot(comb_ref[bb], wfused, preferred_element_type=f32)
             + pos_proj + stg_ref[bb])                                # (S, D)
        x = _layer_norm(x, in_g, in_b)     # input_norm; dropout = eval identity

        # ---- transformer encoder (post-norm, exact GELU) --------------------
        for l in range(L):
            base = R_L0 + 8 * l
            qkv = (jnp.dot(x, wqkv_ref[l], preferred_element_type=f32)
                   + slab_ref[base:base + 1, :3 * D])                 # (S, 3D)

            # All heads' scores stacked -> one softmax issue per layer.
            # 1/sqrt(Dh) is pre-folded into the q columns of Wqkv / bqkv.
            s = jnp.stack(
                [jax.lax.dot_general(
                    qkv[:, h * Dh:(h + 1) * Dh],
                    qkv[:, D + h * Dh:D + (h + 1) * Dh],
                    dimension_numbers=(((1,), (1,)), ((), ())),
                    preferred_element_type=f32)
                 for h in range(H)], axis=0)                          # (H, S, S)
            m = jnp.max(s, axis=-1, keepdims=True)
            p = jnp.exp(s - m)
            p = p * pl.reciprocal(jnp.sum(p, axis=-1, keepdims=True),
                                  approx=True)

            wo_l = wo_ref[l]                                          # (D, D)
            acc = jnp.zeros((S, D), f32)
            for h in range(H):
                ah = jnp.dot(p[h],
                             qkv[:, 2 * D + h * Dh:2 * D + (h + 1) * Dh],
                             preferred_element_type=f32)              # (S, Dh)
                # concat-over-heads folded into the output projection
                acc = acc + jnp.dot(ah, wo_l[h * Dh:(h + 1) * Dh, :],
                                    preferred_element_type=f32)
            a = acc + slab_ref[base + 1:base + 2, :D]                 # + bo
            x = _layer_norm(x + a, slab_ref[base + 2:base + 3, :D],
                            slab_ref[base + 3:base + 4, :D])          # norm1

            h1 = (jnp.dot(x, w1_ref[l], preferred_element_type=f32)
                  + slab_ref[base + 4:base + 5, :FF])
            h1 = _gelu_exact(h1)
            ffn = (jnp.dot(h1, w2_ref[l], preferred_element_type=f32)
                   + slab_ref[base + 5:base + 6, :D])
            x = _layer_norm(x + ffn, slab_ref[base + 6:base + 7, :D],
                            slab_ref[base + 7:base + 8, :D])          # norm2

        # ---- output head: harmony rows [G:2G] are sublane-aligned ----------
        xg = _layer_norm(x[G:2 * G, :], out_g, out_b)                 # (G, D)
        out = jnp.dot(xg, wh, preferred_element_type=f32) + bh        # (G, 128)
        o_ref[bb] = out.astype(o_ref.dtype)


# ----------------------------------------------------------------------------
# Parameter construction: base synthetic params + exact fused reparameterization
# ----------------------------------------------------------------------------

def init_params(key, cfg):
    D = cfg["d_model"]; FF = cfg["dim_feedforward"]; V = cfg["vocab"]
    C = cfg["conditioning_dim"]; P = cfg["pianoroll_dim"]; G = cfg["grid_length"]
    S = cfg["seq_len"]; SD = cfg["stage_dim"]; L = cfg["num_layers"]
    MS = cfg["max_stages"]; VPAD = cfg["vocab_pad"]
    H = cfg["nhead"]; Dh = D // H

    def nrm(k, shape, scale=0.02):
        return (scale * jax.random.normal(k, shape)).astype(jnp.float32)

    keys = iter(jax.random.split(key, 64))

    # ---- base (unfused) module parameters -----------------------------------
    Wc = nrm(next(keys), (C, D)); bc = nrm(next(keys), (1, D))
    Wm = nrm(next(keys), (P, D)); bm = nrm(next(keys), (1, D))
    Emb = nrm(next(keys), (V, D))
    pos = jax.random.normal(next(keys), (S, D)).astype(jnp.float32)
    stage_emb = nrm(next(keys), (MS, SD))
    Ws = nrm(next(keys), (D + SD, D)); bs = nrm(next(keys), (1, D))
    in_g = jnp.ones((1, D), jnp.float32); in_b = jnp.zeros((1, D), jnp.float32)
    out_g = jnp.ones((1, D), jnp.float32); out_b = jnp.zeros((1, D), jnp.float32)
    Wh = nrm(next(keys), (D, V)); bh = nrm(next(keys), (1, V))

    Wqkv = jnp.stack([nrm(next(keys), (D, 3 * D)) for _ in range(L)])
    bqkv = jnp.stack([nrm(next(keys), (1, 3 * D)) for _ in range(L)])
    Wo = jnp.stack([nrm(next(keys), (D, D)) for _ in range(L)])
    bo = jnp.stack([nrm(next(keys), (1, D)) for _ in range(L)])
    W1 = jnp.stack([nrm(next(keys), (D, FF)) for _ in range(L)])
    b1 = jnp.stack([nrm(next(keys), (1, FF)) for _ in range(L)])
    W2 = jnp.stack([nrm(next(keys), (FF, D)) for _ in range(L)])
    b2 = jnp.stack([nrm(next(keys), (1, D)) for _ in range(L)])
    ln1_g = jnp.ones((L, 1, D), jnp.float32); ln1_b = jnp.zeros((L, 1, D), jnp.float32)
    ln2_g = jnp.ones((L, 1, D), jnp.float32); ln2_b = jnp.zeros((L, 1, D), jnp.float32)

    # ---- exact fused reparameterization --------------------------------------
    Ws1, Ws2 = Ws[:D, :], Ws[D:, :]

    # (1) fused input weight; combined-input row layout is [melody|harmony|cond]
    W_in = jnp.concatenate([Wm, Emb, Wc], axis=0)                     # (P+V+C, D)
    W_fused = W_in @ Ws1                                              # (Cin, D)

    # (2) permuted pos (+ per-row projection biases) projected through Ws1.
    #     Kernel row order [melody | harmony | cond] keeps harmony 8-aligned;
    #     attention (no mask) is permutation-equivariant so this is exact.
    pos_perm = jnp.concatenate([pos[1:1 + G], pos[1 + G:1 + 2 * G], pos[0:1]], 0)
    row_bias = jnp.concatenate([jnp.tile(bm, (G, 1)),
                                jnp.zeros((G, D), jnp.float32),
                                bc], axis=0)                          # (S, D)
    pos_proj = (pos_perm + row_bias) @ Ws1                            # (S, D)

    # (3) stage conditioning pre-folded into a per-stage additive bias table.
    stage_table = stage_emb @ Ws2 + bs                                # (MS, D)

    # (4) attention scale folded into the q columns of Wqkv / bqkv.
    scale = 1.0 / math.sqrt(Dh)
    Wqkv = Wqkv.at[:, :, :D].multiply(scale)
    bqkv = bqkv.at[:, :, :D].multiply(scale)

    # (5) output head padded to a lane-dense 128-wide slab.
    Wh_pad = jnp.zeros((D, VPAD), jnp.float32).at[:, :V].set(Wh)
    bh_pad = jnp.zeros((1, VPAD), jnp.float32).at[:, :V].set(bh)

    # (6) all small bias/LN/pos vectors packed into ONE (rows, 128) slab.
    rows = S + 5 + 8 * L
    rows_pad = ((rows + 7) // 8) * 8
    slab = jnp.zeros((rows_pad, 128), jnp.float32)
    slab = slab.at[0:S, :D].set(pos_proj)
    slab = slab.at[S, :D].set(in_g[0])
    slab = slab.at[S + 1, :D].set(in_b[0])
    slab = slab.at[S + 2, :D].set(out_g[0])
    slab = slab.at[S + 3, :D].set(out_b[0])
    slab = slab.at[S + 4, :].set(bh_pad[0])
    for l in range(L):
        base = S + 5 + 8 * l
        slab = slab.at[base, :3 * D].set(bqkv[l, 0])
        slab = slab.at[base + 1, :D].set(bo[l, 0])
        slab = slab.at[base + 2, :D].set(ln1_g[l, 0])
        slab = slab.at[base + 3, :D].set(ln1_b[l, 0])
        slab = slab.at[base + 4, :FF].set(b1[l, 0])
        slab = slab.at[base + 5, :D].set(b2[l, 0])
        slab = slab.at[base + 6, :D].set(ln2_g[l, 0])
        slab = slab.at[base + 7, :D].set(ln2_b[l, 0])

    return {"slab": slab, "W_fused": W_fused, "Wqkv": Wqkv, "Wo": Wo,
            "W1": W1, "W2": W2, "Wh_pad": Wh_pad, "stage_table": stage_table}


# ----------------------------------------------------------------------------
# Forward wrapper: one fused pallas_call, grid over batch blocks
# ----------------------------------------------------------------------------

def grid_mlm_melharm_forward(params, cond_vec, melody_grid, harmony_tokens,
                             stage_indices, cfg):
    # TODO(synk): stage_indices=None (skip stage_proj) not supported; the
    # kernel always applies stage conditioning like the provided call path.
    B = cond_vec.shape[0]
    D = cfg["d_model"]; G = cfg["grid_length"]; S = cfg["seq_len"]
    H = cfg["nhead"]; Dh = D // H; L = cfg["num_layers"]
    V = cfg["vocab"]; C = cfg["conditioning_dim"]; P = cfg["pianoroll_dim"]
    FF = cfg["dim_feedforward"]; VPAD = cfg["vocab_pad"]
    Cin = P + V + C
    f32 = jnp.float32

    # Combined per-batch input in kernel row order [melody | harmony | cond]:
    #   rows 0..G-1  : melody_grid       in cols [0, P)
    #   rows G..2G-1 : harmony one-hot   in cols [P, P+V)
    #   row  2G      : conditioning_vec  in cols [P+V, P+V+C)
    combined = jnp.zeros((B, S, Cin), f32)
    combined = combined.at[:, 0:G, 0:P].set(melody_grid.astype(f32))
    if harmony_tokens is not None:
        harm_oh = jax.nn.one_hot(harmony_tokens, V, dtype=f32)       # (B, G, V)
        combined = combined.at[:, G:2 * G, P:P + V].set(harm_oh)
    combined = combined.at[:, 2 * G, P + V:].set(cond_vec.astype(f32))

    # Stage conditioning pre-folded: per-batch additive (1, D) bias.
    stage_bias = params["stage_table"][stage_indices][:, None, :]    # (B, 1, D)

    # Batch blocking: keep >=2 parallel grid steps (both v7x TCs busy) while
    # packing multiple elements per step to amortize per-step overhead on the
    # single-TC v5e/v6e.
    num_steps = 2 if B >= 2 else 1
    BBLK = -(-B // num_steps)
    Bp = num_steps * BBLK
    if Bp != B:
        pad = Bp - B
        combined = jnp.pad(combined, ((0, pad), (0, 0), (0, 0)))
        stage_bias = jnp.pad(stage_bias, ((0, pad), (0, 0), (0, 0)))

    shared = [params["slab"], params["W_fused"], params["Wqkv"], params["Wo"],
              params["W1"], params["W2"], params["Wh_pad"]]

    def _shared_spec(arr):
        zero = (0,) * arr.ndim
        return pl.BlockSpec(arr.shape, lambda i, _z=zero: _z)

    in_specs = [
        pl.BlockSpec((BBLK, S, Cin), lambda i: (i, 0, 0)),   # combined input
        pl.BlockSpec((BBLK, 1, D), lambda i: (i, 0, 0)),     # stage bias
    ] + [_shared_spec(a) for a in shared]

    out_padded = pl.pallas_call(
        partial(_fused_forward_kernel,
                BBLK=BBLK, S=S, G=G, D=D, H=H, Dh=Dh, FF=FF, L=L),
        out_shape=jax.ShapeDtypeStruct((Bp, G, VPAD), jnp.float32),
        grid=(num_steps,),
        in_specs=in_specs,
        out_specs=pl.BlockSpec((BBLK, G, VPAD), lambda i: (i, 0, 0)),
        compiler_params=pltpu.CompilerParams(
            dimension_semantics=("parallel",)),
    )(combined, stage_bias, *shared)

    return out_padded[:B, :, :V]


# ----------------------------------------------------------------------------
# Main
# ----------------------------------------------------------------------------

if __name__ == "__main__":
    cfg = dict(
        vocab=24,
        d_model=32,
        nhead=4,
        num_layers=2,
        dim_feedforward=64,
        conditioning_dim=16,
        pianoroll_dim=24,
        grid_length=8,
        max_stages=10,
        stage_dim=64,
        vocab_pad=128,
    )
    cfg["seq_len"] = 1 + 2 * cfg["grid_length"]

    key = jax.random.PRNGKey(0)
    kp, kc, km, kh, ks = jax.random.split(key, 5)

    params = init_params(kp, cfg)

    B = 2
    conditioning_vec = jax.random.normal(
        kc, (B, cfg["conditioning_dim"])).astype(jnp.float32)
    melody_grid = jax.random.normal(
        km, (B, cfg["grid_length"], cfg["pianoroll_dim"])).astype(jnp.float32)
    harmony_tokens = jax.random.randint(
        kh, (B, cfg["grid_length"]), 0, cfg["vocab"], dtype=jnp.int32)
    stage_indices = jax.random.randint(
        ks, (B,), 0, cfg["max_stages"], dtype=jnp.int32)

    out = grid_mlm_melharm_forward(
        params, conditioning_vec, melody_grid, harmony_tokens, stage_indices, cfg)
    out = jax.block_until_ready(out)

    assert out.shape == (B, cfg["grid_length"], cfg["vocab"]), out.shape
    assert out.dtype == jnp.float32
    print("KERNEL_OK")
</pallas_src>

<mosaic_0001>
module attributes {stable_mosaic.version = 11 : i64} {
  func.func @_fused_forward_kernel(%arg0: i32, %arg1: memref<1x17x64xf32, #tpu.memory_space<vmem>>, %arg2: memref<1x1x32xf32, #tpu.memory_space<vmem>>, %arg3: memref<40x128xf32, #tpu.memory_space<vmem>>, %arg4: memref<64x32xf32, #tpu.memory_space<vmem>>, %arg5: memref<2x32x96xf32, #tpu.memory_space<vmem>>, %arg6: memref<2x32x32xf32, #tpu.memory_space<vmem>>, %arg7: memref<2x32x64xf32, #tpu.memory_space<vmem>>, %arg8: memref<2x64x32xf32, #tpu.memory_space<vmem>>, %arg9: memref<32x128xf32, #tpu.memory_space<vmem>>, %arg10: memref<1x8x128xf32, #tpu.memory_space<vmem>>) attributes {dimension_semantics = [#tpu.dimension_semantics<parallel>], iteration_bounds = array<i64: 2>, scalar_prefetch = 0 : i64, scratch_operands = 0 : i64, tpu.core_type = #tpu.core_type<tc>, window_params = [{transform_indices = @transform_0, window_bounds = array<i64: 1, 17, 64>}, {transform_indices = @transform_1, window_bounds = array<i64: 1, 1, 32>}, {pipeline_mode = #tpu.pipeline_mode<synchronous>, transform_indices = @transform_2, window_bounds = array<i64: 40, 128>}, {pipeline_mode = #tpu.pipeline_mode<synchronous>, transform_indices = @transform_3, window_bounds = array<i64: 64, 32>}, {pipeline_mode = #tpu.pipeline_mode<synchronous>, transform_indices = @transform_4, window_bounds = array<i64: 2, 32, 96>}, {pipeline_mode = #tpu.pipeline_mode<synchronous>, transform_indices = @transform_5, window_bounds = array<i64: 2, 32, 32>}, {pipeline_mode = #tpu.pipeline_mode<synchronous>, transform_indices = @transform_6, window_bounds = array<i64: 2, 32, 64>}, {pipeline_mode = #tpu.pipeline_mode<synchronous>, transform_indices = @transform_7, window_bounds = array<i64: 2, 64, 32>}, {pipeline_mode = #tpu.pipeline_mode<synchronous>, transform_indices = @transform_8, window_bounds = array<i64: 32, 128>}, {transform_indices = @transform_9, window_bounds = array<i64: 1, 8, 128>}]} {
    %c0 = arith.constant 0 : index
    %c0_0 = arith.constant 0 : index
    %0 = vector.load %arg3[%c0, %c0_0] : memref<40x128xf32, #tpu.memory_space<vmem>>, vector<17x32xf32>
    %c17 = arith.constant 17 : index
    %c0_1 = arith.constant 0 : index
    %1 = vector.load %arg3[%c17, %c0_1] : memref<40x128xf32, #tpu.memory_space<vmem>>, vector<1x32xf32>
    %c18 = arith.constant 18 : index
    %c0_2 = arith.constant 0 : index
    %2 = vector.load %arg3[%c18, %c0_2] : memref<40x128xf32, #tpu.memory_space<vmem>>, vector<1x32xf32>
    %c19 = arith.constant 19 : index
    %c0_3 = arith.constant 0 : index
    %3 = vector.load %arg3[%c19, %c0_3] : memref<40x128xf32, #tpu.memory_space<vmem>>, vector<1x32xf32>
    %c20 = arith.constant 20 : index
    %c0_4 = arith.constant 0 : index
    %4 = vector.load %arg3[%c20, %c0_4] : memref<40x128xf32, #tpu.memory_space<vmem>>, vector<1x32xf32>
    %c21 = arith.constant 21 : index
    %c0_5 = arith.constant 0 : index
    %5 = vector.load %arg3[%c21, %c0_5] : memref<40x128xf32, #tpu.memory_space<vmem>>, vector<1x128xf32>
    %c0_6 = arith.constant 0 : index
    %c0_7 = arith.constant 0 : index
    %6 = vector.load %arg4[%c0_6, %c0_7] : memref<64x32xf32, #tpu.memory_space<vmem>>, vector<64x32xf32>
    %c0_8 = arith.constant 0 : index
    %c0_9 = arith.constant 0 : index
    %7 = vector.load %arg9[%c0_8, %c0_9] : memref<32x128xf32, #tpu.memory_space<vmem>>, vector<32x128xf32>
    %c0_10 = arith.constant 0 : index
    %c0_11 = arith.constant 0 : index
    %c0_12 = arith.constant 0 : index
    %8 = vector.load %arg1[%c0_10, %c0_11, %c0_12] : memref<1x17x64xf32, #tpu.memory_space<vmem>>, vector<1x17x64xf32>
    %9 = vector.shape_cast %8 : vector<1x17x64xf32> to vector<17x64xf32>
    %cst = arith.constant dense<0.000000e+00> : vector<17x32xf32>
    %10 = tpu.matmul %9, %6, %cst {dimension_numbers = #tpu.dot_dimension_numbers<[1], [0], [0], [1], [0, 0, 1, 1], [], []>} : vector<17x64xf32>, vector<64x32xf32>, vector<17x32xf32> -> vector<17x32xf32>
    %11 = arith.addf %10, %0 : vector<17x32xf32>
    %c0_13 = arith.constant 0 : index
    %c0_14 = arith.constant 0 : index
    %c0_15 = arith.constant 0 : index
    %12 = vector.load %arg2[%c0_13, %c0_14, %c0_15] : memref<1x1x32xf32, #tpu.memory_space<vmem>>, vector<1x1x32xf32>
    %13 = vector.shape_cast %12 : vector<1x1x32xf32> to vector<1x32xf32>
    %14 = vector.broadcast %13 : vector<1x32xf32> to vector<17x32xf32>
    %15 = arith.addf %11, %14 : vector<17x32xf32>
    %cst_16 = arith.constant dense<0.000000e+00> : vector<17xf32>
    %16 = vector.multi_reduction <add>, %15, %cst_16 [1] : vector<17x32xf32> to vector<17xf32>
    %17 = vector.shape_cast %16 : vector<17xf32> to vector<17x1xf32>
    %cst_17 = arith.constant 3.200000e+01 : f32
    %18 = vector.broadcast %cst_17 : f32 to vector<17x1xf32>
    %19 = arith.divf %17, %18 : vector<17x1xf32>
    %20 = vector.broadcast %19 : vector<17x1xf32> to vector<17x32xf32>
    %21 = arith.subf %15, %20 : vector<17x32xf32>
    %22 = arith.mulf %21, %21 : vector<17x32xf32>
    %cst_18 = arith.constant dense<0.000000e+00> : vector<17xf32>
    %23 = vector.multi_reduction <add>, %22, %cst_18 [1] : vector<17x32xf32> to vector<17xf32>
    %24 = vector.shape_cast %23 : vector<17xf32> to vector<17x1xf32>
    %cst_19 = arith.constant 3.200000e+01 : f32
    %25 = vector.broadcast %cst_19 : f32 to vector<17x1xf32>
    %26 = arith.divf %24, %25 : vector<17x1xf32>
    %cst_20 = arith.constant 9.99999974E-6 : f32
    %27 = vector.broadcast %cst_20 : f32 to vector<17x1xf32>
    %28 = arith.addf %26, %27 : vector<17x1xf32>
    %29 = math.rsqrt %28 : vector<17x1xf32>
    %30 = vector.broadcast %29 : vector<17x1xf32> to vector<17x32xf32>
    %31 = arith.mulf %21, %30 : vector<17x32xf32>
    %32 = vector.broadcast %1 : vector<1x32xf32> to vector<17x32xf32>
    %33 = arith.mulf %31, %32 : vector<17x32xf32>
    %34 = vector.broadcast %2 : vector<1x32xf32> to vector<17x32xf32>
    %35 = arith.addf %33, %34 : vector<17x32xf32>
    %c0_21 = arith.constant 0 : index
    %c0_22 = arith.constant 0 : index
    %c0_23 = arith.constant 0 : index
    %36 = vector.load %arg5[%c0_21, %c0_22, %c0_23] : memref<2x32x96xf32, #tpu.memory_space<vmem>>, vector<1x32x96xf32>
    %37 = vector.shape_cast %36 : vector<1x32x96xf32> to vector<32x96xf32>
    %cst_24 = arith.constant dense<0.000000e+00> : vector<17x96xf32>
    %38 = tpu.matmul %35, %37, %cst_24 {dimension_numbers = #tpu.dot_dimension_numbers<[1], [0], [0], [1], [0, 0, 1, 1], [], []>} : vector<17x32xf32>, vector<32x96xf32>, vector<17x96xf32> -> vector<17x96xf32>
    %c22 = arith.constant 22 : index
    %c0_25 = arith.constant 0 : index
    %39 = vector.load %arg3[%c22, %c0_25] : memref<40x128xf32, #tpu.memory_space<vmem>>, vector<1x96xf32>
    %40 = vector.broadcast %39 : vector<1x96xf32> to vector<17x96xf32>
    %41 = arith.addf %38, %40 : vector<17x96xf32>
    %42 = vector.extract_strided_slice %41 {offsets = [0, 0], sizes = [17, 8], strides = [1, 1]} : vector<17x96xf32> to vector<17x8xf32>
    %43 = vector.extract_strided_slice %41 {offsets = [0, 32], sizes = [17, 8], strides = [1, 1]} : vector<17x96xf32> to vector<17x8xf32>
    %cst_26 = arith.constant dense<0.000000e+00> : vector<17x17xf32>
    %44 = tpu.matmul %42, %43, %cst_26 {dimension_numbers = #tpu.dot_dimension_numbers<[1], [1], [0], [0], [0, 0, 1, 0], [], []>} : vector<17x8xf32>, vector<17x8xf32>, vector<17x17xf32> -> vector<17x17xf32>
    %45 = vector.extract_strided_slice %41 {offsets = [0, 8], sizes = [17, 8], strides = [1, 1]} : vector<17x96xf32> to vector<17x8xf32>
    %46 = vector.extract_strided_slice %41 {offsets = [0, 40], sizes = [17, 8], strides = [1, 1]} : vector<17x96xf32> to vector<17x8xf32>
    %cst_27 = arith.constant dense<0.000000e+00> : vector<17x17xf32>
    %47 = tpu.matmul %45, %46, %cst_27 {dimension_numbers = #tpu.dot_dimension_numbers<[1], [1], [0], [0], [0, 0, 1, 0], [], []>} : vector<17x8xf32>, vector<17x8xf32>, vector<17x17xf32> -> vector<17x17xf32>
    %48 = vector.extract_strided_slice %41 {offsets = [0, 16], sizes = [17, 8], strides = [1, 1]} : vector<17x96xf32> to vector<17x8xf32>
    %49 = vector.extract_strided_slice %41 {offsets = [0, 48], sizes = [17, 8], strides = [1, 1]} : vector<17x96xf32> to vector<17x8xf32>
    %cst_28 = arith.constant dense<0.000000e+00> : vector<17x17xf32>
    %50 = tpu.matmul %48, %49, %cst_28 {dimension_numbers = #tpu.dot_dimension_numbers<[1], [1], [0], [0], [0, 0, 1, 0], [], []>} : vector<17x8xf32>, vector<17x8xf32>, vector<17x17xf32> -> vector<17x17xf32>
    %51 = vector.extract_strided_slice %41 {offsets = [0, 24], sizes = [17, 8], strides = [1, 1]} : vector<17x96xf32> to vector<17x8xf32>
    %52 = vector.extract_strided_slice %41 {offsets = [0, 56], sizes = [17, 8], strides = [1, 1]} : vector<17x96xf32> to vector<17x8xf32>
    %cst_29 = arith.constant dense<0.000000e+00> : vector<17x17xf32>
    %53 = tpu.matmul %51, %52, %cst_29 {dimension_numbers = #tpu.dot_dimension_numbers<[1], [1], [0], [0], [0, 0, 1, 0], [], []>} : vector<17x8xf32>, vector<17x8xf32>, vector<17x17xf32> -> vector<17x17xf32>
    %54 = vector.shape_cast %44 : vector<17x17xf32> to vector<1x17x17xf32>
    %55 = vector.shape_cast %47 : vector<17x17xf32> to vector<1x17x17xf32>
    %56 = vector.shape_cast %50 : vector<17x17xf32> to vector<1x17x17xf32>
    %57 = vector.shape_cast %53 : vector<17x17xf32> to vector<1x17x17xf32>
    %58 = tpu.concatenate %54, %55, %56, %57 in 0 : vector<1x17x17xf32>, vector<1x17x17xf32>, vector<1x17x17xf32>, vector<1x17x17xf32> -> vector<4x17x17xf32>
    %cst_30 = arith.constant dense<0xFF800000> : vector<4x17xf32>
    %59 = vector.multi_reduction <maximumf>, %58, %cst_30 [2] : vector<4x17x17xf32> to vector<4x17xf32>
    %60 = vector.shape_cast %59 : vector<4x17xf32> to vector<4x17x1xf32>
    %61 = vector.broadcast %60 : vector<4x17x1xf32> to vector<4x17x17xf32>
    %62 = arith.subf %58, %61 : vector<4x17x17xf32>
    %63 = math.exp %62 : vector<4x17x17xf32>
    %cst_31 = arith.constant dense<0.000000e+00> : vector<4x17xf32>
    %64 = vector.multi_reduction <add>, %63, %cst_31 [2] : vector<4x17x17xf32> to vector<4x17xf32>
    %65 = vector.shape_cast %64 : vector<4x17xf32> to vector<4x17x1xf32>
    %66 = tpu.reciprocal %65 {approx = true} : vector<4x17x1xf32> -> vector<4x17x1xf32>
    %67 = vector.broadcast %66 : vector<4x17x1xf32> to vector<4x17x17xf32>
    %68 = arith.mulf %63, %67 : vector<4x17x17xf32>
    %c0_32 = arith.constant 0 : index
    %c0_33 = arith.constant 0 : index
    %c0_34 = arith.constant 0 : index
    %69 = vector.load %arg6[%c0_32, %c0_33, %c0_34] : memref<2x32x32xf32, #tpu.memory_space<vmem>>, vector<1x32x32xf32>
    %70 = vector.shape_cast %69 : vector<1x32x32xf32> to vector<32x32xf32>
    %cst_35 = arith.constant 0.000000e+00 : f32
    %71 = vector.broadcast %cst_35 : f32 to vector<17x32xf32>
    %72 = vector.extract_strided_slice %68 {offsets = [0, 0, 0], sizes = [1, 17, 17], strides = [1, 1, 1]} : vector<4x17x17xf32> to vector<1x17x17xf32>
    %73 = vector.shape_cast %72 : vector<1x17x17xf32> to vector<17x17xf32>
    %74 = vector.extract_strided_slice %41 {offsets = [0, 64], sizes = [17, 8], strides = [1, 1]} : vector<17x96xf32> to vector<17x8xf32>
    %cst_36 = arith.constant dense<0.000000e+00> : vector<17x8xf32>
    %75 = tpu.matmul %73, %74, %cst_36 {dimension_numbers = #tpu.dot_dimension_numbers<[1], [0], [0], [1], [0, 0, 1, 1], [], []>} : vector<17x17xf32>, vector<17x8xf32>, vector<17x8xf32> -> vector<17x8xf32>
    %76 = vector.extract_strided_slice %70 {offsets = [0, 0], sizes = [8, 32], strides = [1, 1]} : vector<32x32xf32> to vector<8x32xf32>
    %cst_37 = arith.constant dense<0.000000e+00> : vector<17x32xf32>
    %77 = tpu.matmul %75, %76, %cst_37 {dimension_numbers = #tpu.dot_dimension_numbers<[1], [0], [0], [1], [0, 0, 1, 1], [], []>} : vector<17x8xf32>, vector<8x32xf32>, vector<17x32xf32> -> vector<17x32xf32>
    %78 = arith.addf %71, %77 : vector<17x32xf32>
    %79 = vector.extract_strided_slice %68 {offsets = [1, 0, 0], sizes = [1, 17, 17], strides = [1, 1, 1]} : vector<4x17x17xf32> to vector<1x17x17xf32>
    %80 = vector.shape_cast %79 : vector<1x17x17xf32> to vector<17x17xf32>
    %81 = vector.extract_strided_slice %41 {offsets = [0, 72], sizes = [17, 8], strides = [1, 1]} : vector<17x96xf32> to vector<17x8xf32>
    %cst_38 = arith.constant dense<0.000000e+00> : vector<17x8xf32>
    %82 = tpu.matmul %80, %81, %cst_38 {dimension_numbers = #tpu.dot_dimension_numbers<[1], [0], [0], [1], [0, 0, 1, 1], [], []>} : vector<17x17xf32>, vector<17x8xf32>, vector<17x8xf32> -> vector<17x8xf32>
    %83 = vector.extract_strided_slice %70 {offsets = [8, 0], sizes = [8, 32], strides = [1, 1]} : vector<32x32xf32> to vector<8x32xf32>
    %cst_39 = arith.constant dense<0.000000e+00> : vector<17x32xf32>
    %84 = tpu.matmul %82, %83, %cst_39 {dimension_numbers = #tpu.dot_dimension_numbers<[1], [0], [0], [1], [0, 0, 1, 1], [], []>} : vector<17x8xf32>, vector<8x32xf32>, vector<17x32xf32> -> vector<17x32xf32>
    %85 = arith.addf %78, %84 : vector<17x32xf32>
    %86 = vector.extract_strided_slice %68 {offsets = [2, 0, 0], sizes = [1, 17, 17], strides = [1, 1, 1]} : vector<4x17x17xf32> to vector<1x17x17xf32>
    %87 = vector.shape_cast %86 : vector<1x17x17xf32> to vector<17x17xf32>
    %88 = vector.extract_strided_slice %41 {offsets = [0, 80], sizes = [17, 8], strides = [1, 1]} : vector<17x96xf32> to vector<17x8xf32>
    %cst_40 = arith.constant dense<0.000000e+00> : vector<17x8xf32>
    %89 = tpu.matmul %87, %88, %cst_40 {dimension_numbers = #tpu.dot_dimension_numbers<[1], [0], [0], [1], [0, 0, 1, 1], [], []>} : vector<17x17xf32>, vector<17x8xf32>, vector<17x8xf32> -> vector<17x8xf32>
    %90 = vector.extract_strided_slice %70 {offsets = [16, 0], sizes = [8, 32], strides = [1, 1]} : vector<32x32xf32> to vector<8x32xf32>
    %cst_41 = arith.constant dense<0.000000e+00> : vector<17x32xf32>
    %91 = tpu.matmul %89, %90, %cst_41 {dimension_numbers = #tpu.dot_dimension_numbers<[1], [0], [0], [1], [0, 0, 1, 1], [], []>} : vector<17x8xf32>, vector<8x32xf32>, vector<17x32xf32> -> vector<17x32xf32>
    %92 = arith.addf %85, %91 : vector<17x32xf32>
    %93 = vector.extract_strided_slice %68 {offsets = [3, 0, 0], sizes = [1, 17, 17], strides = [1, 1, 1]} : vector<4x17x17xf32> to vector<1x17x17xf32>
    %94 = vector.shape_cast %93 : vector<1x17x17xf32> to vector<17x17xf32>
    %95 = vector.extract_strided_slice %41 {offsets = [0, 88], sizes = [17, 8], strides = [1, 1]} : vector<17x96xf32> to vector<17x8xf32>
    %cst_42 = arith.constant dense<0.000000e+00> : vector<17x8xf32>
    %96 = tpu.matmul %94, %95, %cst_42 {dimension_numbers = #tpu.dot_dimension_numbers<[1], [0], [0], [1], [0, 0, 1, 1], [], []>} : vector<17x17xf32>, vector<17x8xf32>, vector<17x8xf32> -> vector<17x8xf32>
    %97 = vector.extract_strided_slice %70 {offsets = [24, 0], sizes = [8, 32], strides = [1, 1]} : vector<32x32xf32> to vector<8x32xf32>
    %cst_43 = arith.constant dense<0.000000e+00> : vector<17x32xf32>
    %98 = tpu.matmul %96, %97, %cst_43 {dimension_numbers = #tpu.dot_dimension_numbers<[1], [0], [0], [1], [0, 0, 1, 1], [], []>} : vector<17x8xf32>, vector<8x32xf32>, vector<17x32xf32> -> vector<17x32xf32>
    %99 = arith.addf %92, %98 : vector<17x32xf32>
    %c23 = arith.constant 23 : index
    %c0_44 = arith.constant 0 : index
    %100 = vector.load %arg3[%c23, %c0_44] : memref<40x128xf32, #tpu.memory_space<vmem>>, vector<1x32xf32>
    %101 = vector.broadcast %100 : vector<1x32xf32> to vector<17x32xf32>
    %102 = arith.addf %99, %101 : vector<17x32xf32>
    %103 = arith.addf %35, %102 : vector<17x32xf32>
    %c24 = arith.constant 24 : index
    %c0_45 = arith.constant 0 : index
    %104 = vector.load %arg3[%c24, %c0_45] : memref<40x128xf32, #tpu.memory_space<vmem>>, vector<1x32xf32>
    %c25 = arith.constant 25 : index
    %c0_46 = arith.constant 0 : index
    %105 = vector.load %arg3[%c25, %c0_46] : memref<40x128xf32, #tpu.memory_space<vmem>>, vector<1x32xf32>
    %cst_47 = arith.constant dense<0.000000e+00> : vector<17xf32>
    %106 = vector.multi_reduction <add>, %103, %cst_47 [1] : vector<17x32xf32> to vector<17xf32>
    %107 = vector.shape_cast %106 : vector<17xf32> to vector<17x1xf32>
    %cst_48 = arith.constant 3.200000e+01 : f32
    %108 = vector.broadcast %cst_48 : f32 to vector<17x1xf32>
    %109 = arith.divf %107, %108 : vector<17x1xf32>
    %110 = vector.broadcast %109 : vector<17x1xf32> to vector<17x32xf32>
    %111 = arith.subf %103, %110 : vector<17x32xf32>
    %112 = arith.mulf %111, %111 : vector<17x32xf32>
    %cst_49 = arith.constant dense<0.000000e+00> : vector<17xf32>
    %113 = vector.multi_reduction <add>, %112, %cst_49 [1] : vector<17x32xf32> to vector<17xf32>
    %114 = vector.shape_cast %113 : vector<17xf32> to vector<17x1xf32>
    %cst_50 = arith.constant 3.200000e+01 : f32
    %115 = vector.broadcast %cst_50 : f32 to vector<17x1xf32>
    %116 = arith.divf %114, %115 : vector<17x1xf32>
    %cst_51 = arith.constant 9.99999974E-6 : f32
    %117 = vector.broadcast %cst_51 : f32 to vector<17x1xf32>
    %118 = arith.addf %116, %117 : vector<17x1xf32>
    %119 = math.rsqrt %118 : vector<17x1xf32>
    %120 = vector.broadcast %119 : vector<17x1xf32> to vector<17x32xf32>
    %121 = arith.mulf %111, %120 : vector<17x32xf32>
    %122 = vector.broadcast %104 : vector<1x32xf32> to vector<17x32xf32>
    %123 = arith.mulf %121, %122 : vector<17x32xf32>
    %124 = vector.broadcast %105 : vector<1x32xf32> to vector<17x32xf32>
    %125 = arith.addf %123, %124 : vector<17x32xf32>
    %c0_52 = arith.constant 0 : index
    %c0_53 = arith.constant 0 : index
    %c0_54 = arith.constant 0 : index
    %126 = vector.load %arg7[%c0_52, %c0_53, %c0_54] : memref<2x32x64xf32, #tpu.memory_space<vmem>>, vector<1x32x64xf32>
    %127 = vector.shape_cast %126 : vector<1x32x64xf32> to vector<32x64xf32>
    %cst_55 = arith.constant dense<0.000000e+00> : vector<17x64xf32>
    %128 = tpu.matmul %125, %127, %cst_55 {dimension_numbers = #tpu.dot_dimension_numbers<[1], [0], [0], [1], [0, 0, 1, 1], [], []>} : vector<17x32xf32>, vector<32x64xf32>, vector<17x64xf32> -> vector<17x64xf32>
    %c26 = arith.constant 26 : index
    %c0_56 = arith.constant 0 : index
    %129 = vector.load %arg3[%c26, %c0_56] : memref<40x128xf32, #tpu.memory_space<vmem>>, vector<1x64xf32>
    %130 = vector.broadcast %129 : vector<1x64xf32> to vector<17x64xf32>
    %131 = arith.addf %128, %130 : vector<17x64xf32>
    %cst_57 = arith.constant 5.000000e-01 : f32
    %132 = vector.broadcast %cst_57 : f32 to vector<17x64xf32>
    %133 = arith.mulf %132, %131 : vector<17x64xf32>
    %cst_58 = arith.constant 0.707106769 : f32
    %134 = vector.broadcast %cst_58 : f32 to vector<17x64xf32>
    %135 = arith.mulf %131, %134 : vector<17x64xf32>
    %136 = math.absf %135 : vector<17x64xf32>
    %cst_59 = arith.constant 0.327591091 : f32
    %137 = vector.broadcast %cst_59 : f32 to vector<17x64xf32>
    %138 = arith.mulf %137, %136 : vector<17x64xf32>
    %cst_60 = arith.constant 1.000000e+00 : f32
    %139 = vector.broadcast %cst_60 : f32 to vector<17x64xf32>
    %140 = arith.addf %139, %138 : vector<17x64xf32>
    %cst_61 = arith.constant 1.000000e+00 : f32
    %141 = vector.broadcast %cst_61 : f32 to vector<17x64xf32>
    %142 = arith.divf %141, %140 : vector<17x64xf32>
    %cst_62 = arith.constant 1.06140542 : f32
    %143 = vector.broadcast %cst_62 : f32 to vector<17x64xf32>
    %144 = arith.mulf %142, %143 : vector<17x64xf32>
    %cst_63 = arith.constant -1.45315206 : f32
    %145 = vector.broadcast %cst_63 : f32 to vector<17x64xf32>
    %146 = arith.addf %145, %144 : vector<17x64xf32>
    %147 = arith.mulf %142, %146 : vector<17x64xf32>
    %cst_64 = arith.constant 1.42141378 : f32
    %148 = vector.broadcast %cst_64 : f32 to vector<17x64xf32>
    %149 = arith.addf %148, %147 : vector<17x64xf32>
    %150 = arith.mulf %142, %149 : vector<17x64xf32>
    %cst_65 = arith.constant -0.284496725 : f32
    %151 = vector.broadcast %cst_65 : f32 to vector<17x64xf32>
    %152 = arith.addf %151, %150 : vector<17x64xf32>
    %153 = arith.mulf %142, %152 : vector<17x64xf32>
    %cst_66 = arith.constant 0.254829586 : f32
    %154 = vector.broadcast %cst_66 : f32 to vector<17x64xf32>
    %155 = arith.addf %154, %153 : vector<17x64xf32>
    %156 = arith.mulf %142, %155 : vector<17x64xf32>
    %cst_67 = arith.constant 0.000000e+00 : f32
    %157 = vector.broadcast %cst_67 : f32 to vector<17x64xf32>
    %158 = arith.subf %157, %136 : vector<17x64xf32>
    %159 = arith.mulf %158, %136 : vector<17x64xf32>
    %160 = math.exp %159 : vector<17x64xf32>
    %161 = arith.mulf %156, %160 : vector<17x64xf32>
    %cst_68 = arith.constant 1.000000e+00 : f32
    %162 = vector.broadcast %cst_68 : f32 to vector<17x64xf32>
    %163 = arith.subf %162, %161 : vector<17x64xf32>
    %cst_69 = arith.constant 0.000000e+00 : f32
    %164 = vector.broadcast %cst_69 : f32 to vector<17x64xf32>
    %165 = arith.cmpf oge, %135, %164 : vector<17x64xf32>
    %cst_70 = arith.constant 0.000000e+00 : f32
    %166 = vector.broadcast %cst_70 : f32 to vector<17x64xf32>
    %167 = arith.subf %166, %163 : vector<17x64xf32>
    %168 = arith.select %165, %163, %167 : vector<17x64xi1>, vector<17x64xf32>
    %cst_71 = arith.constant 1.000000e+00 : f32
    %169 = vector.broadcast %cst_71 : f32 to vector<17x64xf32>
    %170 = arith.addf %169, %168 : vector<17x64xf32>
    %171 = arith.mulf %133, %170 : vector<17x64xf32>
    %c0_72 = arith.constant 0 : index
    %c0_73 = arith.constant 0 : index
    %c0_74 = arith.constant 0 : index
    %172 = vector.load %arg8[%c0_72, %c0_73, %c0_74] : memref<2x64x32xf32, #tpu.memory_space<vmem>>, vector<1x64x32xf32>
    %173 = vector.shape_cast %172 : vector<1x64x32xf32> to vector<64x32xf32>
    %cst_75 = arith.constant dense<0.000000e+00> : vector<17x32xf32>
    %174 = tpu.matmul %171, %173, %cst_75 {dimension_numbers = #tpu.dot_dimension_numbers<[1], [0], [0], [1], [0, 0, 1, 1], [], []>} : vector<17x64xf32>, vector<64x32xf32>, vector<17x32xf32> -> vector<17x32xf32>
    %c27 = arith.constant 27 : index
    %c0_76 = arith.constant 0 : index
    %175 = vector.load %arg3[%c27, %c0_76] : memref<40x128xf32, #tpu.memory_space<vmem>>, vector<1x32xf32>
    %176 = vector.broadcast %175 : vector<1x32xf32> to vector<17x32xf32>
    %177 = arith.addf %174, %176 : vector<17x32xf32>
    %178 = arith.addf %125, %177 : vector<17x32xf32>
    %c28 = arith.constant 28 : index
    %c0_77 = arith.constant 0 : index
    %179 = vector.load %arg3[%c28, %c0_77] : memref<40x128xf32, #tpu.memory_space<vmem>>, vector<1x32xf32>
    %c29 = arith.constant 29 : index
    %c0_78 = arith.constant 0 : index
    %180 = vector.load %arg3[%c29, %c0_78] : memref<40x128xf32, #tpu.memory_space<vmem>>, vector<1x32xf32>
    %cst_79 = arith.constant dense<0.000000e+00> : vector<17xf32>
    %181 = vector.multi_reduction <add>, %178, %cst_79 [1] : vector<17x32xf32> to vector<17xf32>
    %182 = vector.shape_cast %181 : vector<17xf32> to vector<17x1xf32>
    %cst_80 = arith.constant 3.200000e+01 : f32
    %183 = vector.broadcast %cst_80 : f32 to vector<17x1xf32>
    %184 = arith.divf %182, %183 : vector<17x1xf32>
    %185 = vector.broadcast %184 : vector<17x1xf32> to vector<17x32xf32>
    %186 = arith.subf %178, %185 : vector<17x32xf32>
    %187 = arith.mulf %186, %186 : vector<17x32xf32>
    %cst_81 = arith.constant dense<0.000000e+00> : vector<17xf32>
    %188 = vector.multi_reduction <add>, %187, %cst_81 [1] : vector<17x32xf32> to vector<17xf32>
    %189 = vector.shape_cast %188 : vector<17xf32> to vector<17x1xf32>
    %cst_82 = arith.constant 3.200000e+01 : f32
    %190 = vector.broadcast %cst_82 : f32 to vector<17x1xf32>
    %191 = arith.divf %189, %190 : vector<17x1xf32>
    %cst_83 = arith.constant 9.99999974E-6 : f32
    %192 = vector.broadcast %cst_83 : f32 to vector<17x1xf32>
    %193 = arith.addf %191, %192 : vector<17x1xf32>
    %194 = math.rsqrt %193 : vector<17x1xf32>
    %195 = vector.broadcast %194 : vector<17x1xf32> to vector<17x32xf32>
    %196 = arith.mulf %186, %195 : vector<17x32xf32>
    %197 = vector.broadcast %179 : vector<1x32xf32> to vector<17x32xf32>
    %198 = arith.mulf %196, %197 : vector<17x32xf32>
    %199 = vector.broadcast %180 : vector<1x32xf32> to vector<17x32xf32>
    %200 = arith.addf %198, %199 : vector<17x32xf32>
    %c1 = arith.constant 1 : index
    %c0_84 = arith.constant 0 : index
    %c0_85 = arith.constant 0 : index
    %201 = vector.load %arg5[%c1, %c0_84, %c0_85] : memref<2x32x96xf32, #tpu.memory_space<vmem>>, vector<1x32x96xf32>
    %202 = vector.shape_cast %201 : vector<1x32x96xf32> to vector<32x96xf32>
    %cst_86 = arith.constant dense<0.000000e+00> : vector<17x96xf32>
    %203 = tpu.matmul %200, %202, %cst_86 {dimension_numbers = #tpu.dot_dimension_numbers<[1], [0], [0], [1], [0, 0, 1, 1], [], []>} : vector<17x32xf32>, vector<32x96xf32>, vector<17x96xf32> -> vector<17x96xf32>
    %c30 = arith.constant 30 : index
    %c0_87 = arith.constant 0 : index
    %204 = vector.load %arg3[%c30, %c0_87] : memref<40x128xf32, #tpu.memory_space<vmem>>, vector<1x96xf32>
    %205 = vector.broadcast %204 : vector<1x96xf32> to vector<17x96xf32>
    %206 = arith.addf %203, %205 : vector<17x96xf32>
    %207 = vector.extract_strided_slice %206 {offsets = [0, 0], sizes = [17, 8], strides = [1, 1]} : vector<17x96xf32> to vector<17x8xf32>
    %208 = vector.extract_strided_slice %206 {offsets = [0, 32], sizes = [17, 8], strides = [1, 1]} : vector<17x96xf32> to vector<17x8xf32>
    %cst_88 = arith.constant dense<0.000000e+00> : vector<17x17xf32>
    %209 = tpu.matmul %207, %208, %cst_88 {dimension_numbers = #tpu.dot_dimension_numbers<[1], [1], [0], [0], [0, 0, 1, 0], [], []>} : vector<17x8xf32>, vector<17x8xf32>, vector<17x17xf32> -> vector<17x17xf32>
    %210 = vector.extract_strided_slice %206 {offsets = [0, 8], sizes = [17, 8], strides = [1, 1]} : vector<17x96xf32> to vector<17x8xf32>
    %211 = vector.extract_strided_slice %206 {offsets = [0, 40], sizes = [17, 8], strides = [1, 1]} : vector<17x96xf32> to vector<17x8xf32>
    %cst_89 = arith.constant dense<0.000000e+00> : vector<17x17xf32>
    %212 = tpu.matmul %210, %211, %cst_89 {dimension_numbers = #tpu.dot_dimension_numbers<[1], [1], [0], [0], [0, 0, 1, 0], [], []>} : vector<17x8xf32>, vector<17x8xf32>, vector<17x17xf32> -> vector<17x17xf32>
    %213 = vector.extract_strided_slice %206 {offsets = [0, 16], sizes = [17, 8], strides = [1, 1]} : vector<17x96xf32> to vector<17x8xf32>
    %214 = vector.extract_strided_slice %206 {offsets = [0, 48], sizes = [17, 8], strides = [1, 1]} : vector<17x96xf32> to vector<17x8xf32>
    %cst_90 = arith.constant dense<0.000000e+00> : vector<17x17xf32>
    %215 = tpu.matmul %213, %214, %cst_90 {dimension_numbers = #tpu.dot_dimension_numbers<[1], [1], [0], [0], [0, 0, 1, 0], [], []>} : vector<17x8xf32>, vector<17x8xf32>, vector<17x17xf32> -> vector<17x17xf32>
    %216 = vector.extract_strided_slice %206 {offsets = [0, 24], sizes = [17, 8], strides = [1, 1]} : vector<17x96xf32> to vector<17x8xf32>
    %217 = vector.extract_strided_slice %206 {offsets = [0, 56], sizes = [17, 8], strides = [1, 1]} : vector<17x96xf32> to vector<17x8xf32>
    %cst_91 = arith.constant dense<0.000000e+00> : vector<17x17xf32>
    %218 = tpu.matmul %216, %217, %cst_91 {dimension_numbers = #tpu.dot_dimension_numbers<[1], [1], [0], [0], [0, 0, 1, 0], [], []>} : vector<17x8xf32>, vector<17x8xf32>, vector<17x17xf32> -> vector<17x17xf32>
    %219 = vector.shape_cast %209 : vector<17x17xf32> to vector<1x17x17xf32>
    %220 = vector.shape_cast %212 : vector<17x17xf32> to vector<1x17x17xf32>
    %221 = vector.shape_cast %215 : vector<17x17xf32> to vector<1x17x17xf32>
    %222 = vector.shape_cast %218 : vector<17x17xf32> to vector<1x17x17xf32>
    %223 = tpu.concatenate %219, %220, %221, %222 in 0 : vector<1x17x17xf32>, vector<1x17x17xf32>, vector<1x17x17xf32>, vector<1x17x17xf32> -> vector<4x17x17xf32>
    %cst_92 = arith.constant dense<0xFF800000> : vector<4x17xf32>
    %224 = vector.multi_reduction <maximumf>, %223, %cst_92 [2] : vector<4x17x17xf32> to vector<4x17xf32>
    %225 = vector.shape_cast %224 : vector<4x17xf32> to vector<4x17x1xf32>
    %226 = vector.broadcast %225 : vector<4x17x1xf32> to vector<4x17x17xf32>
    %227 = arith.subf %223, %226 : vector<4x17x17xf32>
    %228 = math.exp %227 : vector<4x17x17xf32>
    %cst_93 = arith.constant dense<0.000000e+00> : vector<4x17xf32>
    %229 = vector.multi_reduction <add>, %228, %cst_93 [2] : vector<4x17x17xf32> to vector<4x17xf32>
    %230 = vector.shape_cast %229 : vector<4x17xf32> to vector<4x17x1xf32>
    %231 = tpu.reciprocal %230 {approx = true} : vector<4x17x1xf32> -> vector<4x17x1xf32>
    %232 = vector.broadcast %231 : vector<4x17x1xf32> to vector<4x17x17xf32>
    %233 = arith.mulf %228, %232 : vector<4x17x17xf32>
    %c1_94 = arith.constant 1 : index
    %c0_95 = arith.constant 0 : index
    %c0_96 = arith.constant 0 : index
    %234 = vector.load %arg6[%c1_94, %c0_95, %c0_96] : memref<2x32x32xf32, #tpu.memory_space<vmem>>, vector<1x32x32xf32>
    %235 = vector.shape_cast %234 : vector<1x32x32xf32> to vector<32x32xf32>
    %cst_97 = arith.constant 0.000000e+00 : f32
    %236 = vector.broadcast %cst_97 : f32 to vector<17x32xf32>
    %237 = vector.extract_strided_slice %233 {offsets = [0, 0, 0], sizes = [1, 17, 17], strides = [1, 1, 1]} : vector<4x17x17xf32> to vector<1x17x17xf32>
    %238 = vector.shape_cast %237 : vector<1x17x17xf32> to vector<17x17xf32>
    %239 = vector.extract_strided_slice %206 {offsets = [0, 64], sizes = [17, 8], strides = [1, 1]} : vector<17x96xf32> to vector<17x8xf32>
    %cst_98 = arith.constant dense<0.000000e+00> : vector<17x8xf32>
    %240 = tpu.matmul %238, %239, %cst_98 {dimension_numbers = #tpu.dot_dimension_numbers<[1], [0], [0], [1], [0, 0, 1, 1], [], []>} : vector<17x17xf32>, vector<17x8xf32>, vector<17x8xf32> -> vector<17x8xf32>
    %241 = vector.extract_strided_slice %235 {offsets = [0, 0], sizes = [8, 32], strides = [1, 1]} : vector<32x32xf32> to vector<8x32xf32>
    %cst_99 = arith.constant dense<0.000000e+00> : vector<17x32xf32>
    %242 = tpu.matmul %240, %241, %cst_99 {dimension_numbers = #tpu.dot_dimension_numbers<[1], [0], [0], [1], [0, 0, 1, 1], [], []>} : vector<17x8xf32>, vector<8x32xf32>, vector<17x32xf32> -> vector<17x32xf32>
    %243 = arith.addf %236, %242 : vector<17x32xf32>
    %244 = vector.extract_strided_slice %233 {offsets = [1, 0, 0], sizes = [1, 17, 17], strides = [1, 1, 1]} : vector<4x17x17xf32> to vector<1x17x17xf32>
    %245 = vector.shape_cast %244 : vector<1x17x17xf32> to vector<17x17xf32>
    %246 = vector.extract_strided_slice %206 {offsets = [0, 72], sizes = [17, 8], strides = [1, 1]} : vector<17x96xf32> to vector<17x8xf32>
    %cst_100 = arith.constant dense<0.000000e+00> : vector<17x8xf32>
    %247 = tpu.matmul %245, %246, %cst_100 {dimension_numbers = #tpu.dot_dimension_numbers<[1], [0], [0], [1], [0, 0, 1, 1], [], []>} : vector<17x17xf32>, vector<17x8xf32>, vector<17x8xf32> -> vector<17x8xf32>
    %248 = vector.extract_strided_slice %235 {offsets = [8, 0], sizes = [8, 32], strides = [1, 1]} : vector<32x32xf32> to vector<8x32xf32>
    %cst_101 = arith.constant dense<0.000000e+00> : vector<17x32xf32>
    %249 = tpu.matmul %247, %248, %cst_101 {dimension_numbers = #tpu.dot_dimension_numbers<[1], [0], [0], [1], [0, 0, 1, 1], [], []>} : vector<17x8xf32>, vector<8x32xf32>, vector<17x32xf32> -> vector<17x32xf32>
    %250 = arith.addf %243, %249 : vector<17x32xf32>
    %251 = vector.extract_strided_slice %233 {offsets = [2, 0, 0], sizes = [1, 17, 17], strides = [1, 1, 1]} : vector<4x17x17xf32> to vector<1x17x17xf32>
    %252 = vector.shape_cast %251 : vector<1x17x17xf32> to vector<17x17xf32>
    %253 = vector.extract_strided_slice %206 {offsets = [0, 80], sizes = [17, 8], strides = [1, 1]} : vector<17x96xf32> to vector<17x8xf32>
    %cst_102 = arith.constant dense<0.000000e+00> : vector<17x8xf32>
    %254 = tpu.matmul %252, %253, %cst_102 {dimension_numbers = #tpu.dot_dimension_numbers<[1], [0], [0], [1], [0, 0, 1, 1], [], []>} : vector<17x17xf32>, vector<17x8xf32>, vector<17x8xf32> -> vector<17x8xf32>
    %255 = vector.extract_strided_slice %235 {offsets = [16, 0], sizes = [8, 32], strides = [1, 1]} : vector<32x32xf32> to vector<8x32xf32>
    %cst_103 = arith.constant dense<0.000000e+00> : vector<17x32xf32>
    %256 = tpu.matmul %254, %255, %cst_103 {dimension_numbers = #tpu.dot_dimension_numbers<[1], [0], [0], [1], [0, 0, 1, 1], [], []>} : vector<17x8xf32>, vector<8x32xf32>, vector<17x32xf32> -> vector<17x32xf32>
    %257 = arith.addf %250, %256 : vector<17x32xf32>
    %258 = vector.extract_strided_slice %233 {offsets = [3, 0, 0], sizes = [1, 17, 17], strides = [1, 1, 1]} : vector<4x17x17xf32> to vector<1x17x17xf32>
    %259 = vector.shape_cast %258 : vector<1x17x17xf32> to vector<17x17xf32>
    %260 = vector.extract_strided_slice %206 {offsets = [0, 88], sizes = [17, 8], strides = [1, 1]} : vector<17x96xf32> to vector<17x8xf32>
    %cst_104 = arith.constant dense<0.000000e+00> : vector<17x8xf32>
    %261 = tpu.matmul %259, %260, %cst_104 {dimension_numbers = #tpu.dot_dimension_numbers<[1], [0], [0], [1], [0, 0, 1, 1], [], []>} : vector<17x17xf32>, vector<17x8xf32>, vector<17x8xf32> -> vector<17x8xf32>
    %262 = vector.extract_strided_slice %235 {offsets = [24, 0], sizes = [8, 32], strides = [1, 1]} : vector<32x32xf32> to vector<8x32xf32>
    %cst_105 = arith.constant dense<0.000000e+00> : vector<17x32xf32>
    %263 = tpu.matmul %261, %262, %cst_105 {dimension_numbers = #tpu.dot_dimension_numbers<[1], [0], [0], [1], [0, 0, 1, 1], [], []>} : vector<17x8xf32>, vector<8x32xf32>, vector<17x32xf32> -> vector<17x32xf32>
    %264 = arith.addf %257, %263 : vector<17x32xf32>
    %c31 = arith.constant 31 : index
    %c0_106 = arith.constant 0 : index
    %265 = vector.load %arg3[%c31, %c0_106] : memref<40x128xf32, #tpu.memory_space<vmem>>, vector<1x32xf32>
    %266 = vector.broadcast %265 : vector<1x32xf32> to vector<17x32xf32>
    %267 = arith.addf %264, %266 : vector<17x32xf32>
    %268 = arith.addf %200, %267 : vector<17x32xf32>
    %c32 = arith.constant 32 : index
    %c0_107 = arith.constant 0 : index
    %269 = vector.load %arg3[%c32, %c0_107] : memref<40x128xf32, #tpu.memory_space<vmem>>, vector<1x32xf32>
    %c33 = arith.constant 33 : index
    %c0_108 = arith.constant 0 : index
    %270 = vector.load %arg3[%c33, %c0_108] : memref<40x128xf32, #tpu.memory_space<vmem>>, vector<1x32xf32>
    %cst_109 = arith.constant dense<0.000000e+00> : vector<17xf32>
    %271 = vector.multi_reduction <add>, %268, %cst_109 [1] : vector<17x32xf32> to vector<17xf32>
    %272 = vector.shape_cast %271 : vector<17xf32> to vector<17x1xf32>
    %cst_110 = arith.constant 3.200000e+01 : f32
    %273 = vector.broadcast %cst_110 : f32 to vector<17x1xf32>
    %274 = arith.divf %272, %273 : vector<17x1xf32>
    %275 = vector.broadcast %274 : vector<17x1xf32> to vector<17x32xf32>
    %276 = arith.subf %268, %275 : vector<17x32xf32>
    %277 = arith.mulf %276, %276 : vector<17x32xf32>
    %cst_111 = arith.constant dense<0.000000e+00> : vector<17xf32>
    %278 = vector.multi_reduction <add>, %277, %cst_111 [1] : vector<17x32xf32> to vector<17xf32>
    %279 = vector.shape_cast %278 : vector<17xf32> to vector<17x1xf32>
    %cst_112 = arith.constant 3.200000e+01 : f32
    %280 = vector.broadcast %cst_112 : f32 to vector<17x1xf32>
    %281 = arith.divf %279, %280 : vector<17x1xf32>
    %cst_113 = arith.constant 9.99999974E-6 : f32
    %282 = vector.broadcast %cst_113 : f32 to vector<17x1xf32>
    %283 = arith.addf %281, %282 : vector<17x1xf32>
    %284 = math.rsqrt %283 : vector<17x1xf32>
    %285 = vector.broadcast %284 : vector<17x1xf32> to vector<17x32xf32>
    %286 = arith.mulf %276, %285 : vector<17x32xf32>
    %287 = vector.broadcast %269 : vector<1x32xf32> to vector<17x32xf32>
    %288 = arith.mulf %286, %287 : vector<17x32xf32>
    %289 = vector.broadcast %270 : vector<1x32xf32> to vector<17x32xf32>
    %290 = arith.addf %288, %289 : vector<17x32xf32>
    %c1_114 = arith.constant 1 : index
    %c0_115 = arith.constant 0 : index
    %c0_116 = arith.constant 0 : index
    %291 = vector.load %arg7[%c1_114, %c0_115, %c0_116] : memref<2x32x64xf32, #tpu.memory_space<vmem>>, vector<1x32x64xf32>
    %292 = vector.shape_cast %291 : vector<1x32x64xf32> to vector<32x64xf32>
    %cst_117 = arith.constant dense<0.000000e+00> : vector<17x64xf32>
    %293 = tpu.matmul %290, %292, %cst_117 {dimension_numbers = #tpu.dot_dimension_numbers<[1], [0], [0], [1], [0, 0, 1, 1], [], []>} : vector<17x32xf32>, vector<32x64xf32>, vector<17x64xf32> -> vector<17x64xf32>
    %c34 = arith.constant 34 : index
    %c0_118 = arith.constant 0 : index
    %294 = vector.load %arg3[%c34, %c0_118] : memref<40x128xf32, #tpu.memory_space<vmem>>, vector<1x64xf32>
    %295 = vector.broadcast %294 : vector<1x64xf32> to vector<17x64xf32>
    %296 = arith.addf %293, %295 : vector<17x64xf32>
    %cst_119 = arith.constant 5.000000e-01 : f32
    %297 = vector.broadcast %cst_119 : f32 to vector<17x64xf32>
    %298 = arith.mulf %297, %296 : vector<17x64xf32>
    %cst_120 = arith.constant 0.707106769 : f32
    %299 = vector.broadcast %cst_120 : f32 to vector<17x64xf32>
    %300 = arith.mulf %296, %299 : vector<17x64xf32>
    %301 = math.absf %300 : vector<17x64xf32>
    %cst_121 = arith.constant 0.327591091 : f32
    %302 = vector.broadcast %cst_121 : f32 to vector<17x64xf32>
    %303 = arith.mulf %302, %301 : vector<17x64xf32>
    %cst_122 = arith.constant 1.000000e+00 : f32
    %304 = vector.broadcast %cst_122 : f32 to vector<17x64xf32>
    %305 = arith.addf %304, %303 : vector<17x64xf32>
    %cst_123 = arith.constant 1.000000e+00 : f32
    %306 = vector.broadcast %cst_123 : f32 to vector<17x64xf32>
    %307 = arith.divf %306, %305 : vector<17x64xf32>
    %cst_124 = arith.constant 1.06140542 : f32
    %308 = vector.broadcast %cst_124 : f32 to vector<17x64xf32>
    %309 = arith.mulf %307, %308 : vector<17x64xf32>
    %cst_125 = arith.constant -1.45315206 : f32
    %310 = vector.broadcast %cst_125 : f32 to vector<17x64xf32>
    %311 = arith.addf %310, %309 : vector<17x64xf32>
    %312 = arith.mulf %307, %311 : vector<17x64xf32>
    %cst_126 = arith.constant 1.42141378 : f32
    %313 = vector.broadcast %cst_126 : f32 to vector<17x64xf32>
    %314 = arith.addf %313, %312 : vector<17x64xf32>
    %315 = arith.mulf %307, %314 : vector<17x64xf32>
    %cst_127 = arith.constant -0.284496725 : f32
    %316 = vector.broadcast %cst_127 : f32 to vector<17x64xf32>
    %317 = arith.addf %316, %315 : vector<17x64xf32>
    %318 = arith.mulf %307, %317 : vector<17x64xf32>
    %cst_128 = arith.constant 0.254829586 : f32
    %319 = vector.broadcast %cst_128 : f32 to vector<17x64xf32>
    %320 = arith.addf %319, %318 : vector<17x64xf32>
    %321 = arith.mulf %307, %320 : vector<17x64xf32>
    %cst_129 = arith.constant 0.000000e+00 : f32
    %322 = vector.broadcast %cst_129 : f32 to vector<17x64xf32>
    %323 = arith.subf %322, %301 : vector<17x64xf32>
    %324 = arith.mulf %323, %301 : vector<17x64xf32>
    %325 = math.exp %324 : vector<17x64xf32>
    %326 = arith.mulf %321, %325 : vector<17x64xf32>
    %cst_130 = arith.constant 1.000000e+00 : f32
    %327 = vector.broadcast %cst_130 : f32 to vector<17x64xf32>
    %328 = arith.subf %327, %326 : vector<17x64xf32>
    %cst_131 = arith.constant 0.000000e+00 : f32
    %329 = vector.broadcast %cst_131 : f32 to vector<17x64xf32>
    %330 = arith.cmpf oge, %300, %329 : vector<17x64xf32>
    %cst_132 = arith.constant 0.000000e+00 : f32
    %331 = vector.broadcast %cst_132 : f32 to vector<17x64xf32>
    %332 = arith.subf %331, %328 : vector<17x64xf32>
    %333 = arith.select %330, %328, %332 : vector<17x64xi1>, vector<17x64xf32>
    %cst_133 = arith.constant 1.000000e+00 : f32
    %334 = vector.broadcast %cst_133 : f32 to vector<17x64xf32>
    %335 = arith.addf %334, %333 : vector<17x64xf32>
    %336 = arith.mulf %298, %335 : vector<17x64xf32>
    %c1_134 = arith.constant 1 : index
    %c0_135 = arith.constant 0 : index
    %c0_136 = arith.constant 0 : index
    %337 = vector.load %arg8[%c1_134, %c0_135, %c0_136] : memref<2x64x32xf32, #tpu.memory_space<vmem>>, vector<1x64x32xf32>
    %338 = vector.shape_cast %337 : vector<1x64x32xf32> to vector<64x32xf32>
    %cst_137 = arith.constant dense<0.000000e+00> : vector<17x32xf32>
    %339 = tpu.matmul %336, %338, %cst_137 {dimension_numbers = #tpu.dot_dimension_numbers<[1], [0], [0], [1], [0, 0, 1, 1], [], []>} : vector<17x64xf32>, vector<64x32xf32>, vector<17x32xf32> -> vector<17x32xf32>
    %c35 = arith.constant 35 : index
    %c0_138 = arith.constant 0 : index
    %340 = vector.load %arg3[%c35, %c0_138] : memref<40x128xf32, #tpu.memory_space<vmem>>, vector<1x32xf32>
    %341 = vector.broadcast %340 : vector<1x32xf32> to vector<17x32xf32>
    %342 = arith.addf %339, %341 : vector<17x32xf32>
    %343 = arith.addf %290, %342 : vector<17x32xf32>
    %c36 = arith.constant 36 : index
    %c0_139 = arith.constant 0 : index
    %344 = vector.load %arg3[%c36, %c0_139] : memref<40x128xf32, #tpu.memory_space<vmem>>, vector<1x32xf32>
    %c37 = arith.constant 37 : index
    %c0_140 = arith.constant 0 : index
    %345 = vector.load %arg3[%c37, %c0_140] : memref<40x128xf32, #tpu.memory_space<vmem>>, vector<1x32xf32>
    %cst_141 = arith.constant dense<0.000000e+00> : vector<17xf32>
    %346 = vector.multi_reduction <add>, %343, %cst_141 [1] : vector<17x32xf32> to vector<17xf32>
    %347 = vector.shape_cast %346 : vector<17xf32> to vector<17x1xf32>
    %cst_142 = arith.constant 3.200000e+01 : f32
    %348 = vector.broadcast %cst_142 : f32 to vector<17x1xf32>
    %349 = arith.divf %347, %348 : vector<17x1xf32>
    %350 = vector.broadcast %349 : vector<17x1xf32> to vector<17x32xf32>
    %351 = arith.subf %343, %350 : vector<17x32xf32>
    %352 = arith.mulf %351, %351 : vector<17x32xf32>
    %cst_143 = arith.constant dense<0.000000e+00> : vector<17xf32>
    %353 = vector.multi_reduction <add>, %352, %cst_143 [1] : vector<17x32xf32> to vector<17xf32>
    %354 = vector.shape_cast %353 : vector<17xf32> to vector<17x1xf32>
    %cst_144 = arith.constant 3.200000e+01 : f32
    %355 = vector.broadcast %cst_144 : f32 to vector<17x1xf32>
    %356 = arith.divf %354, %355 : vector<17x1xf32>
    %cst_145 = arith.constant 9.99999974E-6 : f32
    %357 = vector.broadcast %cst_145 : f32 to vector<17x1xf32>
    %358 = arith.addf %356, %357 : vector<17x1xf32>
    %359 = math.rsqrt %358 : vector<17x1xf32>
    %360 = vector.broadcast %359 : vector<17x1xf32> to vector<17x32xf32>
    %361 = arith.mulf %351, %360 : vector<17x32xf32>
    %362 = vector.broadcast %344 : vector<1x32xf32> to vector<17x32xf32>
    %363 = arith.mulf %361, %362 : vector<17x32xf32>
    %364 = vector.broadcast %345 : vector<1x32xf32> to vector<17x32xf32>
    %365 = arith.addf %363, %364 : vector<17x32xf32>
    %366 = vector.extract_strided_slice %365 {offsets = [8, 0], sizes = [8, 32], strides = [1, 1]} : vector<17x32xf32> to vector<8x32xf32>
    %cst_146 = arith.constant dense<0.000000e+00> : vector<8xf32>
    %367 = vector.multi_reduction <add>, %366, %cst_146 [1] : vector<8x32xf32> to vector<8xf32>
    %368 = vector.shape_cast %367 : vector<8xf32> to vector<8x1xf32>
    %cst_147 = arith.constant 3.200000e+01 : f32
    %369 = vector.broadcast %cst_147 : f32 to vector<8x1xf32>
    %370 = arith.divf %368, %369 : vector<8x1xf32>
    %371 = vector.broadcast %370 : vector<8x1xf32> to vector<8x32xf32>
    %372 = arith.subf %366, %371 : vector<8x32xf32>
    %373 = arith.mulf %372, %372 : vector<8x32xf32>
    %cst_148 = arith.constant dense<0.000000e+00> : vector<8xf32>
    %374 = vector.multi_reduction <add>, %373, %cst_148 [1] : vector<8x32xf32> to vector<8xf32>
    %375 = vector.shape_cast %374 : vector<8xf32> to vector<8x1xf32>
    %cst_149 = arith.constant 3.200000e+01 : f32
    %376 = vector.broadcast %cst_149 : f32 to vector<8x1xf32>
    %377 = arith.divf %375, %376 : vector<8x1xf32>
    %cst_150 = arith.constant 9.99999974E-6 : f32
    %378 = vector.broadcast %cst_150 : f32 to vector<8x1xf32>
    %379 = arith.addf %377, %378 : vector<8x1xf32>
    %380 = math.rsqrt %379 : vector<8x1xf32>
    %381 = vector.broadcast %380 : vector<8x1xf32> to vector<8x32xf32>
    %382 = arith.mulf %372, %381 : vector<8x32xf32>
    %383 = vector.broadcast %3 : vector<1x32xf32> to vector<8x32xf32>
    %384 = arith.mulf %382, %383 : vector<8x32xf32>
    %385 = vector.broadcast %4 : vector<1x32xf32> to vector<8x32xf32>
    %386 = arith.addf %384, %385 : vector<8x32xf32>
    %cst_151 = arith.constant dense<0.000000e+00> : vector<8x128xf32>
    %387 = tpu.matmul %386, %7, %cst_151 {dimension_numbers = #tpu.dot_dimension_numbers<[1], [0], [0], [1], [0, 0, 1, 1], [], []>} : vector<8x32xf32>, vector<32x128xf32>, vector<8x128xf32> -> vector<8x128xf32>
    %388 = vector.broadcast %5 : vector<1x128xf32> to vector<8x128xf32>
    %389 = arith.addf %387, %388 : vector<8x128xf32>
    %c0_152 = arith.constant 0 : index
    %c0_153 = arith.constant 0 : index
    %c0_154 = arith.constant 0 : index
    %390 = vector.load %arg10[%c0_152, %c0_153, %c0_154] : memref<1x8x128xf32, #tpu.memory_space<vmem>>, vector<1x8x128xf32>
    %391 = vector.shape_cast %390 : vector<1x8x128xf32> to vector<8x128xf32>
    %392 = vector.shape_cast %389 : vector<8x128xf32> to vector<1x8x128xf32>
    tpu.vector_store %arg10[%c0_152, %c0_153, %c0_154], %392 {strides = array<i32>} : memref<1x8x128xf32, #tpu.memory_space<vmem>>, vector<1x8x128xf32>,
    return
  }
  func.func @transform_0(%arg0: i32) -> (i32, i32, i32) {
    %c0_i32 = arith.constant 0 : i32
    %c0_i32_0 = arith.constant 0 : i32
    %c0_i32_1 = arith.constant 0 : i32
    return %arg0, %c0_i32, %c0_i32_0 : i32, i32, i32
  }
  func.func @transform_1(%arg0: i32) -> (i32, i32, i32) {
    %c0_i32 = arith.constant 0 : i32
    %c0_i32_0 = arith.constant 0 : i32
    %c0_i32_1 = arith.constant 0 : i32
    return %arg0, %c0_i32, %c0_i32_0 : i32, i32, i32
  }
  func.func @transform_2(%arg0: i32) -> (i32, i32) {
    %c0_i32 = arith.constant 0 : i32
    %c0_i32_0 = arith.constant 0 : i32
    %c0_i32_1 = arith.constant 0 : i32
    return %c0_i32, %c0_i32_0 : i32, i32
  }
  func.func @transform_3(%arg0: i32) -> (i32, i32) {
    %c0_i32 = arith.constant 0 : i32
    %c0_i32_0 = arith.constant 0 : i32
    %c0_i32_1 = arith.constant 0 : i32
    return %c0_i32, %c0_i32_0 : i32, i32
  }
  func.func @transform_4(%arg0: i32) -> (i32, i32, i32) {
    %c0_i32 = arith.constant 0 : i32
    %c0_i32_0 = arith.constant 0 : i32
    %c0_i32_1 = arith.constant 0 : i32
    %c0_i32_2 = arith.constant 0 : i32
    return %c0_i32, %c0_i32_0, %c0_i32_1 : i32, i32, i32
  }
  func.func @transform_5(%arg0: i32) -> (i32, i32, i32) {
    %c0_i32 = arith.constant 0 : i32
    %c0_i32_0 = arith.constant 0 : i32
    %c0_i32_1 = arith.constant 0 : i32
    %c0_i32_2 = arith.constant 0 : i32
    return %c0_i32, %c0_i32_0, %c0_i32_1 : i32, i32, i32
  }
  func.func @transform_6(%arg0: i32) -> (i32, i32, i32) {
    %c0_i32 = arith.constant 0 : i32
    %c0_i32_0 = arith.constant 0 : i32
    %c0_i32_1 = arith.constant 0 : i32
    %c0_i32_2 = arith.constant 0 : i32
    return %c0_i32, %c0_i32_0, %c0_i32_1 : i32, i32, i32
  }
  func.func @transform_7(%arg0: i32) -> (i32, i32, i32) {
    %c0_i32 = arith.constant 0 : i32
    %c0_i32_0 = arith.constant 0 : i32
    %c0_i32_1 = arith.constant 0 : i32
    %c0_i32_2 = arith.constant 0 : i32
    return %c0_i32, %c0_i32_0, %c0_i32_1 : i32, i32, i32
  }
  func.func @transform_8(%arg0: i32) -> (i32, i32) {
    %c0_i32 = arith.constant 0 : i32
    %c0_i32_0 = arith.constant 0 : i32
    %c0_i32_1 = arith.constant 0 : i32
    return %c0_i32, %c0_i32_0 : i32, i32
  }
  func.func @transform_9(%arg0: i32) -> (i32, i32, i32) {
    %c0_i32 = arith.constant 0 : i32
    %c0_i32_0 = arith.constant 0 : i32
    %c0_i32_1 = arith.constant 0 : i32
    return %arg0, %c0_i32, %c0_i32_0 : i32, i32, i32
  }
}

</mosaic_0001>

<llo_original>
// kernel: tpu_custom_call.1
$region0: #{tpu_custom_call.1}
  #allocation0 [shape = 'u32[]', space=smem, size = 0x4, offset = 0x4, fixed_abs, tag = 'smem constant byte address 0x4 - core index']
  #allocation1 [shape = 'u32[72,128]{1,0:T(1,128)}', space=vmem, size = 0x9000, scoped, tag = 'internal scratch']
  %s0 = inlined_call_operand.vmem [shape: f32[2,17,64], index: 0, kind: input, shape index: {}]
  %s1 = inlined_call_operand.vmem [shape: f32[2,1,32], index: 1, kind: input, shape index: {}]
  %s2 = inlined_call_operand.vmem [shape: f32[40,128], index: 2, kind: input, shape index: {}]
  %s3 = inlined_call_operand.vmem [shape: f32[64,32], index: 3, kind: input, shape index: {}]
  %s4 = inlined_call_operand.vmem [shape: f32[2,32,96], index: 4, kind: input, shape index: {}]
  %s5 = inlined_call_operand.vmem [shape: f32[2,32,32], index: 5, kind: input, shape index: {}]
  %s6 = inlined_call_operand.vmem [shape: f32[2,32,64], index: 6, kind: input, shape index: {}]
  %s7 = inlined_call_operand.vmem [shape: f32[2,64,32], index: 7, kind: input, shape index: {}]
  %s8 = inlined_call_operand.vmem [shape: f32[32,128], index: 8, kind: input, shape index: {}]
  %s9 = inlined_call_operand.hbm [shape: f32[2,8,128], index: 9, kind: output, shape index: {}]
  %s10 = sld [smem:[#allocation0]]
  $region69: #{tpu_custom_call.1} parent=0
    _
  %s12 = ssub.s32 1, %s10
  %s13 = scalar_select 0, %s12, %s10
  $region1: #{tpu_custom_call.1} parent=0
    #allocation2 [shape = 'u8[8192]{0}', space=vmem, size = 0x2000, scoped, tag = 'output window, operand 0']
    #allocation3 [shape = 's32[2]{0}', space=sflag, size = 0x8, scoped, tag = 'scoped memory for tpu_custom_call.1']
    %14 = vsyncpa [#allocation3], 0
    %s15 = scalar_lea.sflag [#allocation3], 1
    %16 = vsyncpa %s15, 0
    loop: start=0, step=1, limit=4
    $region2: #{tpu_custom_call.1} parent=1 // loop_pre_header
      _
    $region3: #{tpu_custom_call.1} parent=1 // loop_header
      %s18 = sphi 0, %s22
      %p19 = scmp.ge.s32.totalorder %s18, 4
      %s28 = sphi 0, %s30
      %s31 = sphi 0, %s28
      %s32 = sphi 0, %s31
      %s48 = sphi 0, %s32
      %s54 = sphi 0, %s56
      %s57 = sphi 0, %s54
      %s58 = sphi 0, %s57
      %s74 = sphi 0, %s58
      %s78 = sphi 0, %s78
      %s80 = sphi 0, %s78
      %s81 = sphi 0, %s80
      %s95 = sphi 0, %s81
      %s99 = sphi 0, %s99
      %s101 = sphi 0, %s99
      %s102 = sphi 0, %s101
      %s116 = sphi 0, %s102
      %s120 = sphi 0, %s120
      %s122 = sphi 0, %s120
      %s123 = sphi 0, %s122
      %s137 = sphi 0, %s123
      %s141 = sphi 0, %s141
      %s143 = sphi 0, %s141
      %s144 = sphi 0, %s143
      %s158 = sphi 0, %s144
      %s162 = sphi 0, %s162
      %s164 = sphi 0, %s162
      %s165 = sphi 0, %s164
      %s179 = sphi 0, %s165
      %s183 = sphi 0, %s183
      %s185 = sphi 0, %s183
      %s186 = sphi 0, %s185
      %s200 = sphi 0, %s186
      %s204 = sphi 0, %s204
      %s206 = sphi 0, %s204
      %s207 = sphi 0, %s206
      %s221 = sphi 0, %s207
      %s227 = sphi 0, %s229
      %s230 = sphi 0, %s227
      %s231 = sphi 0, %s230
      %s247 = sphi 0, %s231
    $region4: #{tpu_custom_call.1} parent=1 // loop_header_branch
      %21 = sbr.rel (%p19) target = $region8
    $region5: #{tpu_custom_call.1} parent=1 // loop_body
      %s23 = ssub.s32 %s18, 1
      %s24 = ssub.s32 %s18, 2
      %s25 = sadd.s32 %s18, 1
      %s26 = ssub.s32 %s18, %s25
      %p27 = scmp.eq.s32.totalorder %s26, 0
      %s29 = sadd.s32 %s28, 1
      %s30 = scalar_select %p27, %s28, %s29
      %p33 = pneg %p27
      %p34 = scmp.eq.s32.totalorder %s18, 1
      %p35 = por %p33, %p34
      %p36 = scmp.ne.s32.totalorder %s28, %s31
      %p37 = scmp.eq.s32.totalorder %s18, 0
      %p38 = por %p36, %p37
      %p39 = scmp.ne.s32.totalorder %s28, %s31
      %p40 = scmp.eq.s32.totalorder %s23, 1
      %p41 = por %p39, %p40
      %p42 = scmp.ne.s32.totalorder %s31, %s32
      %p43 = scmp.eq.s32.totalorder %s23, 0
      %p44 = por %p42, %p43
      %p45 = scmp.ne.s32.totalorder %s31, %s32
      %p46 = scmp.eq.s32.totalorder %s24, 1
      %p47 = por %p45, %p46
      %p49 = scmp.ne.s32.totalorder %s32, %s48
      %p50 = scmp.eq.s32.totalorder %s24, 0
      %p51 = por %p49, %p50
      %s52 = ssub.s32 %s18, %s25
      %p53 = scmp.eq.s32.totalorder %s52, 0
      %s55 = sadd.s32 %s54, 1
      %s56 = scalar_select %p53, %s54, %s55
      %p59 = pneg %p53
      %p60 = scmp.eq.s32.totalorder %s18, 1
      %p61 = por %p59, %p60
      %p62 = scmp.ne.s32.totalorder %s54, %s57
      %p63 = scmp.eq.s32.totalorder %s18, 0
      %p64 = por %p62, %p63
      %p65 = scmp.ne.s32.totalorder %s54, %s57
      %p66 = scmp.eq.s32.totalorder %s23, 1
      %p67 = por %p65, %p66
      %p68 = scmp.ne.s32.totalorder %s57, %s58
      %p69 = scmp.eq.s32.totalorder %s23, 0
      %p70 = por %p68, %p69
      %p71 = scmp.ne.s32.totalorder %s57, %s58
      %p72 = scmp.eq.s32.totalorder %s24, 1
      %p73 = por %p71, %p72
      %p75 = scmp.ne.s32.totalorder %s58, %s74
      %p76 = scmp.eq.s32.totalorder %s24, 0
      %p77 = por %p75, %p76
      %s79 = sadd.s32 %s78, 1
      %p82 = scmp.eq.s32.totalorder %s18, 1
      %p83 = scmp.ne.s32.totalorder %s78, %s80
      %p84 = scmp.eq.s32.totalorder %s18, 0
      %p85 = por %p83, %p84
      %p86 = scmp.ne.s32.totalorder %s78, %s80
      %p87 = scmp.eq.s32.totalorder %s23, 1
      %p88 = por %p86, %p87
      %p89 = scmp.ne.s32.totalorder %s80, %s81
      %p90 = scmp.eq.s32.totalorder %s23, 0
      %p91 = por %p89, %p90
      %p92 = scmp.ne.s32.totalorder %s80, %s81
      %p93 = scmp.eq.s32.totalorder %s24, 1
      %p94 = por %p92, %p93
      %p96 = scmp.ne.s32.totalorder %s81, %s95
      %p97 = scmp.eq.s32.totalorder %s24, 0
      %p98 = por %p96, %p97
      %s100 = sadd.s32 %s99, 1
      %p103 = scmp.eq.s32.totalorder %s18, 1
      %p104 = scmp.ne.s32.totalorder %s99, %s101
      %p105 = scmp.eq.s32.totalorder %s18, 0
      %p106 = por %p104, %p105
      %p107 = scmp.ne.s32.totalorder %s99, %s101
      %p108 = scmp.eq.s32.totalorder %s23, 1
      %p109 = por %p107, %p108
      %p110 = scmp.ne.s32.totalorder %s101, %s102
      %p111 = scmp.eq.s32.totalorder %s23, 0
      %p112 = por %p110, %p111
      %p113 = scmp.ne.s32.totalorder %s101, %s102
      %p114 = scmp.eq.s32.totalorder %s24, 1
      %p115 = por %p113, %p114
      %p117 = scmp.ne.s32.totalorder %s102, %s116
      %p118 = scmp.eq.s32.totalorder %s24, 0
      %p119 = por %p117, %p118
      %s121 = sadd.s32 %s120, 1
      %p124 = scmp.eq.s32.totalorder %s18, 1
      %p125 = scmp.ne.s32.totalorder %s120, %s122
      %p126 = scmp.eq.s32.totalorder %s18, 0
      %p127 = por %p125, %p126
      %p128 = scmp.ne.s32.totalorder %s120, %s122
      %p129 = scmp.eq.s32.totalorder %s23, 1
      %p130 = por %p128, %p129
      %p131 = scmp.ne.s32.totalorder %s122, %s123
      %p132 = scmp.eq.s32.totalorder %s23, 0
      %p133 = por %p131, %p132
      %p134 = scmp.ne.s32.totalorder %s122, %s123
      %p135 = scmp.eq.s32.totalorder %s24, 1
      %p136 = por %p134, %p135
      %p138 = scmp.ne.s32.totalorder %s123, %s137
      %p139 = scmp.eq.s32.totalorder %s24, 0
      %p140 = por %p138, %p139
      %s142 = sadd.s32 %s141, 1
      %p145 = scmp.eq.s32.totalorder %s18, 1
      %p146 = scmp.ne.s32.totalorder %s141, %s143
      %p147 = scmp.eq.s32.totalorder %s18, 0
      %p148 = por %p146, %p147
      %p149 = scmp.ne.s32.totalorder %s141, %s143
      %p150 = scmp.eq.s32.totalorder %s23, 1
      %p151 = por %p149, %p150
      %p152 = scmp.ne.s32.totalorder %s143, %s144
      %p153 = scmp.eq.s32.totalorder %s23, 0
      %p154 = por %p152, %p153
      %p155 = scmp.ne.s32.totalorder %s143, %s144
      %p156 = scmp.eq.s32.totalorder %s24, 1
      %p157 = por %p155, %p156
      %p159 = scmp.ne.s32.totalorder %s144, %s158
      %p160 = scmp.eq.s32.totalorder %s24, 0
      %p161 = por %p159, %p160
      %s163 = sadd.s32 %s162, 1
      %p166 = scmp.eq.s32.totalorder %s18, 1
      %p167 = scmp.ne.s32.totalorder %s162, %s164
      %p168 = scmp.eq.s32.totalorder %s18, 0
      %p169 = por %p167, %p168
      %p170 = scmp.ne.s32.totalorder %s162, %s164
      %p171 = scmp.eq.s32.totalorder %s23, 1
      %p172 = por %p170, %p171
      %p173 = scmp.ne.s32.totalorder %s164, %s165
      %p174 = scmp.eq.s32.totalorder %s23, 0
      %p175 = por %p173, %p174
      %p176 = scmp.ne.s32.totalorder %s164, %s165
      %p177 = scmp.eq.s32.totalorder %s24, 1
      %p178 = por %p176, %p177
      %p180 = scmp.ne.s32.totalorder %s165, %s179
      %p181 = scmp.eq.s32.totalorder %s24, 0
      %p182 = por %p180, %p181
      %s184 = sadd.s32 %s183, 1
      %p187 = scmp.eq.s32.totalorder %s18, 1
      %p188 = scmp.ne.s32.totalorder %s183, %s185
      %p189 = scmp.eq.s32.totalorder %s18, 0
      %p190 = por %p188, %p189
      %p191 = scmp.ne.s32.totalorder %s183, %s185
      %p192 = scmp.eq.s32.totalorder %s23, 1
      %p193 = por %p191, %p192
      %p194 = scmp.ne.s32.totalorder %s185, %s186
      %p195 = scmp.eq.s32.totalorder %s23, 0
      %p196 = por %p194, %p195
      %p197 = scmp.ne.s32.totalorder %s185, %s186
      %p198 = scmp.eq.s32.totalorder %s24, 1
      %p199 = por %p197, %p198
      %p201 = scmp.ne.s32.totalorder %s186, %s200
      %p202 = scmp.eq.s32.totalorder %s24, 0
      %p203 = por %p201, %p202
      %s205 = sadd.s32 %s204, 1
      %p208 = scmp.eq.s32.totalorder %s18, 1
      %p209 = scmp.ne.s32.totalorder %s204, %s206
      %p210 = scmp.eq.s32.totalorder %s18, 0
      %p211 = por %p209, %p210
      %p212 = scmp.ne.s32.totalorder %s204, %s206
      %p213 = scmp.eq.s32.totalorder %s23, 1
      %p214 = por %p212, %p213
      %p215 = scmp.ne.s32.totalorder %s206, %s207
      %p216 = scmp.eq.s32.totalorder %s23, 0
      %p217 = por %p215, %p216
      %p218 = scmp.ne.s32.totalorder %s206, %s207
      %p219 = scmp.eq.s32.totalorder %s24, 1
      %p220 = por %p218, %p219
      %p222 = scmp.ne.s32.totalorder %s207, %s221
      %p223 = scmp.eq.s32.totalorder %s24, 0
      %p224 = por %p222, %p223
      %s225 = ssub.s32 %s18, %s25
      %p226 = scmp.eq.s32.totalorder %s225, 0
      %s228 = sadd.s32 %s227, 1
      %s229 = scalar_select %p226, %s227, %s228
      %p232 = pneg %p226
      %p233 = scmp.eq.s32.totalorder %s18, 1
      %p234 = por %p232, %p233
      %p235 = scmp.ne.s32.totalorder %s227, %s230
      %p236 = scmp.eq.s32.totalorder %s18, 0
      %p237 = por %p235, %p236
      %p238 = scmp.ne.s32.totalorder %s227, %s230
      %p239 = scmp.eq.s32.totalorder %s23, 1
      %p240 = por %p238, %p239
      %p241 = scmp.ne.s32.totalorder %s230, %s231
      %p242 = scmp.eq.s32.totalorder %s23, 0
      %p243 = por %p241, %p242
      %p244 = scmp.ne.s32.totalorder %s230, %s231
      %p245 = scmp.eq.s32.totalorder %s24, 1
      %p246 = por %p244, %p245
      %p248 = scmp.ne.s32.totalorder %s231, %s247
      %p249 = scmp.eq.s32.totalorder %s24, 0
      %p250 = por %p248, %p249
      %p251 = scmp.le.s32.totalorder 1, %s18
      %p252 = scmp.lt.s32.totalorder %s18, 3
      %p253 = pnand %p251, %p252
      %p254 = pneg %p253
      // Predicated region
      $region9: #{tpu_custom_call.1} parent=5 // pred_check
        _
      $region10: #{tpu_custom_call.1} parent=5 // pred_check_branch
        %256 = sbr.rel (%p253) target = $region12
      $region11: #{tpu_custom_call.1} parent=5 // pred_region
        %s257 = ssub.s32 %s18, 1
        // Predicated region
        $region13: #{tpu_custom_call.1} parent=11 // pred_check
          %p258 = pneg %p91
        $region14: #{tpu_custom_call.1} parent=11 // pred_check_branch
          %260 = sbr.rel (%p258) target = $region16
        $region15: #{tpu_custom_call.1} parent=11 // pred_region
          _
        $region16: #{tpu_custom_call.1} parent=11 // pred_fallthru
          _
        // Predicated region
        $region17: #{tpu_custom_call.1} parent=11 // pred_check
          %p261 = pneg %p112
        $region18: #{tpu_custom_call.1} parent=11 // pred_check_branch
          %263 = sbr.rel (%p261) target = $region20
        $region19: #{tpu_custom_call.1} parent=11 // pred_region
          _
        $region20: #{tpu_custom_call.1} parent=11 // pred_fallthru
          _
        // Predicated region
        $region21: #{tpu_custom_call.1} parent=11 // pred_check
          %p264 = pneg %p133
        $region22: #{tpu_custom_call.1} parent=11 // pred_check_branch
          %266 = sbr.rel (%p264) target = $region24
        $region23: #{tpu_custom_call.1} parent=11 // pred_region
          _
        $region24: #{tpu_custom_call.1} parent=11 // pred_fallthru
          _
        // Predicated region
        $region25: #{tpu_custom_call.1} parent=11 // pred_check
          %p267 = pneg %p154
        $region26: #{tpu_custom_call.1} parent=11 // pred_check_branch
          %269 = sbr.rel (%p267) target = $region28
        $region27: #{tpu_custom_call.1} parent=11 // pred_region
          _
        $region28: #{tpu_custom_call.1} parent=11 // pred_fallthru
          _
        // Predicated region
        $region29: #{tpu_custom_call.1} parent=11 // pred_check
          %p270 = pneg %p175
        $region30: #{tpu_custom_call.1} parent=11 // pred_check_branch
          %272 = sbr.rel (%p270) target = $region32
        $region31: #{tpu_custom_call.1} parent=11 // pred_region
          _
        $region32: #{tpu_custom_call.1} parent=11 // pred_fallthru
          _
        // Predicated region
        $region33: #{tpu_custom_call.1} parent=11 // pred_check
          %p273 = pneg %p196
        $region34: #{tpu_custom_call.1} parent=11 // pred_check_branch
          %275 = sbr.rel (%p273) target = $region36
        $region35: #{tpu_custom_call.1} parent=11 // pred_region
          _
        $region36: #{tpu_custom_call.1} parent=11 // pred_fallthru
          _
        // Predicated region
        $region37: #{tpu_custom_call.1} parent=11 // pred_check
          %p276 = pneg %p217
        $region38: #{tpu_custom_call.1} parent=11 // pred_check_branch
          %278 = sbr.rel (%p276) target = $region40
        $region39: #{tpu_custom_call.1} parent=11 // pred_region
          _
        $region40: #{tpu_custom_call.1} parent=11 // pred_fallthru
          _
      $region12: #{tpu_custom_call.1} parent=5 // pred_fallthru
        _
      %p279 = scmp.lt.s32.totalorder %s18, 2
      // Predicated region
      $region41: #{tpu_custom_call.1} parent=5 // pred_check
        %p280 = pneg %p279
      $region42: #{tpu_custom_call.1} parent=5 // pred_check_branch
        %282 = sbr.rel (%p280) target = $region44
      $region43: #{tpu_custom_call.1} parent=5 // pred_region
        // Predicated region
        $region45: #{tpu_custom_call.1} parent=43 // pred_check
          %p283 = pneg %p38
        $region46: #{tpu_custom_call.1} parent=43 // pred_check_branch
          %285 = sbr.rel (%p283) target = $region48
        $region47: #{tpu_custom_call.1} parent=43 // pred_region
          %p286 = scmp.lt.s32.totalorder %s18, 1
          %s287 = scalar_select %p286, %s18, 1
          %s288 = smul.addr %s287, 3
          %s289 = smul.addr %s288, 8
          %s290 = scalar_lea.vmem %s0, %s289
        $region48: #{tpu_custom_call.1} parent=43 // pred_fallthru
          _
        // Predicated region
        $region49: #{tpu_custom_call.1} parent=43 // pred_check
          %p291 = pneg %p64
        $region50: #{tpu_custom_call.1} parent=43 // pred_check_branch
          %293 = sbr.rel (%p291) target = $region52
        $region51: #{tpu_custom_call.1} parent=43 // pred_region
          %p294 = scmp.lt.s32.totalorder %s18, 1
          %s295 = scalar_select %p294, %s18, 1
          %s296 = scalar_lea.vmem %s1, %s295
        $region52: #{tpu_custom_call.1} parent=43 // pred_fallthru
          _
      $region44: #{tpu_custom_call.1} parent=5 // pred_fallthru
        _
      %p297 = scmp.le.s32.totalorder 1, %s18
      %p298 = scmp.lt.s32.totalorder %s18, 3
      %p299 = pnand %p297, %p298
      %p300 = pneg %p299
      // Predicated region
      $region53: #{tpu_custom_call.1} parent=5 // pred_check
        _
      $region54: #{tpu_custom_call.1} parent=5 // pred_check_branch
        %302 = sbr.rel (%p299) target = $region56
      $region55: #{tpu_custom_call.1} parent=5 // pred_region
        %s303 = ssub.s32 %s18, 1
        %p304 = scmp.lt.s32.totalorder %s23, 1
        %s305 = scalar_select %p304, %s23, 1
        %s306 = smul.addr %s305, 3
        %s307 = smul.addr %s306, 8
        %s308 = scalar_lea.vmem %s0, %s307
        %p309 = pneg %p44
        %p310 = pneg %p41
        %p311 = scmp.lt.s32.totalorder %s23, 1
        %s312 = scalar_select %p311, %s23, 1
        %s313 = scalar_lea.vmem %s1, %s312
        %p314 = pneg %p70
        %p315 = pneg %p67
        %p316 = pneg %p91
        %p317 = pneg %p88
        %p318 = pneg %p112
        %p319 = pneg %p109
        %p320 = pneg %p133
        %p321 = pneg %p130
        %p322 = pneg %p154
        %p323 = pneg %p151
        %p324 = pneg %p175
        %p325 = pneg %p172
        %p326 = pneg %p196
        %p327 = pneg %p193
        %p328 = pneg %p217
        %p329 = pneg %p214
        %p330 = pneg %p243
        %p331 = pneg %p240
        %s332 = sand.u32 %s230, 1
        %s333 = scalar_lea.sflag [#allocation3], %s332
        %s334 = sand.u32 %s230, 1
        %s335 = smul.addr %s334, 8
        %s336 = scalar_lea.vmem [#allocation2], %s335
        %p337 = scmp.lt.s32.totalorder %s23, 1
        %s338 = scalar_select %p337, %s23, 1
        %s339 = smul.addr %s338, 3
        %s340 = smul.addr %s339, 8
        %s341 = scalar_lea.vmem %s0, %s340
        %p342 = scmp.lt.s32.totalorder %s23, 1
        %s343 = scalar_select %p342, %s23, 1
        %s344 = scalar_lea.vmem %s1, %s343
        %v345 = vld [vmem:[%s2] sm:$0xff]
        %v346 = vld [vmem:[%s2 + $0x8] sm:$0xff]
        %v347 = vld [vmem:[%s2 + $0x10] sm:$0x1]
        %v348 = vld [vmem:[%s2 + $0x11] sm:$0x1]
        %v349 = vld [vmem:[%s2 + $0x12] sm:$0x1]
        %v350 = vld [vmem:[%s2 + $0x13] sm:$0x1]
        %v351 = vld [vmem:[%s2 + $0x14] sm:$0x1]
        %v352 = vld [vmem:[%s2 + $0x15] sm:$0x1]
        %v353 = vld [vmem:[%s3] sm:$0xff]
        %v354 = vld [vmem:[%s3 + $0x8] sm:$0xff]
        %v355 = vld [vmem:[%s3 + $0x10] sm:$0xff]
        %v356 = vld [vmem:[%s3 + $0x18] sm:$0xff]
        %v357 = vld [vmem:[%s3 + $0x20] sm:$0xff]
        %v358 = vld [vmem:[%s3 + $0x28] sm:$0xff]
        %v359 = vld [vmem:[%s3 + $0x30] sm:$0xff]
        %v360 = vld [vmem:[%s3 + $0x38] sm:$0xff]
        %v361 = vld [vmem:[%s8] sm:$0xff]
        %v362 = vld [vmem:[%s8 + $0x8] sm:$0xff]
        %v363 = vld [vmem:[%s8 + $0x10] sm:$0xff]
        %v364 = vld [vmem:[%s8 + $0x18] sm:$0xff]
        %v365 = vld [vmem:[%s341] sm:$0xff]
        %v366 = vld [vmem:[%s341 + $0x8] sm:$0xff]
        %v367 = vld [vmem:[%s341 + $0x10] sm:$0x1]
        %vm368 = vcmask 523264
        %v370 = vsel %vm368, %v365, 0
        %v373 = vsel %vm368, %v366, 0
        %v376 = vsel %vm368, %v367, 0
        %378 = vmatpush.msra.mxu0 0.0
        %379 = vmatpush.msra.mxu0 0.0
        %380 = vmatpush.msra.mxu0 0.0
        %381 = vmatpush.msra.mxu0 0.0
        %382 = vmatpush.msra.mxu0 0.0
        %383 = vmatpush.msra.mxu0 0.0
        %384 = vmatpush.msra.mxu0 0.0
        %385 = vmatpush.msra.mxu0 0.0
        %386 = vmatpush.msra.mxu0 %v360
        %387 = vmatpush.msra.mxu0 %v359
        %388 = vmatpush.msra.mxu0 %v358
        %389 = vmatpush.msra.mxu0 %v357
        %390 = vmatpush.msra.mxu0 %v356
        %391 = vmatpush.msra.mxu0 %v355
        %392 = vmatpush.msra.mxu0 %v354
        %393 = vmatpush.msra.mxu0 %v353
        %394 = vmatmul.f32.gmra.mxu0 %v370
        %v395 = vpop.f32.mrf.mxu0
        %v396 = vadd.f32 %v345, %v395
        %397 = vmatmul.f32.gmra.mxu0 %v373
        %v398 = vpop.f32.mrf.mxu0
        %v399 = vadd.f32 %v346, %v398
        %400 = vmatmul.f32.gmra.mxu0 %v376
        %v401 = vpop.f32.mrf.mxu0
        %v402 = vadd.f32 %v347, %v401
        %403 = vdwg.mxu0
        %v404 = vld [vmem:[%s344] sm:$0x1]
        %v406 = vperm.slane %v404, 0
        %v408 = vadd.f32 %v396, %v406
        %v409 = vadd.f32 %v399, %v406
        %v410 = vadd.f32 %v402, %v406
        %vm411 = vcmask 261120
        %v412 = vsel %vm411, %v408, 0.0
        %413 = vadd.xlane.f32.xlu0 %v412
        %v414 = vpop.xlane.xlu0 %413
        %v415 = vsel %vm411, %v409, 0.0
        %416 = vadd.xlane.f32.xlu0 %v415
        %v417 = vpop.xlane.xlu0 %416
        %vm418 = vcmask 253952
        %v419 = vsel %vm418, %v410, 0.0
        %420 = vadd.xlane.f32.xlu0 %v419
        %v421 = vpop.xlane.xlu0 %420
        %v422 = vrcp.pop 32.0
        %v423 = vmul.f32 32.0, %v422
        %v424 = vsub.f32 1.0, %v423
        %v425 = vmul.f32 %v422, %v424
        %v426 = vadd.f32 %v422, %v425
        %vm427 = vweird.f32 %v422
        %v428 = vsel %vm427, %v422, %v426
        %v429 = vmul.f32 %v414, %v428
        %v430 = vmul.f32 %v417, %v428
        %v431 = vmul.f32 %v421, %v428
        %v432 = vsub.f32 %v408, %v429
        %v433 = vsub.f32 %v409, %v430
        %v434 = vsub.f32 %v410, %v431
        %v435 = vmul.f32 %v432, %v432
        %v436 = vmul.f32 %v433, %v433
        %v437 = vmul.f32 %v434, %v434
        %v438 = vsel %vm411, %v435, 0.0
        %439 = vadd.xlane.f32.xlu0 %v438
        %v440 = vpop.xlane.xlu0 %439
        %v441 = vsel %vm411, %v436, 0.0
        %442 = vadd.xlane.f32.xlu0 %v441
        %v443 = vpop.xlane.xlu0 %442
        %v444 = vsel %vm418, %v437, 0.0
        %445 = vadd.xlane.f32.xlu0 %v444
        %v446 = vpop.xlane.xlu0 %445
        %v447 = vmul.f32 %v440, %v428
        %v448 = vmul.f32 %v443, %v428
        %v449 = vmul.f32 %v446, %v428
        %v450 = vadd.f32 %v447, 1e-05
        %v451 = vadd.f32 %v448, 1e-05
        %v452 = vadd.f32 %v449, 1e-05
        %v453 = vrsqrt.pop %v450
        %v454 = vmul.f32 %v453, %v450
        %v455 = vmul.f32 %v454, %v453
        %v456 = vmul.f32 0.5, %v455
        %v457 = vsub.f32 1.5, %v456
        %v458 = vmul.f32 %v453, %v457
        %vm459 = vweird.f32 %v450
        %vm460 = vweird.f32 %v453
        %vm461 = vmor %vm459, %vm460
        %v462 = vsel %vm461, %v453, %v458
        %v463 = vrsqrt.pop %v451
        %v464 = vmul.f32 %v463, %v451
        %v465 = vmul.f32 %v464, %v463
        %v466 = vmul.f32 0.5, %v465
        %v467 = vsub.f32 1.5, %v466
        %v468 = vmul.f32 %v463, %v467
        %vm469 = vweird.f32 %v451
        %vm470 = vweird.f32 %v463
        %vm471 = vmor %vm469, %vm470
        %v472 = vsel %vm471, %v463, %v468
        %v473 = vrsqrt.pop %v452
        %v474 = vmul.f32 %v473, %v452
        %v475 = vmul.f32 %v474, %v473
        %v476 = vmul.f32 0.5, %v475
        %v477 = vsub.f32 1.5, %v476
        %v478 = vmul.f32 %v473, %v477
        %vm479 = vweird.f32 %v452
        %vm480 = vweird.f32 %v473
        %vm481 = vmor %vm479, %vm480
        %v482 = vsel %vm481, %v473, %v478
        %v483 = vmul.f32 %v432, %v462
        %v484 = vmul.f32 %v433, %v472
        %v485 = vmul.f32 %v434, %v482
        %v486 = vperm.slane %v348, 0
        %v487 = vmul.f32 %v483, %v486
        %v488 = vmul.f32 %v484, %v486
        %v489 = vmul.f32 %v485, %v486
        %v490 = vperm.slane %v349, 0
        %v491 = vadd.f32 %v487, %v490
        %v492 = vadd.f32 %v488, %v490
        %v493 = vadd.f32 %v489, %v490
        %v494 = vld [vmem:[%s4] sm:$0xff]
        %v495 = vld [vmem:[%s4 + $0x8] sm:$0xff]
        %v496 = vld [vmem:[%s4 + $0x10] sm:$0xff]
        %v497 = vld [vmem:[%s4 + $0x18] sm:$0xff]
        %v498 = vld [vmem:[%s2 + $0x16] sm:$0x1]
        %v499 = vperm.slane %v498, 0
        %v501 = vsel %vm411, %v491, 0
        %v504 = vsel %vm411, %v492, 0
        %v507 = vsel %vm411, %v493, 0
        %509 = vmatpush.msra.mxu0 0.0
        %510 = vmatpush.msra.mxu0 0.0
        %511 = vmatpush.msra.mxu0 0.0
        %512 = vmatpush.msra.mxu0 0.0
        %513 = vmatpush.msra.mxu0 0.0
        %514 = vmatpush.msra.mxu0 0.0
        %515 = vmatpush.msra.mxu0 0.0
        %516 = vmatpush.msra.mxu0 0.0
        %517 = vmatpush.msra.mxu0 0.0
        %518 = vmatpush.msra.mxu0 0.0
        %519 = vmatpush.msra.mxu0 0.0
        %520 = vmatpush.msra.mxu0 0.0
        %521 = vmatpush.msra.mxu0 %v497
        %522 = vmatpush.msra.mxu0 %v496
        %523 = vmatpush.msra.mxu0 %v495
        %524 = vmatpush.msra.mxu0 %v494
        %525 = vmatmul.f32.gmra.mxu0 %v501
        %v526 = vpop.f32.mrf.mxu0
        %v527 = vadd.f32 %v499, %v526
        %528 = vmatmul.f32.gmra.mxu0 %v504
        %v529 = vpop.f32.mrf.mxu0
        %v530 = vadd.f32 %v499, %v529
        %531 = vmatmul.f32.gmra.mxu0 %v507
        %v532 = vpop.f32.mrf.mxu0
        %v533 = vadd.f32 %v499, %v532
        %534 = vdwg.mxu0
        %538 = vrot.lane.b32.xlu0 %v527, 96
        %v539 = vpop.permute.xlu0 %538
        %540 = vrot.lane.b32.xlu0 %v530, 96
        %v541 = vpop.permute.xlu0 %540
        %542 = vrot.lane.b32.xlu0 %v533, 96
        %v543 = vpop.permute.xlu0 %542
        %vm544 = vcmask 64512
        %v545 = vsel %vm544, %v527, 0
        %v547 = vsel %vm544, %v530, 0
        %v549 = vsel %vm544, %v533, 0
        %v551 = vsel %vm544, %v539, 0
        %v553 = vsel %vm544, %v541, 0
        %v555 = vsel %vm544, %v543, 0
        %557 = vmatpush.xpose.msra.mxu0 0.0
        %558 = vmatpush.xpose.msra.mxu0 0.0
        %559 = vmatpush.xpose.msra.mxu0 0.0
        %560 = vmatpush.xpose.msra.mxu0 0.0
        %561 = vmatpush.xpose.msra.mxu0 0.0
        %562 = vmatpush.xpose.msra.mxu0 0.0
        %563 = vmatpush.xpose.msra.mxu0 0.0
        %564 = vmatpush.xpose.msra.mxu0 0.0
        %565 = vmatpush.xpose.msra.mxu0 0.0
        %566 = vmatpush.xpose.msra.mxu0 0.0
        %567 = vmatpush.xpose.msra.mxu0 0.0
        %568 = vmatpush.xpose.msra.mxu0 0.0
        %569 = vmatpush.xpose.msra.mxu0 0.0
        %570 = vmatpush.xpose.msra.mxu0 %v555
        %571 = vmatpush.xpose.msra.mxu0 %v553
        %572 = vmatpush.xpose.msra.mxu0 %v551
        %573 = vmatmul.f32.gmra.mxu0 %v545
        %v574 = vpop.f32.mrf.mxu0
        %v575 = vadd.f32 0.0, %v574
        %576 = vmatmul.f32.gmra.mxu0 %v547
        %v577 = vpop.f32.mrf.mxu0
        %v578 = vadd.f32 0.0, %v577
        %579 = vmatmul.f32.gmra.mxu0 %v549
        %v580 = vpop.f32.mrf.mxu0
        %v581 = vadd.f32 0.0, %v580
        %582 = vdwg.mxu0
        %583 = vrot.lane.b32.xlu0 %v527, 120
        %v584 = vpop.permute.xlu0 %583
        %585 = vrot.lane.b32.xlu0 %v530, 120
        %v586 = vpop.permute.xlu0 %585
        %587 = vrot.lane.b32.xlu0 %v533, 120
        %v588 = vpop.permute.xlu0 %587
        %589 = vrot.lane.b32.xlu0 %v527, 88
        %v590 = vpop.permute.xlu0 %589
        %591 = vrot.lane.b32.xlu0 %v530, 88
        %v592 = vpop.permute.xlu0 %591
        %593 = vrot.lane.b32.xlu0 %v533, 88
        %v594 = vpop.permute.xlu0 %593
        %v595 = vsel %vm544, %v584, 0
        %v597 = vsel %vm544, %v586, 0
        %v599 = vsel %vm544, %v588, 0
        %v601 = vsel %vm544, %v590, 0
        %v603 = vsel %vm544, %v592, 0
        %v605 = vsel %vm544, %v594, 0
        %607 = vmatpush.xpose.msra.mxu0 0.0
        %608 = vmatpush.xpose.msra.mxu0 0.0
        %609 = vmatpush.xpose.msra.mxu0 0.0
        %610 = vmatpush.xpose.msra.mxu0 0.0
        %611 = vmatpush.xpose.msra.mxu0 0.0
        %612 = vmatpush.xpose.msra.mxu0 0.0
        %613 = vmatpush.xpose.msra.mxu0 0.0
        %614 = vmatpush.xpose.msra.mxu0 0.0
        %615 = vmatpush.xpose.msra.mxu0 0.0
        %616 = vmatpush.xpose.msra.mxu0 0.0
        %617 = vmatpush.xpose.msra.mxu0 0.0
        %618 = vmatpush.xpose.msra.mxu0 0.0
        %619 = vmatpush.xpose.msra.mxu0 0.0
        %620 = vmatpush.xpose.msra.mxu0 %v605
        %621 = vmatpush.xpose.msra.mxu0 %v603
        %622 = vmatpush.xpose.msra.mxu0 %v601
        %623 = vmatmul.f32.gmra.mxu0 %v595
        %v624 = vpop.f32.mrf.mxu0
        %v625 = vadd.f32 0.0, %v624
        %626 = vmatmul.f32.gmra.mxu0 %v597
        %v627 = vpop.f32.mrf.mxu0
        %v628 = vadd.f32 0.0, %v627
        %629 = vmatmul.f32.gmra.mxu0 %v599
        %v630 = vpop.f32.mrf.mxu0
        %v631 = vadd.f32 0.0, %v630
        %632 = vdwg.mxu0
        %633 = vrot.lane.b32.xlu0 %v527, 112
        %v634 = vpop.permute.xlu0 %633
        %635 = vrot.lane.b32.xlu0 %v530, 112
        %v636 = vpop.permute.xlu0 %635
        %637 = vrot.lane.b32.xlu0 %v533, 112
        %v638 = vpop.permute.xlu0 %637
        %639 = vrot.lane.b32.xlu0 %v527, 80
        %v640 = vpop.permute.xlu0 %639
        %641 = vrot.lane.b32.xlu0 %v530, 80
        %v642 = vpop.permute.xlu0 %641
        %643 = vrot.lane.b32.xlu0 %v533, 80
        %v644 = vpop.permute.xlu0 %643
        %v645 = vsel %vm544, %v634, 0
        %v647 = vsel %vm544, %v636, 0
        %v649 = vsel %vm544, %v638, 0
        %v651 = vsel %vm544, %v640, 0
        %v653 = vsel %vm544, %v642, 0
        %v655 = vsel %vm544, %v644, 0
        %657 = vmatpush.xpose.msra.mxu0 0.0
        %658 = vmatpush.xpose.msra.mxu0 0.0
        %659 = vmatpush.xpose.msra.mxu0 0.0
        %660 = vmatpush.xpose.msra.mxu0 0.0
        %661 = vmatpush.xpose.msra.mxu0 0.0
        %662 = vmatpush.xpose.msra.mxu0 0.0
        %663 = vmatpush.xpose.msra.mxu0 0.0
        %664 = vmatpush.xpose.msra.mxu0 0.0
        %665 = vmatpush.xpose.msra.mxu0 0.0
        %666 = vmatpush.xpose.msra.mxu0 0.0
        %667 = vmatpush.xpose.msra.mxu0 0.0
        %668 = vmatpush.xpose.msra.mxu0 0.0
        %669 = vmatpush.xpose.msra.mxu0 0.0
        %670 = vmatpush.xpose.msra.mxu0 %v655
        %671 = vmatpush.xpose.msra.mxu0 %v653
        %672 = vmatpush.xpose.msra.mxu0 %v651
        %673 = vmatmul.f32.gmra.mxu0 %v645
        %v674 = vpop.f32.mrf.mxu0
        %v675 = vadd.f32 0.0, %v674
        %676 = vmatmul.f32.gmra.mxu0 %v647
        %v677 = vpop.f32.mrf.mxu0
        %v678 = vadd.f32 0.0, %v677
        %679 = vmatmul.f32.gmra.mxu0 %v649
        %v680 = vpop.f32.mrf.mxu0
        %v681 = vadd.f32 0.0, %v680
        %682 = vdwg.mxu0
        %683 = vrot.lane.b32.xlu0 %v527, 104
        %v684 = vpop.permute.xlu0 %683
        %685 = vrot.lane.b32.xlu0 %v530, 104
        %v686 = vpop.permute.xlu0 %685
        %687 = vrot.lane.b32.xlu0 %v533, 104
        %v688 = vpop.permute.xlu0 %687
        %689 = vrot.lane.b32.xlu0 %v527, 72
        %v690 = vpop.permute.xlu0 %689
        %691 = vrot.lane.b32.xlu0 %v530, 72
        %v692 = vpop.permute.xlu0 %691
        %693 = vrot.lane.b32.xlu0 %v533, 72
        %v694 = vpop.permute.xlu0 %693
        %v695 = vsel %vm544, %v684, 0
        %v697 = vsel %vm544, %v686, 0
        %v699 = vsel %vm544, %v688, 0
        %v701 = vsel %vm544, %v690, 0
        %v703 = vsel %vm544, %v692, 0
        %v705 = vsel %vm544, %v694, 0
        %707 = vmatpush.xpose.msra.mxu0 0.0
        %708 = vmatpush.xpose.msra.mxu0 0.0
        %709 = vmatpush.xpose.msra.mxu0 0.0
        %710 = vmatpush.xpose.msra.mxu0 0.0
        %711 = vmatpush.xpose.msra.mxu0 0.0
        %712 = vmatpush.xpose.msra.mxu0 0.0
        %713 = vmatpush.xpose.msra.mxu0 0.0
        %714 = vmatpush.xpose.msra.mxu0 0.0
        %715 = vmatpush.xpose.msra.mxu0 0.0
        %716 = vmatpush.xpose.msra.mxu0 0.0
        %717 = vmatpush.xpose.msra.mxu0 0.0
        %718 = vmatpush.xpose.msra.mxu0 0.0
        %719 = vmatpush.xpose.msra.mxu0 0.0
        %720 = vmatpush.xpose.msra.mxu0 %v705
        %721 = vmatpush.xpose.msra.mxu0 %v703
        %722 = vmatpush.xpose.msra.mxu0 %v701
        %723 = vmatmul.f32.gmra.mxu0 %v695
        %v724 = vpop.f32.mrf.mxu0
        %v725 = vadd.f32 0.0, %v724
        %726 = vmatmul.f32.gmra.mxu0 %v697
        %v727 = vpop.f32.mrf.mxu0
        %v728 = vadd.f32 0.0, %v727
        %729 = vmatmul.f32.gmra.mxu0 %v699
        %v730 = vpop.f32.mrf.mxu0
        %v731 = vadd.f32 0.0, %v730
        %732 = vdwg.mxu0
        %vm733 = vcmask 138240
        %v734 = vsel %vm733, %v575, -inf
        %735 = vmax.xlane.f32.xlu0 %v734
        %v736 = vpop.xlane.xlu0 %735
        %v737 = vsel %vm733, %v578, -inf
        %738 = vmax.xlane.f32.xlu0 %v737
        %v739 = vpop.xlane.xlu0 %738
        %vm740 = vcmask 131072
        %v741 = vsel %vm740, %v581, -inf
        %742 = vmax.xlane.f32.xlu0 %v741
        %v743 = vpop.xlane.xlu0 %742
        %v744 = vsel %vm733, %v625, -inf
        %745 = vmax.xlane.f32.xlu0 %v744
        %v746 = vpop.xlane.xlu0 %745
        %v747 = vsel %vm733, %v628, -inf
        %748 = vmax.xlane.f32.xlu0 %v747
        %v749 = vpop.xlane.xlu0 %748
        %v750 = vsel %vm740, %v631, -inf
        %751 = vmax.xlane.f32.xlu0 %v750
        %v752 = vpop.xlane.xlu0 %751
        %v753 = vsel %vm733, %v675, -inf
        %754 = vmax.xlane.f32.xlu0 %v753
        %v755 = vpop.xlane.xlu0 %754
        %v756 = vsel %vm733, %v678, -inf
        %757 = vmax.xlane.f32.xlu0 %v756
        %v758 = vpop.xlane.xlu0 %757
        %v759 = vsel %vm740, %v681, -inf
        %760 = vmax.xlane.f32.xlu0 %v759
        %v761 = vpop.xlane.xlu0 %760
        %v762 = vsel %vm733, %v725, -inf
        %763 = vmax.xlane.f32.xlu0 %v762
        %v764 = vpop.xlane.xlu0 %763
        %v765 = vsel %vm733, %v728, -inf
        %766 = vmax.xlane.f32.xlu0 %v765
        %v767 = vpop.xlane.xlu0 %766
        %v768 = vsel %vm740, %v731, -inf
        %769 = vmax.xlane.f32.xlu0 %v768
        %v770 = vpop.xlane.xlu0 %769
        %v771 = vsub.f32 %v575, %v736
        %v772 = vsub.f32 %v578, %v739
        %v773 = vsub.f32 %v581, %v743
        %v774 = vsub.f32 %v625, %v746
        %v775 = vsub.f32 %v628, %v749
        %v776 = vsub.f32 %v631, %v752
        %v777 = vsub.f32 %v675, %v755
        %v778 = vsub.f32 %v678, %v758
        %v779 = vsub.f32 %v681, %v761
        %v780 = vsub.f32 %v725, %v764
        %v781 = vsub.f32 %v728, %v767
        %v782 = vsub.f32 %v731, %v770
        %v783 = vmul.f32 %v771, 1.442695
        %v784 = vpow.pop %v783
        %v785 = vmul.f32 %v772, 1.442695
        %v786 = vpow.pop %v785
        %v787 = vmul.f32 %v773, 1.442695
        %v788 = vpow.pop %v787
        %v789 = vmul.f32 %v774, 1.442695
        %v790 = vpow.pop %v789
        %v791 = vmul.f32 %v775, 1.442695
        %v792 = vpow.pop %v791
        %v793 = vmul.f32 %v776, 1.442695
        %v794 = vpow.pop %v793
        %v795 = vmul.f32 %v777, 1.442695
        %v796 = vpow.pop %v795
        %v797 = vmul.f32 %v778, 1.442695
        %v798 = vpow.pop %v797
        %v799 = vmul.f32 %v779, 1.442695
        %v800 = vpow.pop %v799
        %v801 = vmul.f32 %v780, 1.442695
        %v802 = vpow.pop %v801
        %v803 = vmul.f32 %v781, 1.442695
        %v804 = vpow.pop %v803
        %v805 = vmul.f32 %v782, 1.442695
        %v806 = vpow.pop %v805
        %v807 = vsel %vm733, %v784, 0.0
        %808 = vadd.xlane.f32.xlu0 %v807
        %v809 = vpop.xlane.xlu0 %808
        %v810 = vsel %vm733, %v786, 0.0
        %811 = vadd.xlane.f32.xlu0 %v810
        %v812 = vpop.xlane.xlu0 %811
        %v813 = vsel %vm740, %v788, 0.0
        %814 = vadd.xlane.f32.xlu0 %v813
        %v815 = vpop.xlane.xlu0 %814
        %v816 = vsel %vm733, %v790, 0.0
        %817 = vadd.xlane.f32.xlu0 %v816
        %v818 = vpop.xlane.xlu0 %817
        %v819 = vsel %vm733, %v792, 0.0
        %820 = vadd.xlane.f32.xlu0 %v819
        %v821 = vpop.xlane.xlu0 %820
        %v822 = vsel %vm740, %v794, 0.0
        %823 = vadd.xlane.f32.xlu0 %v822
        %v824 = vpop.xlane.xlu0 %823
        %v825 = vsel %vm733, %v796, 0.0
        %826 = vadd.xlane.f32.xlu0 %v825
        %v827 = vpop.xlane.xlu0 %826
        %v828 = vsel %vm733, %v798, 0.0
        %829 = vadd.xlane.f32.xlu0 %v828
        %v830 = vpop.xlane.xlu0 %829
        %v831 = vsel %vm740, %v800, 0.0
        %832 = vadd.xlane.f32.xlu0 %v831
        %v833 = vpop.xlane.xlu0 %832
        %v834 = vsel %vm733, %v802, 0.0
        %835 = vadd.xlane.f32.xlu0 %v834
        %v836 = vpop.xlane.xlu0 %835
        %v837 = vsel %vm733, %v804, 0.0
        %838 = vadd.xlane.f32.xlu0 %v837
        %v839 = vpop.xlane.xlu0 %838
        %v840 = vsel %vm740, %v806, 0.0
        %841 = vadd.xlane.f32.xlu0 %v840
        %v842 = vpop.xlane.xlu0 %841
        %v843 = vrcp.pop %v809
        %v844 = vrcp.pop %v812
        %v845 = vrcp.pop %v815
        %v846 = vrcp.pop %v818
        %v847 = vrcp.pop %v821
        %v848 = vrcp.pop %v824
        %v849 = vrcp.pop %v827
        %v850 = vrcp.pop %v830
        %v851 = vrcp.pop %v833
        %v852 = vrcp.pop %v836
        %v853 = vrcp.pop %v839
        %v854 = vrcp.pop %v842
        %v855 = vmul.f32 %v784, %v843
        %v856 = vmul.f32 %v786, %v844
        %v857 = vmul.f32 %v788, %v845
        %v858 = vmul.f32 %v790, %v846
        %v859 = vmul.f32 %v792, %v847
        %v860 = vmul.f32 %v794, %v848
        %v861 = vmul.f32 %v796, %v849
        %v862 = vmul.f32 %v798, %v850
        %v863 = vmul.f32 %v800, %v851
        %v864 = vmul.f32 %v802, %v852
        %v865 = vmul.f32 %v804, %v853
        %v866 = vmul.f32 %v806, %v854
        %v867 = vld [vmem:[%s5] sm:$0xff]
        %v868 = vld [vmem:[%s5 + $0x8] sm:$0xff]
        %v869 = vld [vmem:[%s5 + $0x10] sm:$0xff]
        %v870 = vld [vmem:[%s5 + $0x18] sm:$0xff]
        %871 = vrot.lane.b32.xlu0 %v527, 64
        %v872 = vpop.permute.xlu0 %871
        %873 = vrot.lane.b32.xlu0 %v530, 64
        %v874 = vpop.permute.xlu0 %873
        %875 = vrot.lane.b32.xlu0 %v533, 64
        %v876 = vpop.permute.xlu0 %875
        %v880 = vsel %vm733, %v855, 0
        %v883 = vsel %vm733, %v856, 0
        %v886 = vsel %vm733, %v857, 0
        %vm888 = vcmask 1040384
        %v889 = vsel %vm888, %v876, 0
        %891 = vmatpush.msra.mxu0 0.0
        %892 = vmatpush.msra.mxu0 0.0
        %893 = vmatpush.msra.mxu0 0.0
        %894 = vmatpush.msra.mxu0 0.0
        %895 = vmatpush.msra.mxu0 0.0
        %896 = vmatpush.msra.mxu0 0.0
        %897 = vmatpush.msra.mxu0 0.0
        %898 = vmatpush.msra.mxu0 0.0
        %899 = vmatpush.msra.mxu0 0.0
        %900 = vmatpush.msra.mxu0 0.0
        %901 = vmatpush.msra.mxu0 0.0
        %902 = vmatpush.msra.mxu0 0.0
        %903 = vmatpush.msra.mxu0 0.0
        %904 = vmatpush.msra.mxu0 %v889
        %905 = vmatpush.msra.mxu0 %v874
        %906 = vmatpush.msra.mxu0 %v872
        %907 = vmatmul.f32.gmra.mxu0 %v880
        %v908 = vpop.f32.mrf.mxu0
        %v909 = vadd.f32 0.0, %v908
        %910 = vmatmul.f32.gmra.mxu0 %v883
        %v911 = vpop.f32.mrf.mxu0
        %v912 = vadd.f32 0.0, %v911
        %913 = vmatmul.f32.gmra.mxu0 %v886
        %v914 = vpop.f32.mrf.mxu0
        %v915 = vadd.f32 0.0, %v914
        %916 = vdwg.mxu0
        %917 = vrot.lane.b32.xlu0 %v527, 56
        %v918 = vpop.permute.xlu0 %917
        %919 = vrot.lane.b32.xlu0 %v530, 56
        %v920 = vpop.permute.xlu0 %919
        %921 = vrot.lane.b32.xlu0 %v533, 56
        %v922 = vpop.permute.xlu0 %921
        %v926 = vsel %vm733, %v858, 0
        %v929 = vsel %vm733, %v859, 0
        %v932 = vsel %vm733, %v860, 0
        %v934 = vsel %vm888, %v922, 0
        %936 = vmatpush.msra.mxu0 0.0
        %937 = vmatpush.msra.mxu0 0.0
        %938 = vmatpush.msra.mxu0 0.0
        %939 = vmatpush.msra.mxu0 0.0
        %940 = vmatpush.msra.mxu0 0.0
        %941 = vmatpush.msra.mxu0 0.0
        %942 = vmatpush.msra.mxu0 0.0
        %943 = vmatpush.msra.mxu0 0.0
        %944 = vmatpush.msra.mxu0 0.0
        %945 = vmatpush.msra.mxu0 0.0
        %946 = vmatpush.msra.mxu0 0.0
        %947 = vmatpush.msra.mxu0 0.0
        %948 = vmatpush.msra.mxu0 0.0
        %949 = vmatpush.msra.mxu0 %v934
        %950 = vmatpush.msra.mxu0 %v920
        %951 = vmatpush.msra.mxu0 %v918
        %952 = vmatmul.f32.gmra.mxu0 %v926
        %v953 = vpop.f32.mrf.mxu0
        %v954 = vadd.f32 0.0, %v953
        %955 = vmatmul.f32.gmra.mxu0 %v929
        %v956 = vpop.f32.mrf.mxu0
        %v957 = vadd.f32 0.0, %v956
        %958 = vmatmul.f32.gmra.mxu0 %v932
        %v959 = vpop.f32.mrf.mxu0
        %v960 = vadd.f32 0.0, %v959
        %961 = vdwg.mxu0
        %v963 = vsel %vm544, %v954, 0
        %v966 = vsel %vm544, %v957, 0
        %v969 = vsel %vm544, %v960, 0
        %971 = vmatpush.msra.mxu0 0.0
        %972 = vmatpush.msra.mxu0 0.0
        %973 = vmatpush.msra.mxu0 0.0
        %974 = vmatpush.msra.mxu0 0.0
        %975 = vmatpush.msra.mxu0 0.0
        %976 = vmatpush.msra.mxu0 0.0
        %977 = vmatpush.msra.mxu0 0.0
        %978 = vmatpush.msra.mxu0 0.0
        %979 = vmatpush.msra.mxu0 0.0
        %980 = vmatpush.msra.mxu0 0.0
        %981 = vmatpush.msra.mxu0 0.0
        %982 = vmatpush.msra.mxu0 0.0
        %983 = vmatpush.msra.mxu0 0.0
        %984 = vmatpush.msra.mxu0 0.0
        %985 = vmatpush.msra.mxu0 0.0
        %986 = vmatpush.msra.mxu0 %v868
        %987 = vmatmul.f32.gmra.mxu0 %v963
        %v988 = vpop.f32.mrf.mxu0
        %v989 = vadd.f32 0.0, %v988
        %990 = vmatmul.f32.gmra.mxu0 %v966
        %v991 = vpop.f32.mrf.mxu0
        %v992 = vadd.f32 0.0, %v991
        %993 = vmatmul.f32.gmra.mxu0 %v969
        %v994 = vpop.f32.mrf.mxu0
        %v995 = vadd.f32 0.0, %v994
        %996 = vdwg.mxu0
        %v998 = vsel %vm544, %v909, 0
        %v1001 = vsel %vm544, %v912, 0
        %v1004 = vsel %vm544, %v915, 0
        %1006 = vmatpush.msra.mxu0 0.0
        %1007 = vmatpush.msra.mxu0 0.0
        %1008 = vmatpush.msra.mxu0 0.0
        %1009 = vmatpush.msra.mxu0 0.0
        %1010 = vmatpush.msra.mxu0 0.0
        %1011 = vmatpush.msra.mxu0 0.0
        %1012 = vmatpush.msra.mxu0 0.0
        %1013 = vmatpush.msra.mxu0 0.0
        %1014 = vmatpush.msra.mxu0 0.0
        %1015 = vmatpush.msra.mxu0 0.0
        %1016 = vmatpush.msra.mxu0 0.0
        %1017 = vmatpush.msra.mxu0 0.0
        %1018 = vmatpush.msra.mxu0 0.0
        %1019 = vmatpush.msra.mxu0 0.0
        %1020 = vmatpush.msra.mxu0 0.0
        %1021 = vmatpush.msra.mxu0 %v867
        %1022 = vmatmul.f32.gmra.mxu0 %v998
        %v1023 = vpop.f32.mrf.mxu0
        %v1024 = vadd.f32 %v989, %v1023
        %1025 = vmatmul.f32.gmra.mxu0 %v1001
        %v1026 = vpop.f32.mrf.mxu0
        %v1027 = vadd.f32 %v992, %v1026
        %1028 = vmatmul.f32.gmra.mxu0 %v1004
        %v1029 = vpop.f32.mrf.mxu0
        %v1030 = vadd.f32 %v995, %v1029
        %1031 = vdwg.mxu0
        %1032 = vrot.lane.b32.xlu0 %v527, 48
        %v1033 = vpop.permute.xlu0 %1032
        %1034 = vrot.lane.b32.xlu0 %v530, 48
        %v1035 = vpop.permute.xlu0 %1034
        %1036 = vrot.lane.b32.xlu0 %v533, 48
        %v1037 = vpop.permute.xlu0 %1036
        %v1041 = vsel %vm733, %v861, 0
        %v1044 = vsel %vm733, %v862, 0
        %v1047 = vsel %vm733, %v863, 0
        %v1049 = vsel %vm888, %v1037, 0
        %1051 = vmatpush.msra.mxu0 0.0
        %1052 = vmatpush.msra.mxu0 0.0
        %1053 = vmatpush.msra.mxu0 0.0
        %1054 = vmatpush.msra.mxu0 0.0
        %1055 = vmatpush.msra.mxu0 0.0
        %1056 = vmatpush.msra.mxu0 0.0
        %1057 = vmatpush.msra.mxu0 0.0
        %1058 = vmatpush.msra.mxu0 0.0
        %1059 = vmatpush.msra.mxu0 0.0
        %1060 = vmatpush.msra.mxu0 0.0
        %1061 = vmatpush.msra.mxu0 0.0
        %1062 = vmatpush.msra.mxu0 0.0
        %1063 = vmatpush.msra.mxu0 0.0
        %1064 = vmatpush.msra.mxu0 %v1049
        %1065 = vmatpush.msra.mxu0 %v1035
        %1066 = vmatpush.msra.mxu0 %v1033
        %1067 = vmatmul.f32.gmra.mxu0 %v1041
        %v1068 = vpop.f32.mrf.mxu0
        %v1069 = vadd.f32 0.0, %v1068
        %1070 = vmatmul.f32.gmra.mxu0 %v1044
        %v1071 = vpop.f32.mrf.mxu0
        %v1072 = vadd.f32 0.0, %v1071
        %1073 = vmatmul.f32.gmra.mxu0 %v1047
        %v1074 = vpop.f32.mrf.mxu0
        %v1075 = vadd.f32 0.0, %v1074
        %1076 = vdwg.mxu0
        %v1078 = vsel %vm544, %v1069, 0
        %v1081 = vsel %vm544, %v1072, 0
        %v1084 = vsel %vm544, %v1075, 0
        %1086 = vmatpush.msra.mxu0 0.0
        %1087 = vmatpush.msra.mxu0 0.0
        %1088 = vmatpush.msra.mxu0 0.0
        %1089 = vmatpush.msra.mxu0 0.0
        %1090 = vmatpush.msra.mxu0 0.0
        %1091 = vmatpush.msra.mxu0 0.0
        %1092 = vmatpush.msra.mxu0 0.0
        %1093 = vmatpush.msra.mxu0 0.0
        %1094 = vmatpush.msra.mxu0 0.0
        %1095 = vmatpush.msra.mxu0 0.0
        %1096 = vmatpush.msra.mxu0 0.0
        %1097 = vmatpush.msra.mxu0 0.0
        %1098 = vmatpush.msra.mxu0 0.0
        %1099 = vmatpush.msra.mxu0 0.0
        %1100 = vmatpush.msra.mxu0 0.0
        %1101 = vmatpush.msra.mxu0 %v869
        %1102 = vmatmul.f32.gmra.mxu0 %v1078
        %v1103 = vpop.f32.mrf.mxu0
        %v1104 = vadd.f32 0.0, %v1103
        %1105 = vmatmul.f32.gmra.mxu0 %v1081
        %v1106 = vpop.f32.mrf.mxu0
        %v1107 = vadd.f32 0.0, %v1106
        %1108 = vmatmul.f32.gmra.mxu0 %v1084
        %v1109 = vpop.f32.mrf.mxu0
        %v1110 = vadd.f32 0.0, %v1109
        %1111 = vdwg.mxu0
        %v1112 = vadd.f32 %v1024, %v1104
        %v1113 = vadd.f32 %v1027, %v1107
        %v1114 = vadd.f32 %v1030, %v1110
        %1115 = vrot.lane.b32.xlu0 %v527, 40
        %v1116 = vpop.permute.xlu0 %1115
        %1117 = vrot.lane.b32.xlu0 %v530, 40
        %v1118 = vpop.permute.xlu0 %1117
        %1119 = vrot.lane.b32.xlu0 %v533, 40
        %v1120 = vpop.permute.xlu0 %1119
        %v1124 = vsel %vm733, %v864, 0
        %v1127 = vsel %vm733, %v865, 0
        %v1130 = vsel %vm733, %v866, 0
        %v1132 = vsel %vm888, %v1120, 0
        %1134 = vmatpush.msra.mxu0 0.0
        %1135 = vmatpush.msra.mxu0 0.0
        %1136 = vmatpush.msra.mxu0 0.0
        %1137 = vmatpush.msra.mxu0 0.0
        %1138 = vmatpush.msra.mxu0 0.0
        %1139 = vmatpush.msra.mxu0 0.0
        %1140 = vmatpush.msra.mxu0 0.0
        %1141 = vmatpush.msra.mxu0 0.0
        %1142 = vmatpush.msra.mxu0 0.0
        %1143 = vmatpush.msra.mxu0 0.0
        %1144 = vmatpush.msra.mxu0 0.0
        %1145 = vmatpush.msra.mxu0 0.0
        %1146 = vmatpush.msra.mxu0 0.0
        %1147 = vmatpush.msra.mxu0 %v1132
        %1148 = vmatpush.msra.mxu0 %v1118
        %1149 = vmatpush.msra.mxu0 %v1116
        %1150 = vmatmul.f32.gmra.mxu0 %v1124
        %v1151 = vpop.f32.mrf.mxu0
        %v1152 = vadd.f32 0.0, %v1151
        %1153 = vmatmul.f32.gmra.mxu0 %v1127
        %v1154 = vpop.f32.mrf.mxu0
        %v1155 = vadd.f32 0.0, %v1154
        %1156 = vmatmul.f32.gmra.mxu0 %v1130
        %v1157 = vpop.f32.mrf.mxu0
        %v1158 = vadd.f32 0.0, %v1157
        %1159 = vdwg.mxu0
        %v1161 = vsel %vm544, %v1152, 0
        %v1164 = vsel %vm544, %v1155, 0
        %v1167 = vsel %vm544, %v1158, 0
        %1169 = vmatpush.msra.mxu0 0.0
        %1170 = vmatpush.msra.mxu0 0.0
        %1171 = vmatpush.msra.mxu0 0.0
        %1172 = vmatpush.msra.mxu0 0.0
        %1173 = vmatpush.msra.mxu0 0.0
        %1174 = vmatpush.msra.mxu0 0.0
        %1175 = vmatpush.msra.mxu0 0.0
        %1176 = vmatpush.msra.mxu0 0.0
        %1177 = vmatpush.msra.mxu0 0.0
        %1178 = vmatpush.msra.mxu0 0.0
        %1179 = vmatpush.msra.mxu0 0.0
        %1180 = vmatpush.msra.mxu0 0.0
        %1181 = vmatpush.msra.mxu0 0.0
        %1182 = vmatpush.msra.mxu0 0.0
        %1183 = vmatpush.msra.mxu0 0.0
        %1184 = vmatpush.msra.mxu0 %v870
        %1185 = vmatmul.f32.gmra.mxu0 %v1161
        %v1186 = vpop.f32.mrf.mxu0
        %v1187 = vadd.f32 0.0, %v1186
        %1188 = vmatmul.f32.gmra.mxu0 %v1164
        %v1189 = vpop.f32.mrf.mxu0
        %v1190 = vadd.f32 0.0, %v1189
        %1191 = vmatmul.f32.gmra.mxu0 %v1167
        %v1192 = vpop.f32.mrf.mxu0
        %v1193 = vadd.f32 0.0, %v1192
        %1194 = vdwg.mxu0
        %v1195 = vadd.f32 %v1112, %v1187
        %v1196 = vadd.f32 %v1113, %v1190
        %v1197 = vadd.f32 %v1114, %v1193
        %v1198 = vld [vmem:[%s2 + $0x17] sm:$0x1]
        %v1199 = vperm.slane %v1198, 0
        %v1200 = vadd.f32 %v1195, %v1199
        %v1201 = vadd.f32 %v1196, %v1199
        %v1202 = vadd.f32 %v1197, %v1199
        %v1203 = vadd.f32 %v491, %v1200
        %v1204 = vadd.f32 %v492, %v1201
        %v1205 = vadd.f32 %v493, %v1202
        %v1206 = vld [vmem:[%s2 + $0x18] sm:$0x1]
        %v1207 = vld [vmem:[%s2 + $0x19] sm:$0x1]
        %v1208 = vsel %vm411, %v1203, 0.0
        %1209 = vadd.xlane.f32.xlu0 %v1208
        %v1210 = vpop.xlane.xlu0 %1209
        %v1211 = vsel %vm411, %v1204, 0.0
        %1212 = vadd.xlane.f32.xlu0 %v1211
        %v1213 = vpop.xlane.xlu0 %1212
        %v1214 = vsel %vm418, %v1205, 0.0
        %1215 = vadd.xlane.f32.xlu0 %v1214
        %v1216 = vpop.xlane.xlu0 %1215
        %v1217 = vmul.f32 %v1210, %v428
        %v1218 = vmul.f32 %v1213, %v428
        %v1219 = vmul.f32 %v1216, %v428
        %v1220 = vsub.f32 %v1203, %v1217
        %v1221 = vsub.f32 %v1204, %v1218
        %v1222 = vsub.f32 %v1205, %v1219
        %v1223 = vmul.f32 %v1220, %v1220
        %v1224 = vmul.f32 %v1221, %v1221
        %v1225 = vmul.f32 %v1222, %v1222
        %v1226 = vsel %vm411, %v1223, 0.0
        %1227 = vadd.xlane.f32.xlu0 %v1226
        %v1228 = vpop.xlane.xlu0 %1227
        %v1229 = vsel %vm411, %v1224, 0.0
        %1230 = vadd.xlane.f32.xlu0 %v1229
        %v1231 = vpop.xlane.xlu0 %1230
        %v1232 = vsel %vm418, %v1225, 0.0
        %1233 = vadd.xlane.f32.xlu0 %v1232
        %v1234 = vpop.xlane.xlu0 %1233
        %v1235 = vmul.f32 %v1228, %v428
        %v1236 = vmul.f32 %v1231, %v428
        %v1237 = vmul.f32 %v1234, %v428
        %v1238 = vadd.f32 %v1235, 1e-05
        %v1239 = vadd.f32 %v1236, 1e-05
        %v1240 = vadd.f32 %v1237, 1e-05
        %v1241 = vrsqrt.pop %v1238
        %v1242 = vmul.f32 %v1241, %v1238
        %v1243 = vmul.f32 %v1242, %v1241
        %v1244 = vmul.f32 0.5, %v1243
        %v1245 = vsub.f32 1.5, %v1244
        %v1246 = vmul.f32 %v1241, %v1245
        %vm1247 = vweird.f32 %v1238
        %vm1248 = vweird.f32 %v1241
        %vm1249 = vmor %vm1247, %vm1248
        %v1250 = vsel %vm1249, %v1241, %v1246
        %v1251 = vrsqrt.pop %v1239
        %v1252 = vmul.f32 %v1251, %v1239
        %v1253 = vmul.f32 %v1252, %v1251
        %v1254 = vmul.f32 0.5, %v1253
        %v1255 = vsub.f32 1.5, %v1254
        %v1256 = vmul.f32 %v1251, %v1255
        %vm1257 = vweird.f32 %v1239
        %vm1258 = vweird.f32 %v1251
        %vm1259 = vmor %vm1257, %vm1258
        %v1260 = vsel %vm1259, %v1251, %v1256
        %v1261 = vrsqrt.pop %v1240
        %v1262 = vmul.f32 %v1261, %v1240
        %v1263 = vmul.f32 %v1262, %v1261
        %v1264 = vmul.f32 0.5, %v1263
        %v1265 = vsub.f32 1.5, %v1264
        %v1266 = vmul.f32 %v1261, %v1265
        %vm1267 = vweird.f32 %v1240
        %vm1268 = vweird.f32 %v1261
        %vm1269 = vmor %vm1267, %vm1268
        %v1270 = vsel %vm1269, %v1261, %v1266
        %v1271 = vmul.f32 %v1220, %v1250
        %v1272 = vmul.f32 %v1221, %v1260
        %v1273 = vmul.f32 %v1222, %v1270
        %v1274 = vperm.slane %v1206, 0
        %v1275 = vmul.f32 %v1271, %v1274
        %v1276 = vmul.f32 %v1272, %v1274
        %v1277 = vmul.f32 %v1273, %v1274
        %v1278 = vperm.slane %v1207, 0
        %v1279 = vadd.f32 %v1275, %v1278
        %v1280 = vadd.f32 %v1276, %v1278
        %v1281 = vadd.f32 %v1277, %v1278
        %v1282 = vld [vmem:[%s6] sm:$0xff]
        %v1283 = vld [vmem:[%s6 + $0x8] sm:$0xff]
        %v1284 = vld [vmem:[%s6 + $0x10] sm:$0xff]
        %v1285 = vld [vmem:[%s6 + $0x18] sm:$0xff]
        %v1286 = vld [vmem:[%s2 + $0x1a] sm:$0x1]
        %v1287 = vperm.slane %v1286, 0
        %v1289 = vsel %vm411, %v1279, 0
        %v1292 = vsel %vm411, %v1280, 0
        %v1295 = vsel %vm411, %v1281, 0
        %1297 = vmatpush.msra.mxu0 0.0
        %1298 = vmatpush.msra.mxu0 0.0
        %1299 = vmatpush.msra.mxu0 0.0
        %1300 = vmatpush.msra.mxu0 0.0
        %1301 = vmatpush.msra.mxu0 0.0
        %1302 = vmatpush.msra.mxu0 0.0
        %1303 = vmatpush.msra.mxu0 0.0
        %1304 = vmatpush.msra.mxu0 0.0
        %1305 = vmatpush.msra.mxu0 0.0
        %1306 = vmatpush.msra.mxu0 0.0
        %1307 = vmatpush.msra.mxu0 0.0
        %1308 = vmatpush.msra.mxu0 0.0
        %1309 = vmatpush.msra.mxu0 %v1285
        %1310 = vmatpush.msra.mxu0 %v1284
        %1311 = vmatpush.msra.mxu0 %v1283
        %1312 = vmatpush.msra.mxu0 %v1282
        %1313 = vmatmul.f32.gmra.mxu0 %v1289
        %v1314 = vpop.f32.mrf.mxu0
        %v1315 = vadd.f32 %v1287, %v1314
        %1316 = vmatmul.f32.gmra.mxu0 %v1292
        %v1317 = vpop.f32.mrf.mxu0
        %v1318 = vadd.f32 %v1287, %v1317
        %1319 = vmatmul.f32.gmra.mxu0 %v1295
        %v1320 = vpop.f32.mrf.mxu0
        %v1321 = vadd.f32 %v1287, %v1320
        %1322 = vdwg.mxu0
        %v1323 = vmul.f32 %v1315, 0.5
        %v1324 = vmul.f32 %v1318, 0.5
        %v1325 = vmul.f32 %v1321, 0.5
        %v1326 = vmul.f32 %v1315, 0.70710677
        %v1327 = vmul.f32 %v1318, 0.70710677
        %v1328 = vmul.f32 %v1321, 0.70710677
        %v1329 = vand.u32 2147483647, %v1326
        %v1330 = vand.u32 2147483647, %v1327
        %v1331 = vand.u32 2147483647, %v1328
        %v1332 = vmul.f32 %v1329, 0.3275911
        %v1333 = vmul.f32 %v1330, 0.3275911
        %v1334 = vmul.f32 %v1331, 0.3275911
        %v1335 = vadd.f32 %v1332, 1.0
        %v1336 = vadd.f32 %v1333, 1.0
        %v1337 = vadd.f32 %v1334, 1.0
        %v1338 = vrcp.pop %v1335
        %v1339 = vmul.f32 %v1335, %v1338
        %v1340 = vsub.f32 1.0, %v1339
        %v1341 = vmul.f32 %v1338, %v1340
        %v1342 = vadd.f32 %v1338, %v1341
        %vm1343 = vweird.f32 %v1335
        %vm1344 = vweird.f32 %v1338
        %vm1345 = vmor %vm1343, %vm1344
        %v1346 = vsel %vm1345, %v1338, %v1342
        %v1347 = vand.u32 2147483647, %v1335
        %vm1348 = vcmp.eq.f32.partialorder %v1347, 8.507059e+37
        %v1349 = vand.u32 %v1335, 2147483648
        %v1350 = vor.u32 1.1754944e-38, %v1349
        %v1351 = vsel %vm1348, %v1350, %v1346
        %v1352 = vmul.f32 1.0, %v1351
        %v1353 = vrcp.pop %v1336
        %v1354 = vmul.f32 %v1336, %v1353
        %v1355 = vsub.f32 1.0, %v1354
        %v1356 = vmul.f32 %v1353, %v1355
        %v1357 = vadd.f32 %v1353, %v1356
        %vm1358 = vweird.f32 %v1336
        %vm1359 = vweird.f32 %v1353
        %vm1360 = vmor %vm1358, %vm1359
        %v1361 = vsel %vm1360, %v1353, %v1357
        %v1362 = vand.u32 2147483647, %v1336
        %vm1363 = vcmp.eq.f32.partialorder %v1362, 8.507059e+37
        %v1364 = vand.u32 %v1336, 2147483648
        %v1365 = vor.u32 1.1754944e-38, %v1364
        %v1366 = vsel %vm1363, %v1365, %v1361
        %v1367 = vmul.f32 1.0, %v1366
        %v1368 = vrcp.pop %v1337
        %v1369 = vmul.f32 %v1337, %v1368
        %v1370 = vsub.f32 1.0, %v1369
        %v1371 = vmul.f32 %v1368, %v1370
        %v1372 = vadd.f32 %v1368, %v1371
        %vm1373 = vweird.f32 %v1337
        %vm1374 = vweird.f32 %v1368
        %vm1375 = vmor %vm1373, %vm1374
        %v1376 = vsel %vm1375, %v1368, %v1372
        %v1377 = vand.u32 2147483647, %v1337
        %vm1378 = vcmp.eq.f32.partialorder %v1377, 8.507059e+37
        %v1379 = vand.u32 %v1337, 2147483648
        %v1380 = vor.u32 1.1754944e-38, %v1379
        %v1381 = vsel %vm1378, %v1380, %v1376
        %v1382 = vmul.f32 1.0, %v1381
        %v1383 = vmul.f32 %v1352, 1.0614054
        %v1384 = vmul.f32 %v1367, 1.0614054
        %v1385 = vmul.f32 %v1382, 1.0614054
        %v1386 = vadd.f32 %v1383, -1.4531521
        %v1387 = vadd.f32 %v1384, -1.4531521
        %v1388 = vadd.f32 %v1385, -1.4531521
        %v1389 = vmul.f32 %v1352, %v1386
        %v1390 = vmul.f32 %v1367, %v1387
        %v1391 = vmul.f32 %v1382, %v1388
        %v1392 = vadd.f32 %v1389, 1.4214138
        %v1393 = vadd.f32 %v1390, 1.4214138
        %v1394 = vadd.f32 %v1391, 1.4214138
        %v1395 = vmul.f32 %v1352, %v1392
        %v1396 = vmul.f32 %v1367, %v1393
        %v1397 = vmul.f32 %v1382, %v1394
        %v1398 = vadd.f32 %v1395, -0.28449672
        %v1399 = vadd.f32 %v1396, -0.28449672
        %v1400 = vadd.f32 %v1397, -0.28449672
        %v1401 = vmul.f32 %v1352, %v1398
        %v1402 = vmul.f32 %v1367, %v1399
        %v1403 = vmul.f32 %v1382, %v1400
        %v1404 = vadd.f32 %v1401, 0.2548296
        %v1405 = vadd.f32 %v1402, 0.2548296
        %v1406 = vadd.f32 %v1403, 0.2548296
        %v1407 = vmul.f32 %v1352, %v1404
        %v1408 = vmul.f32 %v1367, %v1405
        %v1409 = vmul.f32 %v1382, %v1406
        %v1410 = vsub.f32 0.0, %v1329
        %v1411 = vsub.f32 0.0, %v1330
        %v1412 = vsub.f32 0.0, %v1331
        %v1413 = vmul.f32 %v1410, %v1329
        %v1414 = vmul.f32 %v1411, %v1330
        %v1415 = vmul.f32 %v1412, %v1331
        %v1416 = vmul.f32 %v1413, 1.442695
        %v1417 = vpow.pop %v1416
        %v1418 = vmul.f32 %v1414, 1.442695
        %v1419 = vpow.pop %v1418
        %v1420 = vmul.f32 %v1415, 1.442695
        %v1421 = vpow.pop %v1420
        %v1422 = vmul.f32 %v1407, %v1417
        %v1423 = vmul.f32 %v1408, %v1419
        %v1424 = vmul.f32 %v1409, %v1421
        %v1425 = vsub.f32 1.0, %v1422
        %v1426 = vsub.f32 1.0, %v1423
        %v1427 = vsub.f32 1.0, %v1424
        %vm1428 = vcmp.ge.f32.partialorder %v1326, 0.0
        %vm1429 = vcmp.ge.f32.partialorder %v1327, 0.0
        %vm1430 = vcmp.ge.f32.partialorder %v1328, 0.0
        %v1431 = vsub.f32 0.0, %v1425
        %v1432 = vsub.f32 0.0, %v1426
        %v1433 = vsub.f32 0.0, %v1427
        %v1434 = vsel %vm1428, %v1425, %v1431
        %v1435 = vsel %vm1429, %v1426, %v1432
        %v1436 = vsel %vm1430, %v1427, %v1433
        %v1437 = vadd.f32 %v1434, 1.0
        %v1438 = vadd.f32 %v1435, 1.0
        %v1439 = vadd.f32 %v1436, 1.0
        %v1440 = vmul.f32 %v1323, %v1437
        %v1441 = vmul.f32 %v1324, %v1438
        %v1442 = vmul.f32 %v1325, %v1439
        %v1443 = vld [vmem:[%s7] sm:$0xff]
        %v1444 = vld [vmem:[%s7 + $0x8] sm:$0xff]
        %v1445 = vld [vmem:[%s7 + $0x10] sm:$0xff]
        %v1446 = vld [vmem:[%s7 + $0x18] sm:$0xff]
        %v1447 = vld [vmem:[%s7 + $0x20] sm:$0xff]
        %v1448 = vld [vmem:[%s7 + $0x28] sm:$0xff]
        %v1449 = vld [vmem:[%s7 + $0x30] sm:$0xff]
        %v1450 = vld [vmem:[%s7 + $0x38] sm:$0xff]
        %v1451 = vld [vmem:[%s2 + $0x1b] sm:$0x1]
        %v1452 = vperm.slane %v1451, 0
        %v1454 = vsel %vm368, %v1440, 0
        %v1457 = vsel %vm368, %v1441, 0
        %v1460 = vsel %vm368, %v1442, 0
        %1462 = vmatpush.msra.mxu0 0.0
        %1463 = vmatpush.msra.mxu0 0.0
        %1464 = vmatpush.msra.mxu0 0.0
        %1465 = vmatpush.msra.mxu0 0.0
        %1466 = vmatpush.msra.mxu0 0.0
        %1467 = vmatpush.msra.mxu0 0.0
        %1468 = vmatpush.msra.mxu0 0.0
        %1469 = vmatpush.msra.mxu0 0.0
        %1470 = vmatpush.msra.mxu0 %v1450
        %1471 = vmatpush.msra.mxu0 %v1449
        %1472 = vmatpush.msra.mxu0 %v1448
        %1473 = vmatpush.msra.mxu0 %v1447
        %1474 = vmatpush.msra.mxu0 %v1446
        %1475 = vmatpush.msra.mxu0 %v1445
        %1476 = vmatpush.msra.mxu0 %v1444
        %1477 = vmatpush.msra.mxu0 %v1443
        %1478 = vmatmul.f32.gmra.mxu0 %v1454
        %v1479 = vpop.f32.mrf.mxu0
        %v1480 = vadd.f32 %v1452, %v1479
        %1481 = vmatmul.f32.gmra.mxu0 %v1457
        %v1482 = vpop.f32.mrf.mxu0
        %v1483 = vadd.f32 %v1452, %v1482
        %1484 = vmatmul.f32.gmra.mxu0 %v1460
        %v1485 = vpop.f32.mrf.mxu0
        %v1486 = vadd.f32 %v1452, %v1485
        %1487 = vdwg.mxu0
        %v1488 = vadd.f32 %v1279, %v1480
        %v1489 = vadd.f32 %v1280, %v1483
        %v1490 = vadd.f32 %v1281, %v1486
        %v1491 = vld [vmem:[%s2 + $0x1c] sm:$0x1]
        %v1492 = vld [vmem:[%s2 + $0x1d] sm:$0x1]
        %v1493 = vsel %vm411, %v1488, 0.0
        %1494 = vadd.xlane.f32.xlu0 %v1493
        %v1495 = vpop.xlane.xlu0 %1494
        %v1496 = vsel %vm411, %v1489, 0.0
        %1497 = vadd.xlane.f32.xlu0 %v1496
        %v1498 = vpop.xlane.xlu0 %1497
        %v1499 = vsel %vm418, %v1490, 0.0
        %1500 = vadd.xlane.f32.xlu0 %v1499
        %v1501 = vpop.xlane.xlu0 %1500
        %v1502 = vmul.f32 %v1495, %v428
        %v1503 = vmul.f32 %v1498, %v428
        %v1504 = vmul.f32 %v1501, %v428
        %v1505 = vsub.f32 %v1488, %v1502
        %v1506 = vsub.f32 %v1489, %v1503
        %v1507 = vsub.f32 %v1490, %v1504
        %v1508 = vmul.f32 %v1505, %v1505
        %v1509 = vmul.f32 %v1506, %v1506
        %v1510 = vmul.f32 %v1507, %v1507
        %v1511 = vsel %vm411, %v1508, 0.0
        %1512 = vadd.xlane.f32.xlu0 %v1511
        %v1513 = vpop.xlane.xlu0 %1512
        %v1514 = vsel %vm411, %v1509, 0.0
        %1515 = vadd.xlane.f32.xlu0 %v1514
        %v1516 = vpop.xlane.xlu0 %1515
        %v1517 = vsel %vm418, %v1510, 0.0
        %1518 = vadd.xlane.f32.xlu0 %v1517
        %v1519 = vpop.xlane.xlu0 %1518
        %v1520 = vmul.f32 %v1513, %v428
        %v1521 = vmul.f32 %v1516, %v428
        %v1522 = vmul.f32 %v1519, %v428
        %v1523 = vadd.f32 %v1520, 1e-05
        %v1524 = vadd.f32 %v1521, 1e-05
        %v1525 = vadd.f32 %v1522, 1e-05
        %v1526 = vrsqrt.pop %v1523
        %v1527 = vmul.f32 %v1526, %v1523
        %v1528 = vmul.f32 %v1527, %v1526
        %v1529 = vmul.f32 0.5, %v1528
        %v1530 = vsub.f32 1.5, %v1529
        %v1531 = vmul.f32 %v1526, %v1530
        %vm1532 = vweird.f32 %v1523
        %vm1533 = vweird.f32 %v1526
        %vm1534 = vmor %vm1532, %vm1533
        %v1535 = vsel %vm1534, %v1526, %v1531
        %v1536 = vrsqrt.pop %v1524
        %v1537 = vmul.f32 %v1536, %v1524
        %v1538 = vmul.f32 %v1537, %v1536
        %v1539 = vmul.f32 0.5, %v1538
        %v1540 = vsub.f32 1.5, %v1539
        %v1541 = vmul.f32 %v1536, %v1540
        %vm1542 = vweird.f32 %v1524
        %vm1543 = vweird.f32 %v1536
        %vm1544 = vmor %vm1542, %vm1543
        %v1545 = vsel %vm1544, %v1536, %v1541
        %v1546 = vrsqrt.pop %v1525
        %v1547 = vmul.f32 %v1546, %v1525
        %v1548 = vmul.f32 %v1547, %v1546
        %v1549 = vmul.f32 0.5, %v1548
        %v1550 = vsub.f32 1.5, %v1549
        %v1551 = vmul.f32 %v1546, %v1550
        %vm1552 = vweird.f32 %v1525
        %vm1553 = vweird.f32 %v1546
        %vm1554 = vmor %vm1552, %vm1553
        %v1555 = vsel %vm1554, %v1546, %v1551
        %v1556 = vmul.f32 %v1505, %v1535
        %v1557 = vmul.f32 %v1506, %v1545
        %v1558 = vmul.f32 %v1507, %v1555
        %v1559 = vperm.slane %v1491, 0
        %v1560 = vmul.f32 %v1556, %v1559
        %v1561 = vmul.f32 %v1557, %v1559
        %v1562 = vmul.f32 %v1558, %v1559
        %v1563 = vperm.slane %v1492, 0
        %v1564 = vadd.f32 %v1560, %v1563
        %v1565 = vadd.f32 %v1561, %v1563
        %v1566 = vadd.f32 %v1562, %v1563
        %s1567 = scalar_lea.vmem %s4, 32
        %v1568 = vld [vmem:[%s1567] sm:$0xff]
        %v1569 = vld [vmem:[%s1567 + $0x8] sm:$0xff]
        %v1570 = vld [vmem:[%s1567 + $0x10] sm:$0xff]
        %v1571 = vld [vmem:[%s1567 + $0x18] sm:$0xff]
        %v1572 = vld [vmem:[%s2 + $0x1e] sm:$0x1]
        %v1573 = vperm.slane %v1572, 0
        %v1575 = vsel %vm411, %v1564, 0
        %v1578 = vsel %vm411, %v1565, 0
        %v1581 = vsel %vm411, %v1566, 0
        %1583 = vmatpush.msra.mxu0 0.0
        %1584 = vmatpush.msra.mxu0 0.0
        %1585 = vmatpush.msra.mxu0 0.0
        %1586 = vmatpush.msra.mxu0 0.0
        %1587 = vmatpush.msra.mxu0 0.0
        %1588 = vmatpush.msra.mxu0 0.0
        %1589 = vmatpush.msra.mxu0 0.0
        %1590 = vmatpush.msra.mxu0 0.0
        %1591 = vmatpush.msra.mxu0 0.0
        %1592 = vmatpush.msra.mxu0 0.0
        %1593 = vmatpush.msra.mxu0 0.0
        %1594 = vmatpush.msra.mxu0 0.0
        %1595 = vmatpush.msra.mxu0 %v1571
        %1596 = vmatpush.msra.mxu0 %v1570
        %1597 = vmatpush.msra.mxu0 %v1569
        %1598 = vmatpush.msra.mxu0 %v1568
        %1599 = vmatmul.f32.gmra.mxu0 %v1575
        %v1600 = vpop.f32.mrf.mxu0
        %v1601 = vadd.f32 %v1573, %v1600
        %1602 = vmatmul.f32.gmra.mxu0 %v1578
        %v1603 = vpop.f32.mrf.mxu0
        %v1604 = vadd.f32 %v1573, %v1603
        %1605 = vmatmul.f32.gmra.mxu0 %v1581
        %v1606 = vpop.f32.mrf.mxu0
        %v1607 = vadd.f32 %v1573, %v1606
        %1608 = vdwg.mxu0
        %1612 = vrot.lane.b32.xlu0 %v1601, 96
        %v1613 = vpop.permute.xlu0 %1612
        %1614 = vrot.lane.b32.xlu0 %v1604, 96
        %v1615 = vpop.permute.xlu0 %1614
        %1616 = vrot.lane.b32.xlu0 %v1607, 96
        %v1617 = vpop.permute.xlu0 %1616
        %v1618 = vsel %vm544, %v1601, 0
        %v1620 = vsel %vm544, %v1604, 0
        %v1622 = vsel %vm544, %v1607, 0
        %v1624 = vsel %vm544, %v1613, 0
        %v1626 = vsel %vm544, %v1615, 0
        %v1628 = vsel %vm544, %v1617, 0
        %1630 = vmatpush.xpose.msra.mxu0 0.0
        %1631 = vmatpush.xpose.msra.mxu0 0.0
        %1632 = vmatpush.xpose.msra.mxu0 0.0
        %1633 = vmatpush.xpose.msra.mxu0 0.0
        %1634 = vmatpush.xpose.msra.mxu0 0.0
        %1635 = vmatpush.xpose.msra.mxu0 0.0
        %1636 = vmatpush.xpose.msra.mxu0 0.0
        %1637 = vmatpush.xpose.msra.mxu0 0.0
        %1638 = vmatpush.xpose.msra.mxu0 0.0
        %1639 = vmatpush.xpose.msra.mxu0 0.0
        %1640 = vmatpush.xpose.msra.mxu0 0.0
        %1641 = vmatpush.xpose.msra.mxu0 0.0
        %1642 = vmatpush.xpose.msra.mxu0 0.0
        %1643 = vmatpush.xpose.msra.mxu0 %v1628
        %1644 = vmatpush.xpose.msra.mxu0 %v1626
        %1645 = vmatpush.xpose.msra.mxu0 %v1624
        %1646 = vmatmul.f32.gmra.mxu0 %v1618
        %v1647 = vpop.f32.mrf.mxu0
        %v1648 = vadd.f32 0.0, %v1647
        %1649 = vmatmul.f32.gmra.mxu0 %v1620
        %v1650 = vpop.f32.mrf.mxu0
        %v1651 = vadd.f32 0.0, %v1650
        %1652 = vmatmul.f32.gmra.mxu0 %v1622
        %v1653 = vpop.f32.mrf.mxu0
        %v1654 = vadd.f32 0.0, %v1653
        %1655 = vdwg.mxu0
        %1656 = vrot.lane.b32.xlu0 %v1601, 120
        %v1657 = vpop.permute.xlu0 %1656
        %1658 = vrot.lane.b32.xlu0 %v1604, 120
        %v1659 = vpop.permute.xlu0 %1658
        %1660 = vrot.lane.b32.xlu0 %v1607, 120
        %v1661 = vpop.permute.xlu0 %1660
        %1662 = vrot.lane.b32.xlu0 %v1601, 88
        %v1663 = vpop.permute.xlu0 %1662
        %1664 = vrot.lane.b32.xlu0 %v1604, 88
        %v1665 = vpop.permute.xlu0 %1664
        %1666 = vrot.lane.b32.xlu0 %v1607, 88
        %v1667 = vpop.permute.xlu0 %1666
        %v1668 = vsel %vm544, %v1657, 0
        %v1670 = vsel %vm544, %v1659, 0
        %v1672 = vsel %vm544, %v1661, 0
        %v1674 = vsel %vm544, %v1663, 0
        %v1676 = vsel %vm544, %v1665, 0
        %v1678 = vsel %vm544, %v1667, 0
        %1680 = vmatpush.xpose.msra.mxu0 0.0
        %1681 = vmatpush.xpose.msra.mxu0 0.0
        %1682 = vmatpush.xpose.msra.mxu0 0.0
        %1683 = vmatpush.xpose.msra.mxu0 0.0
        %1684 = vmatpush.xpose.msra.mxu0 0.0
        %1685 = vmatpush.xpose.msra.mxu0 0.0
        %1686 = vmatpush.xpose.msra.mxu0 0.0
        %1687 = vmatpush.xpose.msra.mxu0 0.0
        %1688 = vmatpush.xpose.msra.mxu0 0.0
        %1689 = vmatpush.xpose.msra.mxu0 0.0
        %1690 = vmatpush.xpose.msra.mxu0 0.0
        %1691 = vmatpush.xpose.msra.mxu0 0.0
        %1692 = vmatpush.xpose.msra.mxu0 0.0
        %1693 = vmatpush.xpose.msra.mxu0 %v1678
        %1694 = vmatpush.xpose.msra.mxu0 %v1676
        %1695 = vmatpush.xpose.msra.mxu0 %v1674
        %1696 = vmatmul.f32.gmra.mxu0 %v1668
        %v1697 = vpop.f32.mrf.mxu0
        %v1698 = vadd.f32 0.0, %v1697
        %1699 = vmatmul.f32.gmra.mxu0 %v1670
        %v1700 = vpop.f32.mrf.mxu0
        %v1701 = vadd.f32 0.0, %v1700
        %1702 = vmatmul.f32.gmra.mxu0 %v1672
        %v1703 = vpop.f32.mrf.mxu0
        %v1704 = vadd.f32 0.0, %v1703
        %1705 = vdwg.mxu0
        %1706 = vrot.lane.b32.xlu0 %v1601, 112
        %v1707 = vpop.permute.xlu0 %1706
        %1708 = vrot.lane.b32.xlu0 %v1604, 112
        %v1709 = vpop.permute.xlu0 %1708
        %1710 = vrot.lane.b32.xlu0 %v1607, 112
        %v1711 = vpop.permute.xlu0 %1710
        %1712 = vrot.lane.b32.xlu0 %v1601, 80
        %v1713 = vpop.permute.xlu0 %1712
        %1714 = vrot.lane.b32.xlu0 %v1604, 80
        %v1715 = vpop.permute.xlu0 %1714
        %1716 = vrot.lane.b32.xlu0 %v1607, 80
        %v1717 = vpop.permute.xlu0 %1716
        %v1718 = vsel %vm544, %v1707, 0
        %v1720 = vsel %vm544, %v1709, 0
        %v1722 = vsel %vm544, %v1711, 0
        %v1724 = vsel %vm544, %v1713, 0
        %v1726 = vsel %vm544, %v1715, 0
        %v1728 = vsel %vm544, %v1717, 0
        %1730 = vmatpush.xpose.msra.mxu0 0.0
        %1731 = vmatpush.xpose.msra.mxu0 0.0
        %1732 = vmatpush.xpose.msra.mxu0 0.0
        %1733 = vmatpush.xpose.msra.mxu0 0.0
        %1734 = vmatpush.xpose.msra.mxu0 0.0
        %1735 = vmatpush.xpose.msra.mxu0 0.0
        %1736 = vmatpush.xpose.msra.mxu0 0.0
        %1737 = vmatpush.xpose.msra.mxu0 0.0
        %1738 = vmatpush.xpose.msra.mxu0 0.0
        %1739 = vmatpush.xpose.msra.mxu0 0.0
        %1740 = vmatpush.xpose.msra.mxu0 0.0
        %1741 = vmatpush.xpose.msra.mxu0 0.0
        %1742 = vmatpush.xpose.msra.mxu0 0.0
        %1743 = vmatpush.xpose.msra.mxu0 %v1728
        %1744 = vmatpush.xpose.msra.mxu0 %v1726
        %1745 = vmatpush.xpose.msra.mxu0 %v1724
        %1746 = vmatmul.f32.gmra.mxu0 %v1718
        %v1747 = vpop.f32.mrf.mxu0
        %v1748 = vadd.f32 0.0, %v1747
        %1749 = vmatmul.f32.gmra.mxu0 %v1720
        %v1750 = vpop.f32.mrf.mxu0
        %v1751 = vadd.f32 0.0, %v1750
        %1752 = vmatmul.f32.gmra.mxu0 %v1722
        %v1753 = vpop.f32.mrf.mxu0
        %v1754 = vadd.f32 0.0, %v1753
        %1755 = vdwg.mxu0
        %1756 = vrot.lane.b32.xlu0 %v1601, 104
        %v1757 = vpop.permute.xlu0 %1756
        %1758 = vrot.lane.b32.xlu0 %v1604, 104
        %v1759 = vpop.permute.xlu0 %1758
        %1760 = vrot.lane.b32.xlu0 %v1607, 104
        %v1761 = vpop.permute.xlu0 %1760
        %1762 = vrot.lane.b32.xlu0 %v1601, 72
        %v1763 = vpop.permute.xlu0 %1762
        %1764 = vrot.lane.b32.xlu0 %v1604, 72
        %v1765 = vpop.permute.xlu0 %1764
        %1766 = vrot.lane.b32.xlu0 %v1607, 72
        %v1767 = vpop.permute.xlu0 %1766
        %v1768 = vsel %vm544, %v1757, 0
        %v1770 = vsel %vm544, %v1759, 0
        %v1772 = vsel %vm544, %v1761, 0
        %v1774 = vsel %vm544, %v1763, 0
        %v1776 = vsel %vm544, %v1765, 0
        %v1778 = vsel %vm544, %v1767, 0
        %1780 = vmatpush.xpose.msra.mxu0 0.0
        %1781 = vmatpush.xpose.msra.mxu0 0.0
        %1782 = vmatpush.xpose.msra.mxu0 0.0
        %1783 = vmatpush.xpose.msra.mxu0 0.0
        %1784 = vmatpush.xpose.msra.mxu0 0.0
        %1785 = vmatpush.xpose.msra.mxu0 0.0
        %1786 = vmatpush.xpose.msra.mxu0 0.0
        %1787 = vmatpush.xpose.msra.mxu0 0.0
        %1788 = vmatpush.xpose.msra.mxu0 0.0
        %1789 = vmatpush.xpose.msra.mxu0 0.0
        %1790 = vmatpush.xpose.msra.mxu0 0.0
        %1791 = vmatpush.xpose.msra.mxu0 0.0
        %1792 = vmatpush.xpose.msra.mxu0 0.0
        %1793 = vmatpush.xpose.msra.mxu0 %v1778
        %1794 = vmatpush.xpose.msra.mxu0 %v1776
        %1795 = vmatpush.xpose.msra.mxu0 %v1774
        %1796 = vmatmul.f32.gmra.mxu0 %v1768
        %v1797 = vpop.f32.mrf.mxu0
        %v1798 = vadd.f32 0.0, %v1797
        %1799 = vmatmul.f32.gmra.mxu0 %v1770
        %v1800 = vpop.f32.mrf.mxu0
        %v1801 = vadd.f32 0.0, %v1800
        %1802 = vmatmul.f32.gmra.mxu0 %v1772
        %v1803 = vpop.f32.mrf.mxu0
        %v1804 = vadd.f32 0.0, %v1803
        %1805 = vdwg.mxu0
        %v1806 = vsel %vm733, %v1648, -inf
        %1807 = vmax.xlane.f32.xlu0 %v1806
        %v1808 = vpop.xlane.xlu0 %1807
        %v1809 = vsel %vm733, %v1651, -inf
        %1810 = vmax.xlane.f32.xlu0 %v1809
        %v1811 = vpop.xlane.xlu0 %1810
        %v1812 = vsel %vm740, %v1654, -inf
        %1813 = vmax.xlane.f32.xlu0 %v1812
        %v1814 = vpop.xlane.xlu0 %1813
        %v1815 = vsel %vm733, %v1698, -inf
        %1816 = vmax.xlane.f32.xlu0 %v1815
        %v1817 = vpop.xlane.xlu0 %1816
        %v1818 = vsel %vm733, %v1701, -inf
        %1819 = vmax.xlane.f32.xlu0 %v1818
        %v1820 = vpop.xlane.xlu0 %1819
        %v1821 = vsel %vm740, %v1704, -inf
        %1822 = vmax.xlane.f32.xlu0 %v1821
        %v1823 = vpop.xlane.xlu0 %1822
        %v1824 = vsel %vm733, %v1748, -inf
        %1825 = vmax.xlane.f32.xlu0 %v1824
        %v1826 = vpop.xlane.xlu0 %1825
        %v1827 = vsel %vm733, %v1751, -inf
        %1828 = vmax.xlane.f32.xlu0 %v1827
        %v1829 = vpop.xlane.xlu0 %1828
        %v1830 = vsel %vm740, %v1754, -inf
        %1831 = vmax.xlane.f32.xlu0 %v1830
        %v1832 = vpop.xlane.xlu0 %1831
        %v1833 = vsel %vm733, %v1798, -inf
        %1834 = vmax.xlane.f32.xlu0 %v1833
        %v1835 = vpop.xlane.xlu0 %1834
        %v1836 = vsel %vm733, %v1801, -inf
        %1837 = vmax.xlane.f32.xlu0 %v1836
        %v1838 = vpop.xlane.xlu0 %1837
        %v1839 = vsel %vm740, %v1804, -inf
        %1840 = vmax.xlane.f32.xlu0 %v1839
        %v1841 = vpop.xlane.xlu0 %1840
        %v1842 = vsub.f32 %v1648, %v1808
        %v1843 = vsub.f32 %v1651, %v1811
        %v1844 = vsub.f32 %v1654, %v1814
        %v1845 = vsub.f32 %v1698, %v1817
        %v1846 = vsub.f32 %v1701, %v1820
        %v1847 = vsub.f32 %v1704, %v1823
        %v1848 = vsub.f32 %v1748, %v1826
        %v1849 = vsub.f32 %v1751, %v1829
        %v1850 = vsub.f32 %v1754, %v1832
        %v1851 = vsub.f32 %v1798, %v1835
        %v1852 = vsub.f32 %v1801, %v1838
        %v1853 = vsub.f32 %v1804, %v1841
        %v1854 = vmul.f32 %v1842, 1.442695
        %v1855 = vpow.pop %v1854
        %v1856 = vmul.f32 %v1843, 1.442695
        %v1857 = vpow.pop %v1856
        %v1858 = vmul.f32 %v1844, 1.442695
        %v1859 = vpow.pop %v1858
        %v1860 = vmul.f32 %v1845, 1.442695
        %v1861 = vpow.pop %v1860
        %v1862 = vmul.f32 %v1846, 1.442695
        %v1863 = vpow.pop %v1862
        %v1864 = vmul.f32 %v1847, 1.442695
        %v1865 = vpow.pop %v1864
        %v1866 = vmul.f32 %v1848, 1.442695
        %v1867 = vpow.pop %v1866
        %v1868 = vmul.f32 %v1849, 1.442695
        %v1869 = vpow.pop %v1868
        %v1870 = vmul.f32 %v1850, 1.442695
        %v1871 = vpow.pop %v1870
        %v1872 = vmul.f32 %v1851, 1.442695
        %v1873 = vpow.pop %v1872
        %v1874 = vmul.f32 %v1852, 1.442695
        %v1875 = vpow.pop %v1874
        %v1876 = vmul.f32 %v1853, 1.442695
        %v1877 = vpow.pop %v1876
        %v1878 = vsel %vm733, %v1855, 0.0
        %1879 = vadd.xlane.f32.xlu0 %v1878
        %v1880 = vpop.xlane.xlu0 %1879
        %v1881 = vsel %vm733, %v1857, 0.0
        %1882 = vadd.xlane.f32.xlu0 %v1881
        %v1883 = vpop.xlane.xlu0 %1882
        %v1884 = vsel %vm740, %v1859, 0.0
        %1885 = vadd.xlane.f32.xlu0 %v1884
        %v1886 = vpop.xlane.xlu0 %1885
        %v1887 = vsel %vm733, %v1861, 0.0
        %1888 = vadd.xlane.f32.xlu0 %v1887
        %v1889 = vpop.xlane.xlu0 %1888
        %v1890 = vsel %vm733, %v1863, 0.0
        %1891 = vadd.xlane.f32.xlu0 %v1890
        %v1892 = vpop.xlane.xlu0 %1891
        %v1893 = vsel %vm740, %v1865, 0.0
        %1894 = vadd.xlane.f32.xlu0 %v1893
        %v1895 = vpop.xlane.xlu0 %1894
        %v1896 = vsel %vm733, %v1867, 0.0
        %1897 = vadd.xlane.f32.xlu0 %v1896
        %v1898 = vpop.xlane.xlu0 %1897
        %v1899 = vsel %vm733, %v1869, 0.0
        %1900 = vadd.xlane.f32.xlu0 %v1899
        %v1901 = vpop.xlane.xlu0 %1900
        %v1902 = vsel %vm740, %v1871, 0.0
        %1903 = vadd.xlane.f32.xlu0 %v1902
        %v1904 = vpop.xlane.xlu0 %1903
        %v1905 = vsel %vm733, %v1873, 0.0
        %1906 = vadd.xlane.f32.xlu0 %v1905
        %v1907 = vpop.xlane.xlu0 %1906
        %v1908 = vsel %vm733, %v1875, 0.0
        %1909 = vadd.xlane.f32.xlu0 %v1908
        %v1910 = vpop.xlane.xlu0 %1909
        %v1911 = vsel %vm740, %v1877, 0.0
        %1912 = vadd.xlane.f32.xlu0 %v1911
        %v1913 = vpop.xlane.xlu0 %1912
        %v1914 = vrcp.pop %v1880
        %v1915 = vrcp.pop %v1883
        %v1916 = vrcp.pop %v1886
        %v1917 = vrcp.pop %v1889
        %v1918 = vrcp.pop %v1892
        %v1919 = vrcp.pop %v1895
        %v1920 = vrcp.pop %v1898
        %v1921 = vrcp.pop %v1901
        %v1922 = vrcp.pop %v1904
        %v1923 = vrcp.pop %v1907
        %v1924 = vrcp.pop %v1910
        %v1925 = vrcp.pop %v1913
        %v1926 = vmul.f32 %v1855, %v1914
        %v1927 = vmul.f32 %v1857, %v1915
        %v1928 = vmul.f32 %v1859, %v1916
        %v1929 = vmul.f32 %v1861, %v1917
        %v1930 = vmul.f32 %v1863, %v1918
        %v1931 = vmul.f32 %v1865, %v1919
        %v1932 = vmul.f32 %v1867, %v1920
        %v1933 = vmul.f32 %v1869, %v1921
        %v1934 = vmul.f32 %v1871, %v1922
        %v1935 = vmul.f32 %v1873, %v1923
        %v1936 = vmul.f32 %v1875, %v1924
        %v1937 = vmul.f32 %v1877, %v1925
        %s1938 = scalar_lea.vmem %s5, 32
        %v1939 = vld [vmem:[%s1938] sm:$0xff]
        %v1940 = vld [vmem:[%s1938 + $0x8] sm:$0xff]
        %v1941 = vld [vmem:[%s1938 + $0x10] sm:$0xff]
        %v1942 = vld [vmem:[%s1938 + $0x18] sm:$0xff]
        %1943 = vrot.lane.b32.xlu0 %v1601, 64
        %v1944 = vpop.permute.xlu0 %1943
        %1945 = vrot.lane.b32.xlu0 %v1604, 64
        %v1946 = vpop.permute.xlu0 %1945
        %1947 = vrot.lane.b32.xlu0 %v1607, 64
        %v1948 = vpop.permute.xlu0 %1947
        %v1952 = vsel %vm733, %v1926, 0
        %v1955 = vsel %vm733, %v1927, 0
        %v1958 = vsel %vm733, %v1928, 0
        %v1960 = vsel %vm888, %v1948, 0
        %1962 = vmatpush.msra.mxu0 0.0
        %1963 = vmatpush.msra.mxu0 0.0
        %1964 = vmatpush.msra.mxu0 0.0
        %1965 = vmatpush.msra.mxu0 0.0
        %1966 = vmatpush.msra.mxu0 0.0
        %1967 = vmatpush.msra.mxu0 0.0
        %1968 = vmatpush.msra.mxu0 0.0
        %1969 = vmatpush.msra.mxu0 0.0
        %1970 = vmatpush.msra.mxu0 0.0
        %1971 = vmatpush.msra.mxu0 0.0
        %1972 = vmatpush.msra.mxu0 0.0
        %1973 = vmatpush.msra.mxu0 0.0
        %1974 = vmatpush.msra.mxu0 0.0
        %1975 = vmatpush.msra.mxu0 %v1960
        %1976 = vmatpush.msra.mxu0 %v1946
        %1977 = vmatpush.msra.mxu0 %v1944
        %1978 = vmatmul.f32.gmra.mxu0 %v1952
        %v1979 = vpop.f32.mrf.mxu0
        %v1980 = vadd.f32 0.0, %v1979
        %1981 = vmatmul.f32.gmra.mxu0 %v1955
        %v1982 = vpop.f32.mrf.mxu0
        %v1983 = vadd.f32 0.0, %v1982
        %1984 = vmatmul.f32.gmra.mxu0 %v1958
        %v1985 = vpop.f32.mrf.mxu0
        %v1986 = vadd.f32 0.0, %v1985
        %1987 = vdwg.mxu0
        %1988 = vrot.lane.b32.xlu0 %v1601, 56
        %v1989 = vpop.permute.xlu0 %1988
        %1990 = vrot.lane.b32.xlu0 %v1604, 56
        %v1991 = vpop.permute.xlu0 %1990
        %1992 = vrot.lane.b32.xlu0 %v1607, 56
        %v1993 = vpop.permute.xlu0 %1992
        %v1997 = vsel %vm733, %v1929, 0
        %v2000 = vsel %vm733, %v1930, 0
        %v2003 = vsel %vm733, %v1931, 0
        %v2005 = vsel %vm888, %v1993, 0
        %2007 = vmatpush.msra.mxu0 0.0
        %2008 = vmatpush.msra.mxu0 0.0
        %2009 = vmatpush.msra.mxu0 0.0
        %2010 = vmatpush.msra.mxu0 0.0
        %2011 = vmatpush.msra.mxu0 0.0
        %2012 = vmatpush.msra.mxu0 0.0
        %2013 = vmatpush.msra.mxu0 0.0
        %2014 = vmatpush.msra.mxu0 0.0
        %2015 = vmatpush.msra.mxu0 0.0
        %2016 = vmatpush.msra.mxu0 0.0
        %2017 = vmatpush.msra.mxu0 0.0
        %2018 = vmatpush.msra.mxu0 0.0
        %2019 = vmatpush.msra.mxu0 0.0
        %2020 = vmatpush.msra.mxu0 %v2005
        %2021 = vmatpush.msra.mxu0 %v1991
        %2022 = vmatpush.msra.mxu0 %v1989
        %2023 = vmatmul.f32.gmra.mxu0 %v1997
        %v2024 = vpop.f32.mrf.mxu0
        %v2025 = vadd.f32 0.0, %v2024
        %2026 = vmatmul.f32.gmra.mxu0 %v2000
        %v2027 = vpop.f32.mrf.mxu0
        %v2028 = vadd.f32 0.0, %v2027
        %2029 = vmatmul.f32.gmra.mxu0 %v2003
        %v2030 = vpop.f32.mrf.mxu0
        %v2031 = vadd.f32 0.0, %v2030
        %2032 = vdwg.mxu0
        %v2034 = vsel %vm544, %v2025, 0
        %v2037 = vsel %vm544, %v2028, 0
        %v2040 = vsel %vm544, %v2031, 0
        %2042 = vmatpush.msra.mxu0 0.0
        %2043 = vmatpush.msra.mxu0 0.0
        %2044 = vmatpush.msra.mxu0 0.0
        %2045 = vmatpush.msra.mxu0 0.0
        %2046 = vmatpush.msra.mxu0 0.0
        %2047 = vmatpush.msra.mxu0 0.0
        %2048 = vmatpush.msra.mxu0 0.0
        %2049 = vmatpush.msra.mxu0 0.0
        %2050 = vmatpush.msra.mxu0 0.0
        %2051 = vmatpush.msra.mxu0 0.0
        %2052 = vmatpush.msra.mxu0 0.0
        %2053 = vmatpush.msra.mxu0 0.0
        %2054 = vmatpush.msra.mxu0 0.0
        %2055 = vmatpush.msra.mxu0 0.0
        %2056 = vmatpush.msra.mxu0 0.0
        %2057 = vmatpush.msra.mxu0 %v1940
        %2058 = vmatmul.f32.gmra.mxu0 %v2034
        %v2059 = vpop.f32.mrf.mxu0
        %v2060 = vadd.f32 0.0, %v2059
        %2061 = vmatmul.f32.gmra.mxu0 %v2037
        %v2062 = vpop.f32.mrf.mxu0
        %v2063 = vadd.f32 0.0, %v2062
        %2064 = vmatmul.f32.gmra.mxu0 %v2040
        %v2065 = vpop.f32.mrf.mxu0
        %v2066 = vadd.f32 0.0, %v2065
        %2067 = vdwg.mxu0
        %v2069 = vsel %vm544, %v1980, 0
        %v2072 = vsel %vm544, %v1983, 0
        %v2075 = vsel %vm544, %v1986, 0
        %2077 = vmatpush.msra.mxu0 0.0
        %2078 = vmatpush.msra.mxu0 0.0
        %2079 = vmatpush.msra.mxu0 0.0
        %2080 = vmatpush.msra.mxu0 0.0
        %2081 = vmatpush.msra.mxu0 0.0
        %2082 = vmatpush.msra.mxu0 0.0
        %2083 = vmatpush.msra.mxu0 0.0
        %2084 = vmatpush.msra.mxu0 0.0
        %2085 = vmatpush.msra.mxu0 0.0
        %2086 = vmatpush.msra.mxu0 0.0
        %2087 = vmatpush.msra.mxu0 0.0
        %2088 = vmatpush.msra.mxu0 0.0
        %2089 = vmatpush.msra.mxu0 0.0
        %2090 = vmatpush.msra.mxu0 0.0
        %2091 = vmatpush.msra.mxu0 0.0
        %2092 = vmatpush.msra.mxu0 %v1939
        %2093 = vmatmul.f32.gmra.mxu0 %v2069
        %v2094 = vpop.f32.mrf.mxu0
        %v2095 = vadd.f32 %v2060, %v2094
        %2096 = vmatmul.f32.gmra.mxu0 %v2072
        %v2097 = vpop.f32.mrf.mxu0
        %v2098 = vadd.f32 %v2063, %v2097
        %2099 = vmatmul.f32.gmra.mxu0 %v2075
        %v2100 = vpop.f32.mrf.mxu0
        %v2101 = vadd.f32 %v2066, %v2100
        %2102 = vdwg.mxu0
        %2103 = vrot.lane.b32.xlu0 %v1601, 48
        %v2104 = vpop.permute.xlu0 %2103
        %2105 = vrot.lane.b32.xlu0 %v1604, 48
        %v2106 = vpop.permute.xlu0 %2105
        %2107 = vrot.lane.b32.xlu0 %v1607, 48
        %v2108 = vpop.permute.xlu0 %2107
        %v2112 = vsel %vm733, %v1932, 0
        %v2115 = vsel %vm733, %v1933, 0
        %v2118 = vsel %vm733, %v1934, 0
        %v2120 = vsel %vm888, %v2108, 0
        %2122 = vmatpush.msra.mxu0 0.0
        %2123 = vmatpush.msra.mxu0 0.0
        %2124 = vmatpush.msra.mxu0 0.0
        %2125 = vmatpush.msra.mxu0 0.0
        %2126 = vmatpush.msra.mxu0 0.0
        %2127 = vmatpush.msra.mxu0 0.0
        %2128 = vmatpush.msra.mxu0 0.0
        %2129 = vmatpush.msra.mxu0 0.0
        %2130 = vmatpush.msra.mxu0 0.0
        %2131 = vmatpush.msra.mxu0 0.0
        %2132 = vmatpush.msra.mxu0 0.0
        %2133 = vmatpush.msra.mxu0 0.0
        %2134 = vmatpush.msra.mxu0 0.0
        %2135 = vmatpush.msra.mxu0 %v2120
        %2136 = vmatpush.msra.mxu0 %v2106
        %2137 = vmatpush.msra.mxu0 %v2104
        %2138 = vmatmul.f32.gmra.mxu0 %v2112
        %v2139 = vpop.f32.mrf.mxu0
        %v2140 = vadd.f32 0.0, %v2139
        %2141 = vmatmul.f32.gmra.mxu0 %v2115
        %v2142 = vpop.f32.mrf.mxu0
        %v2143 = vadd.f32 0.0, %v2142
        %2144 = vmatmul.f32.gmra.mxu0 %v2118
        %v2145 = vpop.f32.mrf.mxu0
        %v2146 = vadd.f32 0.0, %v2145
        %2147 = vdwg.mxu0
        %v2149 = vsel %vm544, %v2140, 0
        %v2152 = vsel %vm544, %v2143, 0
        %v2155 = vsel %vm544, %v2146, 0
        %2157 = vmatpush.msra.mxu0 0.0
        %2158 = vmatpush.msra.mxu0 0.0
        %2159 = vmatpush.msra.mxu0 0.0
        %2160 = vmatpush.msra.mxu0 0.0
        %2161 = vmatpush.msra.mxu0 0.0
        %2162 = vmatpush.msra.mxu0 0.0
        %2163 = vmatpush.msra.mxu0 0.0
        %2164 = vmatpush.msra.mxu0 0.0
        %2165 = vmatpush.msra.mxu0 0.0
        %2166 = vmatpush.msra.mxu0 0.0
        %2167 = vmatpush.msra.mxu0 0.0
        %2168 = vmatpush.msra.mxu0 0.0
        %2169 = vmatpush.msra.mxu0 0.0
        %2170 = vmatpush.msra.mxu0 0.0
        %2171 = vmatpush.msra.mxu0 0.0
        %2172 = vmatpush.msra.mxu0 %v1941
        %2173 = vmatmul.f32.gmra.mxu0 %v2149
        %v2174 = vpop.f32.mrf.mxu0
        %v2175 = vadd.f32 0.0, %v2174
        %2176 = vmatmul.f32.gmra.mxu0 %v2152
        %v2177 = vpop.f32.mrf.mxu0
        %v2178 = vadd.f32 0.0, %v2177
        %2179 = vmatmul.f32.gmra.mxu0 %v2155
        %v2180 = vpop.f32.mrf.mxu0
        %v2181 = vadd.f32 0.0, %v2180
        %2182 = vdwg.mxu0
        %v2183 = vadd.f32 %v2095, %v2175
        %v2184 = vadd.f32 %v2098, %v2178
        %v2185 = vadd.f32 %v2101, %v2181
        %2186 = vrot.lane.b32.xlu0 %v1601, 40
        %v2187 = vpop.permute.xlu0 %2186
        %2188 = vrot.lane.b32.xlu0 %v1604, 40
        %v2189 = vpop.permute.xlu0 %2188
        %2190 = vrot.lane.b32.xlu0 %v1607, 40
        %v2191 = vpop.permute.xlu0 %2190
        %v2195 = vsel %vm733, %v1935, 0
        %v2198 = vsel %vm733, %v1936, 0
        %v2201 = vsel %vm733, %v1937, 0
        %v2203 = vsel %vm888, %v2191, 0
        %2205 = vmatpush.msra.mxu0 0.0
        %2206 = vmatpush.msra.mxu0 0.0
        %2207 = vmatpush.msra.mxu0 0.0
        %2208 = vmatpush.msra.mxu0 0.0
        %2209 = vmatpush.msra.mxu0 0.0
        %2210 = vmatpush.msra.mxu0 0.0
        %2211 = vmatpush.msra.mxu0 0.0
        %2212 = vmatpush.msra.mxu0 0.0
        %2213 = vmatpush.msra.mxu0 0.0
        %2214 = vmatpush.msra.mxu0 0.0
        %2215 = vmatpush.msra.mxu0 0.0
        %2216 = vmatpush.msra.mxu0 0.0
        %2217 = vmatpush.msra.mxu0 0.0
        %2218 = vmatpush.msra.mxu0 %v2203
        %2219 = vmatpush.msra.mxu0 %v2189
        %2220 = vmatpush.msra.mxu0 %v2187
        %2221 = vmatmul.f32.gmra.mxu0 %v2195
        %v2222 = vpop.f32.mrf.mxu0
        %v2223 = vadd.f32 0.0, %v2222
        %2224 = vmatmul.f32.gmra.mxu0 %v2198
        %v2225 = vpop.f32.mrf.mxu0
        %v2226 = vadd.f32 0.0, %v2225
        %2227 = vmatmul.f32.gmra.mxu0 %v2201
        %v2228 = vpop.f32.mrf.mxu0
        %v2229 = vadd.f32 0.0, %v2228
        %2230 = vdwg.mxu0
        %v2232 = vsel %vm544, %v2223, 0
        %v2235 = vsel %vm544, %v2226, 0
        %v2238 = vsel %vm544, %v2229, 0
        %2240 = vmatpush.msra.mxu0 0.0
        %2241 = vmatpush.msra.mxu0 0.0
        %2242 = vmatpush.msra.mxu0 0.0
        %2243 = vmatpush.msra.mxu0 0.0
        %2244 = vmatpush.msra.mxu0 0.0
        %2245 = vmatpush.msra.mxu0 0.0
        %2246 = vmatpush.msra.mxu0 0.0
        %2247 = vmatpush.msra.mxu0 0.0
        %2248 = vmatpush.msra.mxu0 0.0
        %2249 = vmatpush.msra.mxu0 0.0
        %2250 = vmatpush.msra.mxu0 0.0
        %2251 = vmatpush.msra.mxu0 0.0
        %2252 = vmatpush.msra.mxu0 0.0
        %2253 = vmatpush.msra.mxu0 0.0
        %2254 = vmatpush.msra.mxu0 0.0
        %2255 = vmatpush.msra.mxu0 %v1942
        %2256 = vmatmul.f32.gmra.mxu0 %v2232
        %v2257 = vpop.f32.mrf.mxu0
        %v2258 = vadd.f32 0.0, %v2257
        %2259 = vmatmul.f32.gmra.mxu0 %v2235
        %v2260 = vpop.f32.mrf.mxu0
        %v2261 = vadd.f32 0.0, %v2260
        %2262 = vmatmul.f32.gmra.mxu0 %v2238
        %v2263 = vpop.f32.mrf.mxu0
        %v2264 = vadd.f32 0.0, %v2263
        %2265 = vdwg.mxu0
        %v2266 = vadd.f32 %v2183, %v2258
        %v2267 = vadd.f32 %v2184, %v2261
        %v2268 = vadd.f32 %v2185, %v2264
        %v2269 = vld [vmem:[%s2 + $0x1f] sm:$0x1]
        %v2270 = vperm.slane %v2269, 0
        %v2271 = vadd.f32 %v2266, %v2270
        %v2272 = vadd.f32 %v2267, %v2270
        %v2273 = vadd.f32 %v2268, %v2270
        %v2274 = vadd.f32 %v1564, %v2271
        %v2275 = vadd.f32 %v1565, %v2272
        %v2276 = vadd.f32 %v1566, %v2273
        %v2277 = vld [vmem:[%s2 + $0x20] sm:$0x1]
        %v2278 = vld [vmem:[%s2 + $0x21] sm:$0x1]
        %v2279 = vsel %vm411, %v2274, 0.0
        %2280 = vadd.xlane.f32.xlu0 %v2279
        %v2281 = vpop.xlane.xlu0 %2280
        %v2282 = vsel %vm411, %v2275, 0.0
        %2283 = vadd.xlane.f32.xlu0 %v2282
        %v2284 = vpop.xlane.xlu0 %2283
        %v2285 = vsel %vm418, %v2276, 0.0
        %2286 = vadd.xlane.f32.xlu0 %v2285
        %v2287 = vpop.xlane.xlu0 %2286
        %v2288 = vmul.f32 %v2281, %v428
        %v2289 = vmul.f32 %v2284, %v428
        %v2290 = vmul.f32 %v2287, %v428
        %v2291 = vsub.f32 %v2274, %v2288
        %v2292 = vsub.f32 %v2275, %v2289
        %v2293 = vsub.f32 %v2276, %v2290
        %v2294 = vmul.f32 %v2291, %v2291
        %v2295 = vmul.f32 %v2292, %v2292
        %v2296 = vmul.f32 %v2293, %v2293
        %v2297 = vsel %vm411, %v2294, 0.0
        %2298 = vadd.xlane.f32.xlu0 %v2297
        %v2299 = vpop.xlane.xlu0 %2298
        %v2300 = vsel %vm411, %v2295, 0.0
        %2301 = vadd.xlane.f32.xlu0 %v2300
        %v2302 = vpop.xlane.xlu0 %2301
        %v2303 = vsel %vm418, %v2296, 0.0
        %2304 = vadd.xlane.f32.xlu0 %v2303
        %v2305 = vpop.xlane.xlu0 %2304
        %v2306 = vmul.f32 %v2299, %v428
        %v2307 = vmul.f32 %v2302, %v428
        %v2308 = vmul.f32 %v2305, %v428
        %v2309 = vadd.f32 %v2306, 1e-05
        %v2310 = vadd.f32 %v2307, 1e-05
        %v2311 = vadd.f32 %v2308, 1e-05
        %v2312 = vrsqrt.pop %v2309
        %v2313 = vmul.f32 %v2312, %v2309
        %v2314 = vmul.f32 %v2313, %v2312
        %v2315 = vmul.f32 0.5, %v2314
        %v2316 = vsub.f32 1.5, %v2315
        %v2317 = vmul.f32 %v2312, %v2316
        %vm2318 = vweird.f32 %v2309
        %vm2319 = vweird.f32 %v2312
        %vm2320 = vmor %vm2318, %vm2319
        %v2321 = vsel %vm2320, %v2312, %v2317
        %v2322 = vrsqrt.pop %v2310
        %v2323 = vmul.f32 %v2322, %v2310
        %v2324 = vmul.f32 %v2323, %v2322
        %v2325 = vmul.f32 0.5, %v2324
        %v2326 = vsub.f32 1.5, %v2325
        %v2327 = vmul.f32 %v2322, %v2326
        %vm2328 = vweird.f32 %v2310
        %vm2329 = vweird.f32 %v2322
        %vm2330 = vmor %vm2328, %vm2329
        %v2331 = vsel %vm2330, %v2322, %v2327
        %v2332 = vrsqrt.pop %v2311
        %v2333 = vmul.f32 %v2332, %v2311
        %v2334 = vmul.f32 %v2333, %v2332
        %v2335 = vmul.f32 0.5, %v2334
        %v2336 = vsub.f32 1.5, %v2335
        %v2337 = vmul.f32 %v2332, %v2336
        %vm2338 = vweird.f32 %v2311
        %vm2339 = vweird.f32 %v2332
        %vm2340 = vmor %vm2338, %vm2339
        %v2341 = vsel %vm2340, %v2332, %v2337
        %v2342 = vmul.f32 %v2291, %v2321
        %v2343 = vmul.f32 %v2292, %v2331
        %v2344 = vmul.f32 %v2293, %v2341
        %v2345 = vperm.slane %v2277, 0
        %v2346 = vmul.f32 %v2342, %v2345
        %v2347 = vmul.f32 %v2343, %v2345
        %v2348 = vmul.f32 %v2344, %v2345
        %v2349 = vperm.slane %v2278, 0
        %v2350 = vadd.f32 %v2346, %v2349
        %v2351 = vadd.f32 %v2347, %v2349
        %v2352 = vadd.f32 %v2348, %v2349
        %s2353 = scalar_lea.vmem %s6, 32
        %v2354 = vld [vmem:[%s2353] sm:$0xff]
        %v2355 = vld [vmem:[%s2353 + $0x8] sm:$0xff]
        %v2356 = vld [vmem:[%s2353 + $0x10] sm:$0xff]
        %v2357 = vld [vmem:[%s2353 + $0x18] sm:$0xff]
        %v2358 = vld [vmem:[%s2 + $0x22] sm:$0x1]
        %v2359 = vperm.slane %v2358, 0
        %v2361 = vsel %vm411, %v2350, 0
        %v2364 = vsel %vm411, %v2351, 0
        %v2367 = vsel %vm411, %v2352, 0
        %2369 = vmatpush.msra.mxu0 0.0
        %2370 = vmatpush.msra.mxu0 0.0
        %2371 = vmatpush.msra.mxu0 0.0
        %2372 = vmatpush.msra.mxu0 0.0
        %2373 = vmatpush.msra.mxu0 0.0
        %2374 = vmatpush.msra.mxu0 0.0
        %2375 = vmatpush.msra.mxu0 0.0
        %2376 = vmatpush.msra.mxu0 0.0
        %2377 = vmatpush.msra.mxu0 0.0
        %2378 = vmatpush.msra.mxu0 0.0
        %2379 = vmatpush.msra.mxu0 0.0
        %2380 = vmatpush.msra.mxu0 0.0
        %2381 = vmatpush.msra.mxu0 %v2357
        %2382 = vmatpush.msra.mxu0 %v2356
        %2383 = vmatpush.msra.mxu0 %v2355
        %2384 = vmatpush.msra.mxu0 %v2354
        %2385 = vmatmul.f32.gmra.mxu0 %v2361
        %v2386 = vpop.f32.mrf.mxu0
        %v2387 = vadd.f32 %v2359, %v2386
        %2388 = vmatmul.f32.gmra.mxu0 %v2364
        %v2389 = vpop.f32.mrf.mxu0
        %v2390 = vadd.f32 %v2359, %v2389
        %2391 = vmatmul.f32.gmra.mxu0 %v2367
        %v2392 = vpop.f32.mrf.mxu0
        %v2393 = vadd.f32 %v2359, %v2392
        %2394 = vdwg.mxu0
        %v2395 = vmul.f32 %v2387, 0.5
        %v2396 = vmul.f32 %v2390, 0.5
        %v2397 = vmul.f32 %v2393, 0.5
        %v2398 = vmul.f32 %v2387, 0.70710677
        %v2399 = vmul.f32 %v2390, 0.70710677
        %v2400 = vmul.f32 %v2393, 0.70710677
        %v2401 = vand.u32 2147483647, %v2398
        %v2402 = vand.u32 2147483647, %v2399
        %v2403 = vand.u32 2147483647, %v2400
        %v2404 = vmul.f32 %v2401, 0.3275911
        %v2405 = vmul.f32 %v2402, 0.3275911
        %v2406 = vmul.f32 %v2403, 0.3275911
        %v2407 = vadd.f32 %v2404, 1.0
        %v2408 = vadd.f32 %v2405, 1.0
        %v2409 = vadd.f32 %v2406, 1.0
        %v2410 = vrcp.pop %v2407
        %v2411 = vmul.f32 %v2407, %v2410
        %v2412 = vsub.f32 1.0, %v2411
        %v2413 = vmul.f32 %v2410, %v2412
        %v2414 = vadd.f32 %v2410, %v2413
        %vm2415 = vweird.f32 %v2407
        %vm2416 = vweird.f32 %v2410
        %vm2417 = vmor %vm2415, %vm2416
        %v2418 = vsel %vm2417, %v2410, %v2414
        %v2419 = vand.u32 2147483647, %v2407
        %vm2420 = vcmp.eq.f32.partialorder %v2419, 8.507059e+37
        %v2421 = vand.u32 %v2407, 2147483648
        %v2422 = vor.u32 1.1754944e-38, %v2421
        %v2423 = vsel %vm2420, %v2422, %v2418
        %v2424 = vmul.f32 1.0, %v2423
        %v2425 = vrcp.pop %v2408
        %v2426 = vmul.f32 %v2408, %v2425
        %v2427 = vsub.f32 1.0, %v2426
        %v2428 = vmul.f32 %v2425, %v2427
        %v2429 = vadd.f32 %v2425, %v2428
        %vm2430 = vweird.f32 %v2408
        %vm2431 = vweird.f32 %v2425
        %vm2432 = vmor %vm2430, %vm2431
        %v2433 = vsel %vm2432, %v2425, %v2429
        %v2434 = vand.u32 2147483647, %v2408
        %vm2435 = vcmp.eq.f32.partialorder %v2434, 8.507059e+37
        %v2436 = vand.u32 %v2408, 2147483648
        %v2437 = vor.u32 1.1754944e-38, %v2436
        %v2438 = vsel %vm2435, %v2437, %v2433
        %v2439 = vmul.f32 1.0, %v2438
        %v2440 = vrcp.pop %v2409
        %v2441 = vmul.f32 %v2409, %v2440
        %v2442 = vsub.f32 1.0, %v2441
        %v2443 = vmul.f32 %v2440, %v2442
        %v2444 = vadd.f32 %v2440, %v2443
        %vm2445 = vweird.f32 %v2409
        %vm2446 = vweird.f32 %v2440
        %vm2447 = vmor %vm2445, %vm2446
        %v2448 = vsel %vm2447, %v2440, %v2444
        %v2449 = vand.u32 2147483647, %v2409
        %vm2450 = vcmp.eq.f32.partialorder %v2449, 8.507059e+37
        %v2451 = vand.u32 %v2409, 2147483648
        %v2452 = vor.u32 1.1754944e-38, %v2451
        %v2453 = vsel %vm2450, %v2452, %v2448
        %v2454 = vmul.f32 1.0, %v2453
        %v2455 = vmul.f32 %v2424, 1.0614054
        %v2456 = vmul.f32 %v2439, 1.0614054
        %v2457 = vmul.f32 %v2454, 1.0614054
        %v2458 = vadd.f32 %v2455, -1.4531521
        %v2459 = vadd.f32 %v2456, -1.4531521
        %v2460 = vadd.f32 %v2457, -1.4531521
        %v2461 = vmul.f32 %v2424, %v2458
        %v2462 = vmul.f32 %v2439, %v2459
        %v2463 = vmul.f32 %v2454, %v2460
        %v2464 = vadd.f32 %v2461, 1.4214138
        %v2465 = vadd.f32 %v2462, 1.4214138
        %v2466 = vadd.f32 %v2463, 1.4214138
        %v2467 = vmul.f32 %v2424, %v2464
        %v2468 = vmul.f32 %v2439, %v2465
        %v2469 = vmul.f32 %v2454, %v2466
        %v2470 = vadd.f32 %v2467, -0.28449672
        %v2471 = vadd.f32 %v2468, -0.28449672
        %v2472 = vadd.f32 %v2469, -0.28449672
        %v2473 = vmul.f32 %v2424, %v2470
        %v2474 = vmul.f32 %v2439, %v2471
        %v2475 = vmul.f32 %v2454, %v2472
        %v2476 = vadd.f32 %v2473, 0.2548296
        %v2477 = vadd.f32 %v2474, 0.2548296
        %v2478 = vadd.f32 %v2475, 0.2548296
        %v2479 = vmul.f32 %v2424, %v2476
        %v2480 = vmul.f32 %v2439, %v2477
        %v2481 = vmul.f32 %v2454, %v2478
        %v2482 = vsub.f32 0.0, %v2401
        %v2483 = vsub.f32 0.0, %v2402
        %v2484 = vsub.f32 0.0, %v2403
        %v2485 = vmul.f32 %v2482, %v2401
        %v2486 = vmul.f32 %v2483, %v2402
        %v2487 = vmul.f32 %v2484, %v2403
        %v2488 = vmul.f32 %v2485, 1.442695
        %v2489 = vpow.pop %v2488
        %v2490 = vmul.f32 %v2486, 1.442695
        %v2491 = vpow.pop %v2490
        %v2492 = vmul.f32 %v2487, 1.442695
        %v2493 = vpow.pop %v2492
        %v2494 = vmul.f32 %v2479, %v2489
        %v2495 = vmul.f32 %v2480, %v2491
        %v2496 = vmul.f32 %v2481, %v2493
        %v2497 = vsub.f32 1.0, %v2494
        %v2498 = vsub.f32 1.0, %v2495
        %v2499 = vsub.f32 1.0, %v2496
        %vm2500 = vcmp.ge.f32.partialorder %v2398, 0.0
        %vm2501 = vcmp.ge.f32.partialorder %v2399, 0.0
        %vm2502 = vcmp.ge.f32.partialorder %v2400, 0.0
        %v2503 = vsub.f32 0.0, %v2497
        %v2504 = vsub.f32 0.0, %v2498
        %v2505 = vsub.f32 0.0, %v2499
        %v2506 = vsel %vm2500, %v2497, %v2503
        %v2507 = vsel %vm2501, %v2498, %v2504
        %v2508 = vsel %vm2502, %v2499, %v2505
        %v2509 = vadd.f32 %v2506, 1.0
        %v2510 = vadd.f32 %v2507, 1.0
        %v2511 = vadd.f32 %v2508, 1.0
        %v2512 = vmul.f32 %v2395, %v2509
        %v2513 = vmul.f32 %v2396, %v2510
        %v2514 = vmul.f32 %v2397, %v2511
        %s2515 = scalar_lea.vmem %s7, 64
        %v2516 = vld [vmem:[%s2515] sm:$0xff]
        %v2517 = vld [vmem:[%s2515 + $0x8] sm:$0xff]
        %v2518 = vld [vmem:[%s2515 + $0x10] sm:$0xff]
        %v2519 = vld [vmem:[%s2515 + $0x18] sm:$0xff]
        %v2520 = vld [vmem:[%s2515 + $0x20] sm:$0xff]
        %v2521 = vld [vmem:[%s2515 + $0x28] sm:$0xff]
        %v2522 = vld [vmem:[%s2515 + $0x30] sm:$0xff]
        %v2523 = vld [vmem:[%s2515 + $0x38] sm:$0xff]
        %v2524 = vld [vmem:[%s2 + $0x23] sm:$0x1]
        %v2525 = vperm.slane %v2524, 0
        %v2527 = vsel %vm368, %v2512, 0
        %v2530 = vsel %vm368, %v2513, 0
        %v2533 = vsel %vm368, %v2514, 0
        %2535 = vmatpush.msra.mxu0 0.0
        %2536 = vmatpush.msra.mxu0 0.0
        %2537 = vmatpush.msra.mxu0 0.0
        %2538 = vmatpush.msra.mxu0 0.0
        %2539 = vmatpush.msra.mxu0 0.0
        %2540 = vmatpush.msra.mxu0 0.0
        %2541 = vmatpush.msra.mxu0 0.0
        %2542 = vmatpush.msra.mxu0 0.0
        %2543 = vmatpush.msra.mxu0 %v2523
        %2544 = vmatpush.msra.mxu0 %v2522
        %2545 = vmatpush.msra.mxu0 %v2521
        %2546 = vmatpush.msra.mxu0 %v2520
        %2547 = vmatpush.msra.mxu0 %v2519
        %2548 = vmatpush.msra.mxu0 %v2518
        %2549 = vmatpush.msra.mxu0 %v2517
        %2550 = vmatpush.msra.mxu0 %v2516
        %2551 = vmatmul.f32.gmra.mxu0 %v2527
        %v2552 = vpop.f32.mrf.mxu0
        %2553 = vmatmul.f32.gmra.mxu0 %v2530
        %v2554 = vpop.f32.mrf.mxu0
        %v2555 = vadd.f32 %v2525, %v2554
        %2556 = vmatmul.f32.gmra.mxu0 %v2533
        %v2557 = vpop.f32.mrf.mxu0
        %2558 = vdwg.mxu0
        %v2559 = vadd.f32 %v2351, %v2555
        %v2560 = vld [vmem:[%s2 + $0x24] sm:$0x1]
        %v2561 = vld [vmem:[%s2 + $0x25] sm:$0x1]
        %v2562 = vsel %vm411, %v2559, 0.0
        %2563 = vadd.xlane.f32.xlu0 %v2562
        %v2564 = vpop.xlane.xlu0 %2563
        %v2565 = vmul.f32 %v2564, %v428
        %v2566 = vsub.f32 %v2559, %v2565
        %v2567 = vmul.f32 %v2566, %v2566
        %v2568 = vsel %vm411, %v2567, 0.0
        %2569 = vadd.xlane.f32.xlu0 %v2568
        %v2570 = vpop.xlane.xlu0 %2569
        %v2571 = vmul.f32 %v2570, %v428
        %v2572 = vadd.f32 %v2571, 1e-05
        %v2573 = vrsqrt.pop %v2572
        %v2574 = vmul.f32 %v2573, %v2572
        %v2575 = vmul.f32 %v2574, %v2573
        %v2576 = vmul.f32 0.5, %v2575
        %v2577 = vsub.f32 1.5, %v2576
        %v2578 = vmul.f32 %v2573, %v2577
        %vm2579 = vweird.f32 %v2572
        %vm2580 = vweird.f32 %v2573
        %vm2581 = vmor %vm2579, %vm2580
        %v2582 = vsel %vm2581, %v2573, %v2578
        %v2583 = vmul.f32 %v2566, %v2582
        %v2584 = vperm.slane %v2560, 0
        %v2585 = vmul.f32 %v2583, %v2584
        %v2586 = vperm.slane %v2561, 0
        %v2587 = vadd.f32 %v2585, %v2586
        %v2588 = vsel %vm411, %v2587, 0.0
        %2589 = vadd.xlane.f32.xlu0 %v2588
        %v2590 = vpop.xlane.xlu0 %2589
        %v2591 = vmul.f32 %v2590, %v428
        %v2592 = vsub.f32 %v2587, %v2591
        %v2593 = vmul.f32 %v2592, %v2592
        %v2594 = vsel %vm411, %v2593, 0.0
        %2595 = vadd.xlane.f32.xlu0 %v2594
        %v2596 = vpop.xlane.xlu0 %2595
        %v2597 = vmul.f32 %v2596, %v428
        %v2598 = vadd.f32 %v2597, 1e-05
        %v2599 = vrsqrt.pop %v2598
        %v2600 = vmul.f32 %v2599, %v2598
        %v2601 = vmul.f32 %v2600, %v2599
        %v2602 = vmul.f32 0.5, %v2601
        %v2603 = vsub.f32 1.5, %v2602
        %v2604 = vmul.f32 %v2599, %v2603
        %vm2605 = vweird.f32 %v2598
        %vm2606 = vweird.f32 %v2599
        %vm2607 = vmor %vm2605, %vm2606
        %v2608 = vsel %vm2607, %v2599, %v2604
        %v2609 = vmul.f32 %v2592, %v2608
        %v2610 = vperm.slane %v350, 0
        %v2611 = vmul.f32 %v2609, %v2610
        %v2612 = vperm.slane %v351, 0
        %v2613 = vadd.f32 %v2611, %v2612
        %v2614 = vperm.slane %v352, 0
        %v2616 = vsel %vm411, %v2613, 0
        %2618 = vmatpush.msra.mxu0 0.0
        %2619 = vmatpush.msra.mxu0 0.0
        %2620 = vmatpush.msra.mxu0 0.0
        %2621 = vmatpush.msra.mxu0 0.0
        %2622 = vmatpush.msra.mxu0 0.0
        %2623 = vmatpush.msra.mxu0 0.0
        %2624 = vmatpush.msra.mxu0 0.0
        %2625 = vmatpush.msra.mxu0 0.0
        %2626 = vmatpush.msra.mxu0 0.0
        %2627 = vmatpush.msra.mxu0 0.0
        %2628 = vmatpush.msra.mxu0 0.0
        %2629 = vmatpush.msra.mxu0 0.0
        %2630 = vmatpush.msra.mxu0 %v364
        %2631 = vmatpush.msra.mxu0 %v363
        %2632 = vmatpush.msra.mxu0 %v362
        %2633 = vmatpush.msra.mxu0 %v361
        %2634 = vmatmul.f32.gmra.mxu0 %v2616
        %v2635 = vpop.f32.mrf.mxu0
        %v2636 = vadd.f32 %v2614, %v2635
        %2637 = vdwg.mxu0
        %2638 = vst [vmem:[%s336] sm:$0xff] %v2636
        %s2639 = sand.u32 %s230, 1
        %s2640 = scalar_lea.sflag [#allocation3], %s2639
        %s2641 = sand.u32 %s230, 1
        %s2642 = smul.addr %s2641, 8
        %s2643 = scalar_lea.vmem [#allocation2], %s2642
        // Predicated region
        $region57: #{tpu_custom_call.1} parent=55 // pred_check
          %p2644 = pneg %p240
        $region58: #{tpu_custom_call.1} parent=55 // pred_check_branch
          %2646 = sbr.rel (%p2644) target = $region60
        $region59: #{tpu_custom_call.1} parent=55 // pred_region
          %2648 = vsyncadd %s2640, 0
          %s2649 = smul.addr %s23, 8
          %s2650 = scalar_lea.hbm %s9, %s2649
          %s2652 = sshll.u32 %s2643, 4
          %s2653 = int_to_ptr.vmem [resolvable:$true] %s2652
          %s2654 = sshll.u32 %s2650, 4
          %s2655 = int_to_ptr.hbm [resolvable:$true] %s2654
          %2657 = dma.vmem_to_hbm [thread:$0]  %s2653, 128, %s2655, %s2640
        $region60: #{tpu_custom_call.1} parent=55 // pred_fallthru
          _
      $region56: #{tpu_custom_call.1} parent=5 // pred_fallthru
        _
      %p2658 = scmp.le.s32.totalorder 2, %s18
      // Predicated region
      $region61: #{tpu_custom_call.1} parent=5 // pred_check
        %p2659 = pneg %p2658
      $region62: #{tpu_custom_call.1} parent=5 // pred_check_branch
        %2661 = sbr.rel (%p2659) target = $region64
      $region63: #{tpu_custom_call.1} parent=5 // pred_region
        %s2662 = ssub.s32 %s18, 2
        // Predicated region
        $region65: #{tpu_custom_call.1} parent=63 // pred_check
          %p2663 = pneg %p246
        $region66: #{tpu_custom_call.1} parent=63 // pred_check_branch
          %2665 = sbr.rel (%p2663) target = $region68
        $region67: #{tpu_custom_call.1} parent=63 // pred_region
          %s2666 = sand.u32 %s231, 1
          %s2667 = scalar_lea.sflag [#allocation3], %s2666
          %s2668 = sand.u32 %s231, 1
          %s2669 = smul.addr %s2668, 8
          %s2670 = scalar_lea.vmem [#allocation2], %s2669
          %2672 = dma.done %s2667, 128
        $region68: #{tpu_custom_call.1} parent=63 // pred_fallthru
          _
      $region64: #{tpu_custom_call.1} parent=5 // pred_fallthru
        _
    $region6: #{tpu_custom_call.1} parent=1 // loop_footer
      %s22 = sadd.s32 1, %s18
    $region7: #{tpu_custom_call.1} parent=1 // loop_footer_branch
      %17 = sbr.rel target = $region3
    $region8: #{tpu_custom_call.1} parent=1 // loop_exit
      _
    %2673 = vsyncpa [#allocation3], 1
    %s2674 = scalar_lea.sflag [#allocation3], 1
    %2675 = vsyncpa %s2674, 1

</llo_original>
